<compile_context>
chip_gen: v7x
topology: tpu7x:2x2x1
jax: 0.10.0
libtpu: 0.0.40
codegen_flags: <defaults>
</compile_context>

<pallas_src>
import functools

import jax
import jax.numpy as jnp
from jax.experimental import pallas as pl
from jax.experimental.pallas import tpu as pltpu


# ----------------------------------------------------------------------------
# Fused DownConv kernel: one batch element per grid step.
# ----------------------------------------------------------------------------
def _down_conv_kernel(x_ref, w1_ref, b1_ref, w2_ref, b2_ref, o_ref,
                      xp1_ref, xp2_ref, s_ref, t_ref, *, H, W):
    # x_ref  : (1, H, W, Cin)        unpadded input tile
    # w1_ref : (9*Cin, Cout)         conv1 weights, K rows ordered (kh, kw, cin)
    # b1_ref : (1, Cout)
    # w2_ref : (9*Cout, Cout)        conv2 weights, K rows ordered (kh, kw, cin)
    # b2_ref : (1, Cout)
    # o_ref  : (1, Ho*Wo, Cout)      pooled output
    # xp1_ref: VMEM (H+2, W+2, Cin)  zero-padded conv1 input
    # xp2_ref: VMEM (H+2, W+2, Cout) zero-padded conv2 input
    # s_ref  : VMEM (H*W, Cout)      conv2 output (pre-pool)
    # t_ref  : VMEM (H*(W//2), Cout) W-pooled intermediate
    Cin = x_ref.shape[-1]
    Cout = o_ref.shape[-1]
    Ho, Wo = H // 2, W // 2

    def im2col(xp_ref, C):
        # 9 shifted (H, W, C) windows, flattened to (H*W, C) and concatenated on the
        # lane axis -> (H*W, 9*C).  Column block t = kh*3 + kw matches the weight
        # row order (kh, kw, cin), so one MXU matmul replaces 9 small-K matmuls.
        return jnp.concatenate(
            [xp_ref[kh:kh + H, kw:kw + W, :].reshape(H * W, C)
             for kh in range(3) for kw in range(3)],
            axis=-1)

    # ---------------- conv1 + ReLU (padding=1 done in VMEM) ----------------
    xp1_ref[...] = jnp.zeros_like(xp1_ref)          # re-zero halo every grid step
    xp1_ref[1:H + 1, 1:W + 1, :] = x_ref[0].astype(xp1_ref.dtype)
    y1 = jnp.dot(im2col(xp1_ref, Cin), w1_ref[...],
                 preferred_element_type=jnp.float32)          # (H*W, Cout)
    y1 = jnp.maximum(y1 + b1_ref[...], 0.0)                   # f32 epilogue

    # ---------------- conv2 + ReLU ------------------------------------------
    xp2_ref[...] = jnp.zeros_like(xp2_ref)
    for h in range(H):                               # row-wise interior write (no reshape)
        xp2_ref[h + 1, 1:W + 1, :] = y1[h * W:(h + 1) * W, :]
    y2 = jnp.dot(im2col(xp2_ref, Cout), w2_ref[...],
                 preferred_element_type=jnp.float32)          # (H*W, Cout)
    y2 = jnp.maximum(y2 + b2_ref[...], 0.0)

    # ---------------- fused maxpool 2x2 / stride 2 ---------------------------
    s_ref[...] = y2                                  # rows ordered (h, w)
    # W-pool: even-w rows vs odd-w rows via sublane stride-2 loads.
    t_ref[...] = jnp.maximum(s_ref[pl.ds(0, H * Wo, stride=2), :],
                             s_ref[pl.ds(1, H * Wo, stride=2), :])   # rows (h, wo)
    # H-pool: adjacent Wo-row blocks (contiguous slices), store straight to output.
    for ho in range(Ho):
        top = t_ref[(2 * ho) * Wo:(2 * ho + 1) * Wo, :]
        bot = t_ref[(2 * ho + 1) * Wo:(2 * ho + 2) * Wo, :]
        o_ref[0, ho * Wo:(ho + 1) * Wo, :] = jnp.maximum(top, bot).astype(o_ref.dtype)


def down_conv_fused(x_nhwc, w1, b1, w2, b2):
    """x_nhwc: (B,H,W,Cin); w1: (9*Cin,Cout); w2: (9*Cout,Cout); b: (1,Cout)."""
    B, H, W, Cin = x_nhwc.shape
    Cout = w1.shape[-1]
    Ho, Wo = H // 2, W // 2

    out = pl.pallas_call(
        functools.partial(_down_conv_kernel, H=H, W=W),
        out_shape=jax.ShapeDtypeStruct((B, Ho * Wo, Cout), x_nhwc.dtype),
        grid_spec=pltpu.PrefetchScalarGridSpec(
            num_scalar_prefetch=0,
            grid=(B,),
            in_specs=[
                pl.BlockSpec((1, H, W, Cin), lambda b: (b, 0, 0, 0)),
                pl.BlockSpec((9 * Cin, Cout), lambda b: (0, 0)),
                pl.BlockSpec((1, Cout), lambda b: (0, 0)),
                pl.BlockSpec((9 * Cout, Cout), lambda b: (0, 0)),
                pl.BlockSpec((1, Cout), lambda b: (0, 0)),
            ],
            out_specs=pl.BlockSpec((1, Ho * Wo, Cout), lambda b: (b, 0, 0)),
            scratch_shapes=[
                pltpu.VMEM((H + 2, W + 2, Cin), jnp.float32),
                pltpu.VMEM((H + 2, W + 2, Cout), jnp.float32),
                pltpu.VMEM((H * W, Cout), jnp.float32),
                pltpu.VMEM((H * (W // 2), Cout), jnp.float32),
            ],
        ),
        compiler_params=pltpu.CompilerParams(
            dimension_semantics=("parallel",)),
    )(x_nhwc, w1, b1, w2, b2)
    return out.reshape(B, Ho, Wo, Cout)


# ----------------------------------------------------------------------------
# Full DownConv forward: relu(conv1(x)) -> relu(conv2(.)) -> maxpool2x2
# ----------------------------------------------------------------------------
def down_conv_forward(x_nchw, params):
    x = jnp.transpose(x_nchw, (0, 2, 3, 1))              # NCHW -> NHWC
    y = down_conv_fused(x, params["w1"], params["b1"], params["w2"], params["b2"])
    return jnp.transpose(y, (0, 3, 1, 2))                 # NHWC -> NCHW


# ----------------------------------------------------------------------------
# Pure-JAX reference (for the sanity check)
# ----------------------------------------------------------------------------
def reference(x_nchw, w1_t, b1, w2_t, b2):
    dn = ("NCHW", "OIHW", "NCHW")
    hp = jax.lax.Precision.HIGHEST
    y = jax.lax.conv_general_dilated(x_nchw, w1_t, (1, 1), ((1, 1), (1, 1)),
                                     dimension_numbers=dn, precision=hp)
    y = jax.nn.relu(y + b1.reshape(1, -1, 1, 1))
    y = jax.lax.conv_general_dilated(y, w2_t, (1, 1), ((1, 1), (1, 1)),
                                     dimension_numbers=dn, precision=hp)
    y = jax.nn.relu(y + b2.reshape(1, -1, 1, 1))
    y = jax.lax.reduce_window(y, -jnp.inf, jax.lax.max,
                              (1, 1, 2, 2), (1, 1, 2, 2), "VALID")
    return y


if __name__ == "__main__":
    key = jax.random.PRNGKey(0)
    kx, kp = jax.random.split(key)

    # Small shapes consistent with the module: DownConv(in_channels=4, out_channels=32)
    B, Cin, H, W = 2, 4, 16, 16
    Cout = 32

    x = jax.random.normal(kx, (B, Cin, H, W), jnp.float32)

    # Deterministic synthetic parameters in the PyTorch weight layout (Cout,Cin,3,3)
    k1, k2, k3, k4 = jax.random.split(kp, 4)
    w1_t = jax.random.normal(k1, (Cout, Cin, 3, 3), jnp.float32) * 0.1
    b1 = jax.random.normal(k2, (Cout,), jnp.float32) * 0.1
    w2_t = jax.random.normal(k3, (Cout, Cout, 3, 3), jnp.float32) * 0.1
    b2 = jax.random.normal(k4, (Cout,), jnp.float32) * 0.1

    # Convert (Cout,Cin,kh,kw) -> ((kh*3+kw)*Cin + cin, Cout) for the im2col matmul
    params = dict(
        w1=jnp.transpose(w1_t, (2, 3, 1, 0)).reshape(9 * Cin, Cout),
        b1=b1.reshape(1, Cout),
        w2=jnp.transpose(w2_t, (2, 3, 1, 0)).reshape(9 * Cout, Cout),
        b2=b2.reshape(1, Cout),
    )

    out = jax.jit(down_conv_forward)(x, params)
    out = jax.block_until_ready(out)
    assert out.shape == (B, Cout, H // 2, W // 2), out.shape

    ref = jax.block_until_ready(reference(x, w1_t, b1, w2_t, b2))
    # Tolerance covers a possible bf16-pass MXU default for f32 matmuls while still
    # catching any indexing/tap error (those produce O(0.1-1) differences).
    if not jnp.allclose(out, ref, rtol=2e-2, atol=2e-2):
        raise AssertionError(
            f"mismatch, max abs diff = {jnp.max(jnp.abs(out - ref))}")

    print("KERNEL_OK")
</pallas_src>

<mosaic_0001>
module attributes {stable_mosaic.version = 11 : i64} {
  func.func @_down_conv_kernel(%arg0: i32, %arg1: memref<1x16x16x4xf32, #tpu.memory_space<vmem>>, %arg2: memref<36x32xf32, #tpu.memory_space<vmem>>, %arg3: memref<1x32xf32, #tpu.memory_space<vmem>>, %arg4: memref<288x32xf32, #tpu.memory_space<vmem>>, %arg5: memref<1x32xf32, #tpu.memory_space<vmem>>, %arg6: memref<1x64x32xf32, #tpu.memory_space<vmem>>, %arg7: memref<18x18x4xf32, #tpu.memory_space<vmem>>, %arg8: memref<18x18x32xf32, #tpu.memory_space<vmem>>, %arg9: memref<256x32xf32, #tpu.memory_space<vmem>>, %arg10: memref<128x32xf32, #tpu.memory_space<vmem>>) attributes {dimension_semantics = [#tpu.dimension_semantics<parallel>], iteration_bounds = array<i64: 2>, scalar_prefetch = 0 : i64, scratch_operands = 4 : i64, tpu.core_type = #tpu.core_type<tc>, window_params = [{transform_indices = @transform_0, window_bounds = array<i64: 1, 16, 16, 4>}, {pipeline_mode = #tpu.pipeline_mode<synchronous>, transform_indices = @transform_1, window_bounds = array<i64: 36, 32>}, {pipeline_mode = #tpu.pipeline_mode<synchronous>, transform_indices = @transform_2, window_bounds = array<i64: 1, 32>}, {pipeline_mode = #tpu.pipeline_mode<synchronous>, transform_indices = @transform_3, window_bounds = array<i64: 288, 32>}, {pipeline_mode = #tpu.pipeline_mode<synchronous>, transform_indices = @transform_4, window_bounds = array<i64: 1, 32>}, {transform_indices = @transform_5, window_bounds = array<i64: 1, 64, 32>}]} {
    %cst = arith.constant 0.000000e+00 : f32
    %0 = vector.broadcast %cst : f32 to vector<18x18x4xf32>
    %c0 = arith.constant 0 : index
    %c0_0 = arith.constant 0 : index
    %c0_1 = arith.constant 0 : index
    %1 = vector.load %arg7[%c0, %c0_0, %c0_1] : memref<18x18x4xf32, #tpu.memory_space<vmem>>, vector<18x18x4xf32>
    tpu.vector_store %arg7[%c0, %c0_0, %c0_1], %0 {strides = array<i32>} : memref<18x18x4xf32, #tpu.memory_space<vmem>>, vector<18x18x4xf32>,
    %c0_2 = arith.constant 0 : index
    %c0_3 = arith.constant 0 : index
    %c0_4 = arith.constant 0 : index
    %c0_5 = arith.constant 0 : index
    %2 = vector.load %arg1[%c0_2, %c0_3, %c0_4, %c0_5] : memref<1x16x16x4xf32, #tpu.memory_space<vmem>>, vector<1x16x16x4xf32>
    %3 = vector.shape_cast %2 : vector<1x16x16x4xf32> to vector<16x16x4xf32>
    %c1 = arith.constant 1 : index
    %c1_6 = arith.constant 1 : index
    %c0_7 = arith.constant 0 : index
    %4 = vector.load %arg7[%c1, %c1_6, %c0_7] : memref<18x18x4xf32, #tpu.memory_space<vmem>>, vector<16x16x4xf32>
    tpu.vector_store %arg7[%c1, %c1_6, %c0_7], %3 {strides = array<i32>} : memref<18x18x4xf32, #tpu.memory_space<vmem>>, vector<16x16x4xf32>,
    %c0_8 = arith.constant 0 : index
    %c0_9 = arith.constant 0 : index
    %c0_10 = arith.constant 0 : index
    %5 = vector.load %arg7[%c0_8, %c0_9, %c0_10] : memref<18x18x4xf32, #tpu.memory_space<vmem>>, vector<16x16x4xf32>
    %6 = vector.shape_cast %5 : vector<16x16x4xf32> to vector<256x4xf32>
    %c0_11 = arith.constant 0 : index
    %c1_12 = arith.constant 1 : index
    %c0_13 = arith.constant 0 : index
    %7 = vector.load %arg7[%c0_11, %c1_12, %c0_13] : memref<18x18x4xf32, #tpu.memory_space<vmem>>, vector<16x16x4xf32>
    %8 = vector.shape_cast %7 : vector<16x16x4xf32> to vector<256x4xf32>
    %c0_14 = arith.constant 0 : index
    %c2 = arith.constant 2 : index
    %c0_15 = arith.constant 0 : index
    %9 = vector.load %arg7[%c0_14, %c2, %c0_15] : memref<18x18x4xf32, #tpu.memory_space<vmem>>, vector<16x16x4xf32>
    %10 = vector.shape_cast %9 : vector<16x16x4xf32> to vector<256x4xf32>
    %c1_16 = arith.constant 1 : index
    %c0_17 = arith.constant 0 : index
    %c0_18 = arith.constant 0 : index
    %11 = vector.load %arg7[%c1_16, %c0_17, %c0_18] : memref<18x18x4xf32, #tpu.memory_space<vmem>>, vector<16x16x4xf32>
    %12 = vector.shape_cast %11 : vector<16x16x4xf32> to vector<256x4xf32>
    %c1_19 = arith.constant 1 : index
    %c1_20 = arith.constant 1 : index
    %c0_21 = arith.constant 0 : index
    %13 = vector.load %arg7[%c1_19, %c1_20, %c0_21] : memref<18x18x4xf32, #tpu.memory_space<vmem>>, vector<16x16x4xf32>
    %14 = vector.shape_cast %13 : vector<16x16x4xf32> to vector<256x4xf32>
    %c1_22 = arith.constant 1 : index
    %c2_23 = arith.constant 2 : index
    %c0_24 = arith.constant 0 : index
    %15 = vector.load %arg7[%c1_22, %c2_23, %c0_24] : memref<18x18x4xf32, #tpu.memory_space<vmem>>, vector<16x16x4xf32>
    %16 = vector.shape_cast %15 : vector<16x16x4xf32> to vector<256x4xf32>
    %c2_25 = arith.constant 2 : index
    %c0_26 = arith.constant 0 : index
    %c0_27 = arith.constant 0 : index
    %17 = vector.load %arg7[%c2_25, %c0_26, %c0_27] : memref<18x18x4xf32, #tpu.memory_space<vmem>>, vector<16x16x4xf32>
    %18 = vector.shape_cast %17 : vector<16x16x4xf32> to vector<256x4xf32>
    %c2_28 = arith.constant 2 : index
    %c1_29 = arith.constant 1 : index
    %c0_30 = arith.constant 0 : index
    %19 = vector.load %arg7[%c2_28, %c1_29, %c0_30] : memref<18x18x4xf32, #tpu.memory_space<vmem>>, vector<16x16x4xf32>
    %20 = vector.shape_cast %19 : vector<16x16x4xf32> to vector<256x4xf32>
    %c2_31 = arith.constant 2 : index
    %c2_32 = arith.constant 2 : index
    %c0_33 = arith.constant 0 : index
    %21 = vector.load %arg7[%c2_31, %c2_32, %c0_33] : memref<18x18x4xf32, #tpu.memory_space<vmem>>, vector<16x16x4xf32>
    %22 = vector.shape_cast %21 : vector<16x16x4xf32> to vector<256x4xf32>
    %23 = tpu.concatenate %6, %8, %10, %12, %14, %16, %18, %20, %22 in 1 : vector<256x4xf32>, vector<256x4xf32>, vector<256x4xf32>, vector<256x4xf32>, vector<256x4xf32>, vector<256x4xf32>, vector<256x4xf32>, vector<256x4xf32>, vector<256x4xf32> -> vector<256x36xf32>
    %c0_34 = arith.constant 0 : index
    %c0_35 = arith.constant 0 : index
    %24 = vector.load %arg2[%c0_34, %c0_35] : memref<36x32xf32, #tpu.memory_space<vmem>>, vector<36x32xf32>
    %cst_36 = arith.constant dense<0.000000e+00> : vector<256x32xf32>
    %25 = tpu.matmul %23, %24, %cst_36 {dimension_numbers = #tpu.dot_dimension_numbers<[1], [0], [0], [1], [0, 0, 1, 1], [], []>} : vector<256x36xf32>, vector<36x32xf32>, vector<256x32xf32> -> vector<256x32xf32>
    %c0_37 = arith.constant 0 : index
    %c0_38 = arith.constant 0 : index
    %26 = vector.load %arg3[%c0_37, %c0_38] : memref<1x32xf32, #tpu.memory_space<vmem>>, vector<1x32xf32>
    %27 = vector.broadcast %26 : vector<1x32xf32> to vector<256x32xf32>
    %28 = arith.addf %25, %27 : vector<256x32xf32>
    %cst_39 = arith.constant 0.000000e+00 : f32
    %29 = vector.broadcast %cst_39 : f32 to vector<256x32xf32>
    %30 = arith.maximumf %28, %29 : vector<256x32xf32>
    %cst_40 = arith.constant 0.000000e+00 : f32
    %31 = vector.broadcast %cst_40 : f32 to vector<18x18x32xf32>
    %c0_41 = arith.constant 0 : index
    %c0_42 = arith.constant 0 : index
    %c0_43 = arith.constant 0 : index
    %32 = vector.load %arg8[%c0_41, %c0_42, %c0_43] : memref<18x18x32xf32, #tpu.memory_space<vmem>>, vector<18x18x32xf32>
    tpu.vector_store %arg8[%c0_41, %c0_42, %c0_43], %31 {strides = array<i32>} : memref<18x18x32xf32, #tpu.memory_space<vmem>>, vector<18x18x32xf32>,
    %33 = vector.extract_strided_slice %30 {offsets = [0, 0], sizes = [16, 32], strides = [1, 1]} : vector<256x32xf32> to vector<16x32xf32>
    %c1_44 = arith.constant 1 : index
    %c1_45 = arith.constant 1 : index
    %c0_46 = arith.constant 0 : index
    %34 = vector.load %arg8[%c1_44, %c1_45, %c0_46] : memref<18x18x32xf32, #tpu.memory_space<vmem>>, vector<1x16x32xf32>
    %35 = vector.shape_cast %34 : vector<1x16x32xf32> to vector<16x32xf32>
    %36 = vector.shape_cast %33 : vector<16x32xf32> to vector<1x16x32xf32>
    tpu.vector_store %arg8[%c1_44, %c1_45, %c0_46], %36 {strides = array<i32>} : memref<18x18x32xf32, #tpu.memory_space<vmem>>, vector<1x16x32xf32>,
    %37 = vector.extract_strided_slice %30 {offsets = [16, 0], sizes = [16, 32], strides = [1, 1]} : vector<256x32xf32> to vector<16x32xf32>
    %c2_47 = arith.constant 2 : index
    %c1_48 = arith.constant 1 : index
    %c0_49 = arith.constant 0 : index
    %38 = vector.load %arg8[%c2_47, %c1_48, %c0_49] : memref<18x18x32xf32, #tpu.memory_space<vmem>>, vector<1x16x32xf32>
    %39 = vector.shape_cast %38 : vector<1x16x32xf32> to vector<16x32xf32>
    %40 = vector.shape_cast %37 : vector<16x32xf32> to vector<1x16x32xf32>
    tpu.vector_store %arg8[%c2_47, %c1_48, %c0_49], %40 {strides = array<i32>} : memref<18x18x32xf32, #tpu.memory_space<vmem>>, vector<1x16x32xf32>,
    %41 = vector.extract_strided_slice %30 {offsets = [32, 0], sizes = [16, 32], strides = [1, 1]} : vector<256x32xf32> to vector<16x32xf32>
    %c3 = arith.constant 3 : index
    %c1_50 = arith.constant 1 : index
    %c0_51 = arith.constant 0 : index
    %42 = vector.load %arg8[%c3, %c1_50, %c0_51] : memref<18x18x32xf32, #tpu.memory_space<vmem>>, vector<1x16x32xf32>
    %43 = vector.shape_cast %42 : vector<1x16x32xf32> to vector<16x32xf32>
    %44 = vector.shape_cast %41 : vector<16x32xf32> to vector<1x16x32xf32>
    tpu.vector_store %arg8[%c3, %c1_50, %c0_51], %44 {strides = array<i32>} : memref<18x18x32xf32, #tpu.memory_space<vmem>>, vector<1x16x32xf32>,
    %45 = vector.extract_strided_slice %30 {offsets = [48, 0], sizes = [16, 32], strides = [1, 1]} : vector<256x32xf32> to vector<16x32xf32>
    %c4 = arith.constant 4 : index
    %c1_52 = arith.constant 1 : index
    %c0_53 = arith.constant 0 : index
    %46 = vector.load %arg8[%c4, %c1_52, %c0_53] : memref<18x18x32xf32, #tpu.memory_space<vmem>>, vector<1x16x32xf32>
    %47 = vector.shape_cast %46 : vector<1x16x32xf32> to vector<16x32xf32>
    %48 = vector.shape_cast %45 : vector<16x32xf32> to vector<1x16x32xf32>
    tpu.vector_store %arg8[%c4, %c1_52, %c0_53], %48 {strides = array<i32>} : memref<18x18x32xf32, #tpu.memory_space<vmem>>, vector<1x16x32xf32>,
    %49 = vector.extract_strided_slice %30 {offsets = [64, 0], sizes = [16, 32], strides = [1, 1]} : vector<256x32xf32> to vector<16x32xf32>
    %c5 = arith.constant 5 : index
    %c1_54 = arith.constant 1 : index
    %c0_55 = arith.constant 0 : index
    %50 = vector.load %arg8[%c5, %c1_54, %c0_55] : memref<18x18x32xf32, #tpu.memory_space<vmem>>, vector<1x16x32xf32>
    %51 = vector.shape_cast %50 : vector<1x16x32xf32> to vector<16x32xf32>
    %52 = vector.shape_cast %49 : vector<16x32xf32> to vector<1x16x32xf32>
    tpu.vector_store %arg8[%c5, %c1_54, %c0_55], %52 {strides = array<i32>} : memref<18x18x32xf32, #tpu.memory_space<vmem>>, vector<1x16x32xf32>,
    %53 = vector.extract_strided_slice %30 {offsets = [80, 0], sizes = [16, 32], strides = [1, 1]} : vector<256x32xf32> to vector<16x32xf32>
    %c6 = arith.constant 6 : index
    %c1_56 = arith.constant 1 : index
    %c0_57 = arith.constant 0 : index
    %54 = vector.load %arg8[%c6, %c1_56, %c0_57] : memref<18x18x32xf32, #tpu.memory_space<vmem>>, vector<1x16x32xf32>
    %55 = vector.shape_cast %54 : vector<1x16x32xf32> to vector<16x32xf32>
    %56 = vector.shape_cast %53 : vector<16x32xf32> to vector<1x16x32xf32>
    tpu.vector_store %arg8[%c6, %c1_56, %c0_57], %56 {strides = array<i32>} : memref<18x18x32xf32, #tpu.memory_space<vmem>>, vector<1x16x32xf32>,
    %57 = vector.extract_strided_slice %30 {offsets = [96, 0], sizes = [16, 32], strides = [1, 1]} : vector<256x32xf32> to vector<16x32xf32>
    %c7 = arith.constant 7 : index
    %c1_58 = arith.constant 1 : index
    %c0_59 = arith.constant 0 : index
    %58 = vector.load %arg8[%c7, %c1_58, %c0_59] : memref<18x18x32xf32, #tpu.memory_space<vmem>>, vector<1x16x32xf32>
    %59 = vector.shape_cast %58 : vector<1x16x32xf32> to vector<16x32xf32>
    %60 = vector.shape_cast %57 : vector<16x32xf32> to vector<1x16x32xf32>
    tpu.vector_store %arg8[%c7, %c1_58, %c0_59], %60 {strides = array<i32>} : memref<18x18x32xf32, #tpu.memory_space<vmem>>, vector<1x16x32xf32>,
    %61 = vector.extract_strided_slice %30 {offsets = [112, 0], sizes = [16, 32], strides = [1, 1]} : vector<256x32xf32> to vector<16x32xf32>
    %c8 = arith.constant 8 : index
    %c1_60 = arith.constant 1 : index
    %c0_61 = arith.constant 0 : index
    %62 = vector.load %arg8[%c8, %c1_60, %c0_61] : memref<18x18x32xf32, #tpu.memory_space<vmem>>, vector<1x16x32xf32>
    %63 = vector.shape_cast %62 : vector<1x16x32xf32> to vector<16x32xf32>
    %64 = vector.shape_cast %61 : vector<16x32xf32> to vector<1x16x32xf32>
    tpu.vector_store %arg8[%c8, %c1_60, %c0_61], %64 {strides = array<i32>} : memref<18x18x32xf32, #tpu.memory_space<vmem>>, vector<1x16x32xf32>,
    %65 = vector.extract_strided_slice %30 {offsets = [128, 0], sizes = [16, 32], strides = [1, 1]} : vector<256x32xf32> to vector<16x32xf32>
    %c9 = arith.constant 9 : index
    %c1_62 = arith.constant 1 : index
    %c0_63 = arith.constant 0 : index
    %66 = vector.load %arg8[%c9, %c1_62, %c0_63] : memref<18x18x32xf32, #tpu.memory_space<vmem>>, vector<1x16x32xf32>
    %67 = vector.shape_cast %66 : vector<1x16x32xf32> to vector<16x32xf32>
    %68 = vector.shape_cast %65 : vector<16x32xf32> to vector<1x16x32xf32>
    tpu.vector_store %arg8[%c9, %c1_62, %c0_63], %68 {strides = array<i32>} : memref<18x18x32xf32, #tpu.memory_space<vmem>>, vector<1x16x32xf32>,
    %69 = vector.extract_strided_slice %30 {offsets = [144, 0], sizes = [16, 32], strides = [1, 1]} : vector<256x32xf32> to vector<16x32xf32>
    %c10 = arith.constant 10 : index
    %c1_64 = arith.constant 1 : index
    %c0_65 = arith.constant 0 : index
    %70 = vector.load %arg8[%c10, %c1_64, %c0_65] : memref<18x18x32xf32, #tpu.memory_space<vmem>>, vector<1x16x32xf32>
    %71 = vector.shape_cast %70 : vector<1x16x32xf32> to vector<16x32xf32>
    %72 = vector.shape_cast %69 : vector<16x32xf32> to vector<1x16x32xf32>
    tpu.vector_store %arg8[%c10, %c1_64, %c0_65], %72 {strides = array<i32>} : memref<18x18x32xf32, #tpu.memory_space<vmem>>, vector<1x16x32xf32>,
    %73 = vector.extract_strided_slice %30 {offsets = [160, 0], sizes = [16, 32], strides = [1, 1]} : vector<256x32xf32> to vector<16x32xf32>
    %c11 = arith.constant 11 : index
    %c1_66 = arith.constant 1 : index
    %c0_67 = arith.constant 0 : index
    %74 = vector.load %arg8[%c11, %c1_66, %c0_67] : memref<18x18x32xf32, #tpu.memory_space<vmem>>, vector<1x16x32xf32>
    %75 = vector.shape_cast %74 : vector<1x16x32xf32> to vector<16x32xf32>
    %76 = vector.shape_cast %73 : vector<16x32xf32> to vector<1x16x32xf32>
    tpu.vector_store %arg8[%c11, %c1_66, %c0_67], %76 {strides = array<i32>} : memref<18x18x32xf32, #tpu.memory_space<vmem>>, vector<1x16x32xf32>,
    %77 = vector.extract_strided_slice %30 {offsets = [176, 0], sizes = [16, 32], strides = [1, 1]} : vector<256x32xf32> to vector<16x32xf32>
    %c12 = arith.constant 12 : index
    %c1_68 = arith.constant 1 : index
    %c0_69 = arith.constant 0 : index
    %78 = vector.load %arg8[%c12, %c1_68, %c0_69] : memref<18x18x32xf32, #tpu.memory_space<vmem>>, vector<1x16x32xf32>
    %79 = vector.shape_cast %78 : vector<1x16x32xf32> to vector<16x32xf32>
    %80 = vector.shape_cast %77 : vector<16x32xf32> to vector<1x16x32xf32>
    tpu.vector_store %arg8[%c12, %c1_68, %c0_69], %80 {strides = array<i32>} : memref<18x18x32xf32, #tpu.memory_space<vmem>>, vector<1x16x32xf32>,
    %81 = vector.extract_strided_slice %30 {offsets = [192, 0], sizes = [16, 32], strides = [1, 1]} : vector<256x32xf32> to vector<16x32xf32>
    %c13 = arith.constant 13 : index
    %c1_70 = arith.constant 1 : index
    %c0_71 = arith.constant 0 : index
    %82 = vector.load %arg8[%c13, %c1_70, %c0_71] : memref<18x18x32xf32, #tpu.memory_space<vmem>>, vector<1x16x32xf32>
    %83 = vector.shape_cast %82 : vector<1x16x32xf32> to vector<16x32xf32>
    %84 = vector.shape_cast %81 : vector<16x32xf32> to vector<1x16x32xf32>
    tpu.vector_store %arg8[%c13, %c1_70, %c0_71], %84 {strides = array<i32>} : memref<18x18x32xf32, #tpu.memory_space<vmem>>, vector<1x16x32xf32>,
    %85 = vector.extract_strided_slice %30 {offsets = [208, 0], sizes = [16, 32], strides = [1, 1]} : vector<256x32xf32> to vector<16x32xf32>
    %c14 = arith.constant 14 : index
    %c1_72 = arith.constant 1 : index
    %c0_73 = arith.constant 0 : index
    %86 = vector.load %arg8[%c14, %c1_72, %c0_73] : memref<18x18x32xf32, #tpu.memory_space<vmem>>, vector<1x16x32xf32>
    %87 = vector.shape_cast %86 : vector<1x16x32xf32> to vector<16x32xf32>
    %88 = vector.shape_cast %85 : vector<16x32xf32> to vector<1x16x32xf32>
    tpu.vector_store %arg8[%c14, %c1_72, %c0_73], %88 {strides = array<i32>} : memref<18x18x32xf32, #tpu.memory_space<vmem>>, vector<1x16x32xf32>,
    %89 = vector.extract_strided_slice %30 {offsets = [224, 0], sizes = [16, 32], strides = [1, 1]} : vector<256x32xf32> to vector<16x32xf32>
    %c15 = arith.constant 15 : index
    %c1_74 = arith.constant 1 : index
    %c0_75 = arith.constant 0 : index
    %90 = vector.load %arg8[%c15, %c1_74, %c0_75] : memref<18x18x32xf32, #tpu.memory_space<vmem>>, vector<1x16x32xf32>
    %91 = vector.shape_cast %90 : vector<1x16x32xf32> to vector<16x32xf32>
    %92 = vector.shape_cast %89 : vector<16x32xf32> to vector<1x16x32xf32>
    tpu.vector_store %arg8[%c15, %c1_74, %c0_75], %92 {strides = array<i32>} : memref<18x18x32xf32, #tpu.memory_space<vmem>>, vector<1x16x32xf32>,
    %93 = vector.extract_strided_slice %30 {offsets = [240, 0], sizes = [16, 32], strides = [1, 1]} : vector<256x32xf32> to vector<16x32xf32>
    %c16 = arith.constant 16 : index
    %c1_76 = arith.constant 1 : index
    %c0_77 = arith.constant 0 : index
    %94 = vector.load %arg8[%c16, %c1_76, %c0_77] : memref<18x18x32xf32, #tpu.memory_space<vmem>>, vector<1x16x32xf32>
    %95 = vector.shape_cast %94 : vector<1x16x32xf32> to vector<16x32xf32>
    %96 = vector.shape_cast %93 : vector<16x32xf32> to vector<1x16x32xf32>
    tpu.vector_store %arg8[%c16, %c1_76, %c0_77], %96 {strides = array<i32>} : memref<18x18x32xf32, #tpu.memory_space<vmem>>, vector<1x16x32xf32>,
    %c0_78 = arith.constant 0 : index
    %c0_79 = arith.constant 0 : index
    %c0_80 = arith.constant 0 : index
    %97 = vector.load %arg8[%c0_78, %c0_79, %c0_80] : memref<18x18x32xf32, #tpu.memory_space<vmem>>, vector<16x16x32xf32>
    %98 = vector.shape_cast %97 : vector<16x16x32xf32> to vector<256x32xf32>
    %c0_81 = arith.constant 0 : index
    %c1_82 = arith.constant 1 : index
    %c0_83 = arith.constant 0 : index
    %99 = vector.load %arg8[%c0_81, %c1_82, %c0_83] : memref<18x18x32xf32, #tpu.memory_space<vmem>>, vector<16x16x32xf32>
    %100 = vector.shape_cast %99 : vector<16x16x32xf32> to vector<256x32xf32>
    %c0_84 = arith.constant 0 : index
    %c2_85 = arith.constant 2 : index
    %c0_86 = arith.constant 0 : index
    %101 = vector.load %arg8[%c0_84, %c2_85, %c0_86] : memref<18x18x32xf32, #tpu.memory_space<vmem>>, vector<16x16x32xf32>
    %102 = vector.shape_cast %101 : vector<16x16x32xf32> to vector<256x32xf32>
    %c1_87 = arith.constant 1 : index
    %c0_88 = arith.constant 0 : index
    %c0_89 = arith.constant 0 : index
    %103 = vector.load %arg8[%c1_87, %c0_88, %c0_89] : memref<18x18x32xf32, #tpu.memory_space<vmem>>, vector<16x16x32xf32>
    %104 = vector.shape_cast %103 : vector<16x16x32xf32> to vector<256x32xf32>
    %c1_90 = arith.constant 1 : index
    %c1_91 = arith.constant 1 : index
    %c0_92 = arith.constant 0 : index
    %105 = vector.load %arg8[%c1_90, %c1_91, %c0_92] : memref<18x18x32xf32, #tpu.memory_space<vmem>>, vector<16x16x32xf32>
    %106 = vector.shape_cast %105 : vector<16x16x32xf32> to vector<256x32xf32>
    %c1_93 = arith.constant 1 : index
    %c2_94 = arith.constant 2 : index
    %c0_95 = arith.constant 0 : index
    %107 = vector.load %arg8[%c1_93, %c2_94, %c0_95] : memref<18x18x32xf32, #tpu.memory_space<vmem>>, vector<16x16x32xf32>
    %108 = vector.shape_cast %107 : vector<16x16x32xf32> to vector<256x32xf32>
    %c2_96 = arith.constant 2 : index
    %c0_97 = arith.constant 0 : index
    %c0_98 = arith.constant 0 : index
    %109 = vector.load %arg8[%c2_96, %c0_97, %c0_98] : memref<18x18x32xf32, #tpu.memory_space<vmem>>, vector<16x16x32xf32>
    %110 = vector.shape_cast %109 : vector<16x16x32xf32> to vector<256x32xf32>
    %c2_99 = arith.constant 2 : index
    %c1_100 = arith.constant 1 : index
    %c0_101 = arith.constant 0 : index
    %111 = vector.load %arg8[%c2_99, %c1_100, %c0_101] : memref<18x18x32xf32, #tpu.memory_space<vmem>>, vector<16x16x32xf32>
    %112 = vector.shape_cast %111 : vector<16x16x32xf32> to vector<256x32xf32>
    %c2_102 = arith.constant 2 : index
    %c2_103 = arith.constant 2 : index
    %c0_104 = arith.constant 0 : index
    %113 = vector.load %arg8[%c2_102, %c2_103, %c0_104] : memref<18x18x32xf32, #tpu.memory_space<vmem>>, vector<16x16x32xf32>
    %114 = vector.shape_cast %113 : vector<16x16x32xf32> to vector<256x32xf32>
    %115 = tpu.concatenate %98, %100, %102, %104, %106, %108, %110, %112, %114 in 1 : vector<256x32xf32>, vector<256x32xf32>, vector<256x32xf32>, vector<256x32xf32>, vector<256x32xf32>, vector<256x32xf32>, vector<256x32xf32>, vector<256x32xf32>, vector<256x32xf32> -> vector<256x288xf32>
    %c0_105 = arith.constant 0 : index
    %c0_106 = arith.constant 0 : index
    %116 = vector.load %arg4[%c0_105, %c0_106] : memref<288x32xf32, #tpu.memory_space<vmem>>, vector<288x32xf32>
    %cst_107 = arith.constant dense<0.000000e+00> : vector<256x32xf32>
    %117 = tpu.matmul %115, %116, %cst_107 {dimension_numbers = #tpu.dot_dimension_numbers<[1], [0], [0], [1], [0, 0, 1, 1], [], []>} : vector<256x288xf32>, vector<288x32xf32>, vector<256x32xf32> -> vector<256x32xf32>
    %c0_108 = arith.constant 0 : index
    %c0_109 = arith.constant 0 : index
    %118 = vector.load %arg5[%c0_108, %c0_109] : memref<1x32xf32, #tpu.memory_space<vmem>>, vector<1x32xf32>
    %119 = vector.broadcast %118 : vector<1x32xf32> to vector<256x32xf32>
    %120 = arith.addf %117, %119 : vector<256x32xf32>
    %cst_110 = arith.constant 0.000000e+00 : f32
    %121 = vector.broadcast %cst_110 : f32 to vector<256x32xf32>
    %122 = arith.maximumf %120, %121 : vector<256x32xf32>
    %c0_111 = arith.constant 0 : index
    %c0_112 = arith.constant 0 : index
    %123 = vector.load %arg9[%c0_111, %c0_112] : memref<256x32xf32, #tpu.memory_space<vmem>>, vector<256x32xf32>
    tpu.vector_store %arg9[%c0_111, %c0_112], %122 {strides = array<i32>} : memref<256x32xf32, #tpu.memory_space<vmem>>, vector<256x32xf32>,
    %c0_113 = arith.constant 0 : index
    %c0_114 = arith.constant 0 : index
    %124 = tpu.strided_load %arg9[%c0_113, %c0_114] {strides = array<i32: 2, 1>} : memref<256x32xf32, #tpu.memory_space<vmem>>, vector<128x32xf32>
    %c1_115 = arith.constant 1 : index
    %c0_116 = arith.constant 0 : index
    %125 = tpu.strided_load %arg9[%c1_115, %c0_116] {strides = array<i32: 2, 1>} : memref<256x32xf32, #tpu.memory_space<vmem>>, vector<128x32xf32>
    %126 = arith.maximumf %124, %125 : vector<128x32xf32>
    %c0_117 = arith.constant 0 : index
    %c0_118 = arith.constant 0 : index
    %127 = vector.load %arg10[%c0_117, %c0_118] : memref<128x32xf32, #tpu.memory_space<vmem>>, vector<128x32xf32>
    tpu.vector_store %arg10[%c0_117, %c0_118], %126 {strides = array<i32>} : memref<128x32xf32, #tpu.memory_space<vmem>>, vector<128x32xf32>,
    %c0_119 = arith.constant 0 : index
    %c0_120 = arith.constant 0 : index
    %128 = vector.load %arg10[%c0_119, %c0_120] : memref<128x32xf32, #tpu.memory_space<vmem>>, vector<8x32xf32>
    %c8_121 = arith.constant 8 : index
    %c0_122 = arith.constant 0 : index
    %129 = vector.load %arg10[%c8_121, %c0_122] : memref<128x32xf32, #tpu.memory_space<vmem>>, vector<8x32xf32>
    %130 = arith.maximumf %128, %129 : vector<8x32xf32>
    %c0_123 = arith.constant 0 : index
    %c0_124 = arith.constant 0 : index
    %c0_125 = arith.constant 0 : index
    %131 = vector.load %arg6[%c0_123, %c0_124, %c0_125] : memref<1x64x32xf32, #tpu.memory_space<vmem>>, vector<1x8x32xf32>
    %132 = vector.shape_cast %131 : vector<1x8x32xf32> to vector<8x32xf32>
    %133 = vector.shape_cast %130 : vector<8x32xf32> to vector<1x8x32xf32>
    tpu.vector_store %arg6[%c0_123, %c0_124, %c0_125], %133 {strides = array<i32>} : memref<1x64x32xf32, #tpu.memory_space<vmem>>, vector<1x8x32xf32>,
    %c16_126 = arith.constant 16 : index
    %c0_127 = arith.constant 0 : index
    %134 = vector.load %arg10[%c16_126, %c0_127] : memref<128x32xf32, #tpu.memory_space<vmem>>, vector<8x32xf32>
    %c24 = arith.constant 24 : index
    %c0_128 = arith.constant 0 : index
    %135 = vector.load %arg10[%c24, %c0_128] : memref<128x32xf32, #tpu.memory_space<vmem>>, vector<8x32xf32>
    %136 = arith.maximumf %134, %135 : vector<8x32xf32>
    %c0_129 = arith.constant 0 : index
    %c8_130 = arith.constant 8 : index
    %c0_131 = arith.constant 0 : index
    %137 = vector.load %arg6[%c0_129, %c8_130, %c0_131] : memref<1x64x32xf32, #tpu.memory_space<vmem>>, vector<1x8x32xf32>
    %138 = vector.shape_cast %137 : vector<1x8x32xf32> to vector<8x32xf32>
    %139 = vector.shape_cast %136 : vector<8x32xf32> to vector<1x8x32xf32>
    tpu.vector_store %arg6[%c0_129, %c8_130, %c0_131], %139 {strides = array<i32>} : memref<1x64x32xf32, #tpu.memory_space<vmem>>, vector<1x8x32xf32>,
    %c32 = arith.constant 32 : index
    %c0_132 = arith.constant 0 : index
    %140 = vector.load %arg10[%c32, %c0_132] : memref<128x32xf32, #tpu.memory_space<vmem>>, vector<8x32xf32>
    %c40 = arith.constant 40 : index
    %c0_133 = arith.constant 0 : index
    %141 = vector.load %arg10[%c40, %c0_133] : memref<128x32xf32, #tpu.memory_space<vmem>>, vector<8x32xf32>
    %142 = arith.maximumf %140, %141 : vector<8x32xf32>
    %c0_134 = arith.constant 0 : index
    %c16_135 = arith.constant 16 : index
    %c0_136 = arith.constant 0 : index
    %143 = vector.load %arg6[%c0_134, %c16_135, %c0_136] : memref<1x64x32xf32, #tpu.memory_space<vmem>>, vector<1x8x32xf32>
    %144 = vector.shape_cast %143 : vector<1x8x32xf32> to vector<8x32xf32>
    %145 = vector.shape_cast %142 : vector<8x32xf32> to vector<1x8x32xf32>
    tpu.vector_store %arg6[%c0_134, %c16_135, %c0_136], %145 {strides = array<i32>} : memref<1x64x32xf32, #tpu.memory_space<vmem>>, vector<1x8x32xf32>,
    %c48 = arith.constant 48 : index
    %c0_137 = arith.constant 0 : index
    %146 = vector.load %arg10[%c48, %c0_137] : memref<128x32xf32, #tpu.memory_space<vmem>>, vector<8x32xf32>
    %c56 = arith.constant 56 : index
    %c0_138 = arith.constant 0 : index
    %147 = vector.load %arg10[%c56, %c0_138] : memref<128x32xf32, #tpu.memory_space<vmem>>, vector<8x32xf32>
    %148 = arith.maximumf %146, %147 : vector<8x32xf32>
    %c0_139 = arith.constant 0 : index
    %c24_140 = arith.constant 24 : index
    %c0_141 = arith.constant 0 : index
    %149 = vector.load %arg6[%c0_139, %c24_140, %c0_141] : memref<1x64x32xf32, #tpu.memory_space<vmem>>, vector<1x8x32xf32>
    %150 = vector.shape_cast %149 : vector<1x8x32xf32> to vector<8x32xf32>
    %151 = vector.shape_cast %148 : vector<8x32xf32> to vector<1x8x32xf32>
    tpu.vector_store %arg6[%c0_139, %c24_140, %c0_141], %151 {strides = array<i32>} : memref<1x64x32xf32, #tpu.memory_space<vmem>>, vector<1x8x32xf32>,
    %c64 = arith.constant 64 : index
    %c0_142 = arith.constant 0 : index
    %152 = vector.load %arg10[%c64, %c0_142] : memref<128x32xf32, #tpu.memory_space<vmem>>, vector<8x32xf32>
    %c72 = arith.constant 72 : index
    %c0_143 = arith.constant 0 : index
    %153 = vector.load %arg10[%c72, %c0_143] : memref<128x32xf32, #tpu.memory_space<vmem>>, vector<8x32xf32>
    %154 = arith.maximumf %152, %153 : vector<8x32xf32>
    %c0_144 = arith.constant 0 : index
    %c32_145 = arith.constant 32 : index
    %c0_146 = arith.constant 0 : index
    %155 = vector.load %arg6[%c0_144, %c32_145, %c0_146] : memref<1x64x32xf32, #tpu.memory_space<vmem>>, vector<1x8x32xf32>
    %156 = vector.shape_cast %155 : vector<1x8x32xf32> to vector<8x32xf32>
    %157 = vector.shape_cast %154 : vector<8x32xf32> to vector<1x8x32xf32>
    tpu.vector_store %arg6[%c0_144, %c32_145, %c0_146], %157 {strides = array<i32>} : memref<1x64x32xf32, #tpu.memory_space<vmem>>, vector<1x8x32xf32>,
    %c80 = arith.constant 80 : index
    %c0_147 = arith.constant 0 : index
    %158 = vector.load %arg10[%c80, %c0_147] : memref<128x32xf32, #tpu.memory_space<vmem>>, vector<8x32xf32>
    %c88 = arith.constant 88 : index
    %c0_148 = arith.constant 0 : index
    %159 = vector.load %arg10[%c88, %c0_148] : memref<128x32xf32, #tpu.memory_space<vmem>>, vector<8x32xf32>
    %160 = arith.maximumf %158, %159 : vector<8x32xf32>
    %c0_149 = arith.constant 0 : index
    %c40_150 = arith.constant 40 : index
    %c0_151 = arith.constant 0 : index
    %161 = vector.load %arg6[%c0_149, %c40_150, %c0_151] : memref<1x64x32xf32, #tpu.memory_space<vmem>>, vector<1x8x32xf32>
    %162 = vector.shape_cast %161 : vector<1x8x32xf32> to vector<8x32xf32>
    %163 = vector.shape_cast %160 : vector<8x32xf32> to vector<1x8x32xf32>
    tpu.vector_store %arg6[%c0_149, %c40_150, %c0_151], %163 {strides = array<i32>} : memref<1x64x32xf32, #tpu.memory_space<vmem>>, vector<1x8x32xf32>,
    %c96 = arith.constant 96 : index
    %c0_152 = arith.constant 0 : index
    %164 = vector.load %arg10[%c96, %c0_152] : memref<128x32xf32, #tpu.memory_space<vmem>>, vector<8x32xf32>
    %c104 = arith.constant 104 : index
    %c0_153 = arith.constant 0 : index
    %165 = vector.load %arg10[%c104, %c0_153] : memref<128x32xf32, #tpu.memory_space<vmem>>, vector<8x32xf32>
    %166 = arith.maximumf %164, %165 : vector<8x32xf32>
    %c0_154 = arith.constant 0 : index
    %c48_155 = arith.constant 48 : index
    %c0_156 = arith.constant 0 : index
    %167 = vector.load %arg6[%c0_154, %c48_155, %c0_156] : memref<1x64x32xf32, #tpu.memory_space<vmem>>, vector<1x8x32xf32>
    %168 = vector.shape_cast %167 : vector<1x8x32xf32> to vector<8x32xf32>
    %169 = vector.shape_cast %166 : vector<8x32xf32> to vector<1x8x32xf32>
    tpu.vector_store %arg6[%c0_154, %c48_155, %c0_156], %169 {strides = array<i32>} : memref<1x64x32xf32, #tpu.memory_space<vmem>>, vector<1x8x32xf32>,
    %c112 = arith.constant 112 : index
    %c0_157 = arith.constant 0 : index
    %170 = vector.load %arg10[%c112, %c0_157] : memref<128x32xf32, #tpu.memory_space<vmem>>, vector<8x32xf32>
    %c120 = arith.constant 120 : index
    %c0_158 = arith.constant 0 : index
    %171 = vector.load %arg10[%c120, %c0_158] : memref<128x32xf32, #tpu.memory_space<vmem>>, vector<8x32xf32>
    %172 = arith.maximumf %170, %171 : vector<8x32xf32>
    %c0_159 = arith.constant 0 : index
    %c56_160 = arith.constant 56 : index
    %c0_161 = arith.constant 0 : index
    %173 = vector.load %arg6[%c0_159, %c56_160, %c0_161] : memref<1x64x32xf32, #tpu.memory_space<vmem>>, vector<1x8x32xf32>
    %174 = vector.shape_cast %173 : vector<1x8x32xf32> to vector<8x32xf32>
    %175 = vector.shape_cast %172 : vector<8x32xf32> to vector<1x8x32xf32>
    tpu.vector_store %arg6[%c0_159, %c56_160, %c0_161], %175 {strides = array<i32>} : memref<1x64x32xf32, #tpu.memory_space<vmem>>, vector<1x8x32xf32>,
    return
  }
  func.func @transform_0(%arg0: i32) -> (i32, i32, i32, i32) {
    %c0_i32 = arith.constant 0 : i32
    %c0_i32_0 = arith.constant 0 : i32
    %c0_i32_1 = arith.constant 0 : i32
    %c0_i32_2 = arith.constant 0 : i32
    return %arg0, %c0_i32, %c0_i32_0, %c0_i32_1 : i32, i32, i32, i32
  }
  func.func @transform_1(%arg0: i32) -> (i32, i32) {
    %c0_i32 = arith.constant 0 : i32
    %c0_i32_0 = arith.constant 0 : i32
    %c0_i32_1 = arith.constant 0 : i32
    return %c0_i32, %c0_i32_0 : i32, i32
  }
  func.func @transform_2(%arg0: i32) -> (i32, i32) {
    %c0_i32 = arith.constant 0 : i32
    %c0_i32_0 = arith.constant 0 : i32
    %c0_i32_1 = arith.constant 0 : i32
    return %c0_i32, %c0_i32_0 : i32, i32
  }
  func.func @transform_3(%arg0: i32) -> (i32, i32) {
    %c0_i32 = arith.constant 0 : i32
    %c0_i32_0 = arith.constant 0 : i32
    %c0_i32_1 = arith.constant 0 : i32
    return %c0_i32, %c0_i32_0 : i32, i32
  }
  func.func @transform_4(%arg0: i32) -> (i32, i32) {
    %c0_i32 = arith.constant 0 : i32
    %c0_i32_0 = arith.constant 0 : i32
    %c0_i32_1 = arith.constant 0 : i32
    return %c0_i32, %c0_i32_0 : i32, i32
  }
  func.func @transform_5(%arg0: i32) -> (i32, i32, i32) {
    %c0_i32 = arith.constant 0 : i32
    %c0_i32_0 = arith.constant 0 : i32
    %c0_i32_1 = arith.constant 0 : i32
    return %arg0, %c0_i32, %c0_i32_0 : i32, i32, i32
  }
}

</mosaic_0001>

<llo_original>
// kernel: down_conv_forward.1
$region0: #{down_conv_forward.1}
  #allocation0 [shape = 'u32[]', space=smem, size = 0x4, offset = 0x4, fixed_abs, tag = 'smem constant byte address 0x4 - core index']
  #allocation1 [shape = 'u32[144,128]{1,0:T(1,128)}', space=vmem, size = 0x12000, scoped, tag = 'internal scratch']
  #allocation2 [shape = 'f32[18,18,4]{2,1,0:T(8,128)}', space=vmem, size = 0x36000, scoped, tag = 'scratch operand']
  #allocation3 [shape = 'f32[18,18,32]{2,1,0:T(8,128)}', space=vmem, size = 0x36000, scoped, tag = 'scratch operand']
  #allocation4 [shape = 'f32[256,32]{1,0:T(8,128)}', space=vmem, size = 0x20000, scoped, tag = 'scratch operand']
  #allocation5 [shape = 'f32[128,32]{1,0:T(8,128)}', space=vmem, size = 0x10000, scoped, tag = 'scratch operand']
  %s0 = inlined_call_operand.vmem [shape: f32[2,16,16,4], index: 0, kind: input, shape index: {}]
  %s1 = inlined_call_operand.vmem [shape: f32[36,32], index: 1, kind: input, shape index: {}]
  %s2 = inlined_call_operand.vmem [shape: f32[1,32], index: 2, kind: input, shape index: {}]
  %s3 = inlined_call_operand.vmem [shape: f32[288,32], index: 3, kind: input, shape index: {}]
  %s4 = inlined_call_operand.vmem [shape: f32[1,32], index: 4, kind: input, shape index: {}]
  %s5 = inlined_call_operand.hbm [shape: f32[2,64,32], index: 5, kind: output, shape index: {}]
  %s6 = sld [smem:[#allocation0]]
  $region53: #{down_conv_forward.1} parent=0
    _
  %s8 = ssub.s32 1, %s6
  %s9 = scalar_select 0, %s8, %s6
  $region1: #{down_conv_forward.1} parent=0
    #allocation6 [shape = 'u8[65536]{0}', space=vmem, size = 0x10000, scoped, tag = 'output window, operand 0']
    #allocation7 [shape = 's32[2]{0}', space=sflag, size = 0x8, scoped, tag = 'scoped memory for down_conv_forward.1']
    %10 = vsyncpa [#allocation7], 0
    %s11 = scalar_lea.sflag [#allocation7], 1
    %12 = vsyncpa %s11, 0
    loop: start=0, step=1, limit=4
    $region2: #{down_conv_forward.1} parent=1 // loop_pre_header
      _
    $region3: #{down_conv_forward.1} parent=1 // loop_header
      %s14 = sphi 0, %s18
      %p15 = scmp.ge.s32.totalorder %s14, 4
      %s24 = sphi 0, %s26
      %s27 = sphi 0, %s24
      %s28 = sphi 0, %s27
      %s44 = sphi 0, %s28
      %s48 = sphi 0, %s48
      %s50 = sphi 0, %s48
      %s51 = sphi 0, %s50
      %s65 = sphi 0, %s51
      %s69 = sphi 0, %s69
      %s71 = sphi 0, %s69
      %s72 = sphi 0, %s71
      %s86 = sphi 0, %s72
      %s90 = sphi 0, %s90
      %s92 = sphi 0, %s90
      %s93 = sphi 0, %s92
      %s107 = sphi 0, %s93
      %s111 = sphi 0, %s111
      %s113 = sphi 0, %s111
      %s114 = sphi 0, %s113
      %s128 = sphi 0, %s114
      %s134 = sphi 0, %s136
      %s137 = sphi 0, %s134
      %s138 = sphi 0, %s137
      %s154 = sphi 0, %s138
    $region4: #{down_conv_forward.1} parent=1 // loop_header_branch
      %17 = sbr.rel (%p15) target = $region8
    $region5: #{down_conv_forward.1} parent=1 // loop_body
      %s19 = ssub.s32 %s14, 1
      %s20 = ssub.s32 %s14, 2
      %s21 = sadd.s32 %s14, 1
      %s22 = ssub.s32 %s14, %s21
      %p23 = scmp.eq.s32.totalorder %s22, 0
      %s25 = sadd.s32 %s24, 1
      %s26 = scalar_select %p23, %s24, %s25
      %p29 = pneg %p23
      %p30 = scmp.eq.s32.totalorder %s14, 1
      %p31 = por %p29, %p30
      %p32 = scmp.ne.s32.totalorder %s24, %s27
      %p33 = scmp.eq.s32.totalorder %s14, 0
      %p34 = por %p32, %p33
      %p35 = scmp.ne.s32.totalorder %s24, %s27
      %p36 = scmp.eq.s32.totalorder %s19, 1
      %p37 = por %p35, %p36
      %p38 = scmp.ne.s32.totalorder %s27, %s28
      %p39 = scmp.eq.s32.totalorder %s19, 0
      %p40 = por %p38, %p39
      %p41 = scmp.ne.s32.totalorder %s27, %s28
      %p42 = scmp.eq.s32.totalorder %s20, 1
      %p43 = por %p41, %p42
      %p45 = scmp.ne.s32.totalorder %s28, %s44
      %p46 = scmp.eq.s32.totalorder %s20, 0
      %p47 = por %p45, %p46
      %s49 = sadd.s32 %s48, 1
      %p52 = scmp.eq.s32.totalorder %s14, 1
      %p53 = scmp.ne.s32.totalorder %s48, %s50
      %p54 = scmp.eq.s32.totalorder %s14, 0
      %p55 = por %p53, %p54
      %p56 = scmp.ne.s32.totalorder %s48, %s50
      %p57 = scmp.eq.s32.totalorder %s19, 1
      %p58 = por %p56, %p57
      %p59 = scmp.ne.s32.totalorder %s50, %s51
      %p60 = scmp.eq.s32.totalorder %s19, 0
      %p61 = por %p59, %p60
      %p62 = scmp.ne.s32.totalorder %s50, %s51
      %p63 = scmp.eq.s32.totalorder %s20, 1
      %p64 = por %p62, %p63
      %p66 = scmp.ne.s32.totalorder %s51, %s65
      %p67 = scmp.eq.s32.totalorder %s20, 0
      %p68 = por %p66, %p67
      %s70 = sadd.s32 %s69, 1
      %p73 = scmp.eq.s32.totalorder %s14, 1
      %p74 = scmp.ne.s32.totalorder %s69, %s71
      %p75 = scmp.eq.s32.totalorder %s14, 0
      %p76 = por %p74, %p75
      %p77 = scmp.ne.s32.totalorder %s69, %s71
      %p78 = scmp.eq.s32.totalorder %s19, 1
      %p79 = por %p77, %p78
      %p80 = scmp.ne.s32.totalorder %s71, %s72
      %p81 = scmp.eq.s32.totalorder %s19, 0
      %p82 = por %p80, %p81
      %p83 = scmp.ne.s32.totalorder %s71, %s72
      %p84 = scmp.eq.s32.totalorder %s20, 1
      %p85 = por %p83, %p84
      %p87 = scmp.ne.s32.totalorder %s72, %s86
      %p88 = scmp.eq.s32.totalorder %s20, 0
      %p89 = por %p87, %p88
      %s91 = sadd.s32 %s90, 1
      %p94 = scmp.eq.s32.totalorder %s14, 1
      %p95 = scmp.ne.s32.totalorder %s90, %s92
      %p96 = scmp.eq.s32.totalorder %s14, 0
      %p97 = por %p95, %p96
      %p98 = scmp.ne.s32.totalorder %s90, %s92
      %p99 = scmp.eq.s32.totalorder %s19, 1
      %p100 = por %p98, %p99
      %p101 = scmp.ne.s32.totalorder %s92, %s93
      %p102 = scmp.eq.s32.totalorder %s19, 0
      %p103 = por %p101, %p102
      %p104 = scmp.ne.s32.totalorder %s92, %s93
      %p105 = scmp.eq.s32.totalorder %s20, 1
      %p106 = por %p104, %p105
      %p108 = scmp.ne.s32.totalorder %s93, %s107
      %p109 = scmp.eq.s32.totalorder %s20, 0
      %p110 = por %p108, %p109
      %s112 = sadd.s32 %s111, 1
      %p115 = scmp.eq.s32.totalorder %s14, 1
      %p116 = scmp.ne.s32.totalorder %s111, %s113
      %p117 = scmp.eq.s32.totalorder %s14, 0
      %p118 = por %p116, %p117
      %p119 = scmp.ne.s32.totalorder %s111, %s113
      %p120 = scmp.eq.s32.totalorder %s19, 1
      %p121 = por %p119, %p120
      %p122 = scmp.ne.s32.totalorder %s113, %s114
      %p123 = scmp.eq.s32.totalorder %s19, 0
      %p124 = por %p122, %p123
      %p125 = scmp.ne.s32.totalorder %s113, %s114
      %p126 = scmp.eq.s32.totalorder %s20, 1
      %p127 = por %p125, %p126
      %p129 = scmp.ne.s32.totalorder %s114, %s128
      %p130 = scmp.eq.s32.totalorder %s20, 0
      %p131 = por %p129, %p130
      %s132 = ssub.s32 %s14, %s21
      %p133 = scmp.eq.s32.totalorder %s132, 0
      %s135 = sadd.s32 %s134, 1
      %s136 = scalar_select %p133, %s134, %s135
      %p139 = pneg %p133
      %p140 = scmp.eq.s32.totalorder %s14, 1
      %p141 = por %p139, %p140
      %p142 = scmp.ne.s32.totalorder %s134, %s137
      %p143 = scmp.eq.s32.totalorder %s14, 0
      %p144 = por %p142, %p143
      %p145 = scmp.ne.s32.totalorder %s134, %s137
      %p146 = scmp.eq.s32.totalorder %s19, 1
      %p147 = por %p145, %p146
      %p148 = scmp.ne.s32.totalorder %s137, %s138
      %p149 = scmp.eq.s32.totalorder %s19, 0
      %p150 = por %p148, %p149
      %p151 = scmp.ne.s32.totalorder %s137, %s138
      %p152 = scmp.eq.s32.totalorder %s20, 1
      %p153 = por %p151, %p152
      %p155 = scmp.ne.s32.totalorder %s138, %s154
      %p156 = scmp.eq.s32.totalorder %s20, 0
      %p157 = por %p155, %p156
      %p158 = scmp.le.s32.totalorder 1, %s14
      %p159 = scmp.lt.s32.totalorder %s14, 3
      %p160 = pnand %p158, %p159
      %p161 = pneg %p160
      // Predicated region
      $region9: #{down_conv_forward.1} parent=5 // pred_check
        _
      $region10: #{down_conv_forward.1} parent=5 // pred_check_branch
        %163 = sbr.rel (%p160) target = $region12
      $region11: #{down_conv_forward.1} parent=5 // pred_region
        %s164 = ssub.s32 %s14, 1
        // Predicated region
        $region13: #{down_conv_forward.1} parent=11 // pred_check
          %p165 = pneg %p61
        $region14: #{down_conv_forward.1} parent=11 // pred_check_branch
          %167 = sbr.rel (%p165) target = $region16
        $region15: #{down_conv_forward.1} parent=11 // pred_region
          _
        $region16: #{down_conv_forward.1} parent=11 // pred_fallthru
          _
        // Predicated region
        $region17: #{down_conv_forward.1} parent=11 // pred_check
          %p168 = pneg %p82
        $region18: #{down_conv_forward.1} parent=11 // pred_check_branch
          %170 = sbr.rel (%p168) target = $region20
        $region19: #{down_conv_forward.1} parent=11 // pred_region
          _
        $region20: #{down_conv_forward.1} parent=11 // pred_fallthru
          _
        // Predicated region
        $region21: #{down_conv_forward.1} parent=11 // pred_check
          %p171 = pneg %p103
        $region22: #{down_conv_forward.1} parent=11 // pred_check_branch
          %173 = sbr.rel (%p171) target = $region24
        $region23: #{down_conv_forward.1} parent=11 // pred_region
          _
        $region24: #{down_conv_forward.1} parent=11 // pred_fallthru
          _
        // Predicated region
        $region25: #{down_conv_forward.1} parent=11 // pred_check
          %p174 = pneg %p124
        $region26: #{down_conv_forward.1} parent=11 // pred_check_branch
          %176 = sbr.rel (%p174) target = $region28
        $region27: #{down_conv_forward.1} parent=11 // pred_region
          _
        $region28: #{down_conv_forward.1} parent=11 // pred_fallthru
          _
      $region12: #{down_conv_forward.1} parent=5 // pred_fallthru
        _
      %p177 = scmp.lt.s32.totalorder %s14, 2
      // Predicated region
      $region29: #{down_conv_forward.1} parent=5 // pred_check
        %p178 = pneg %p177
      $region30: #{down_conv_forward.1} parent=5 // pred_check_branch
        %180 = sbr.rel (%p178) target = $region32
      $region31: #{down_conv_forward.1} parent=5 // pred_region
        // Predicated region
        $region33: #{down_conv_forward.1} parent=31 // pred_check
          %p181 = pneg %p34
        $region34: #{down_conv_forward.1} parent=31 // pred_check_branch
          %183 = sbr.rel (%p181) target = $region36
        $region35: #{down_conv_forward.1} parent=31 // pred_region
          %p184 = scmp.lt.s32.totalorder %s14, 1
          %s185 = scalar_select %p184, %s14, 1
          %s186 = smul.addr %s185, 32
          %s187 = smul.addr %s186, 8
          %s188 = scalar_lea.vmem %s0, %s187
        $region36: #{down_conv_forward.1} parent=31 // pred_fallthru
          _
      $region32: #{down_conv_forward.1} parent=5 // pred_fallthru
        _
      %p189 = scmp.le.s32.totalorder 1, %s14
      %p190 = scmp.lt.s32.totalorder %s14, 3
      %p191 = pnand %p189, %p190
      %p192 = pneg %p191
      // Predicated region
      $region37: #{down_conv_forward.1} parent=5 // pred_check
        _
      $region38: #{down_conv_forward.1} parent=5 // pred_check_branch
        %194 = sbr.rel (%p191) target = $region40
      $region39: #{down_conv_forward.1} parent=5 // pred_region
        %s195 = ssub.s32 %s14, 1
        %p196 = scmp.lt.s32.totalorder %s19, 1
        %s197 = scalar_select %p196, %s19, 1
        %s198 = smul.addr %s197, 32
        %s199 = smul.addr %s198, 8
        %s200 = scalar_lea.vmem %s0, %s199
        %p201 = pneg %p40
        %p202 = pneg %p37
        %p203 = pneg %p61
        %p204 = pneg %p58
        %p205 = pneg %p82
        %p206 = pneg %p79
        %p207 = pneg %p103
        %p208 = pneg %p100
        %p209 = pneg %p124
        %p210 = pneg %p121
        %p211 = pneg %p150
        %p212 = pneg %p147
        %s213 = sand.u32 %s137, 1
        %s214 = scalar_lea.sflag [#allocation7], %s213
        %s215 = sand.u32 %s137, 1
        %s216 = smul.addr %s215, 64
        %s217 = scalar_lea.vmem [#allocation6], %s216
        %p218 = scmp.lt.s32.totalorder %s19, 1
        %s219 = scalar_select %p218, %s19, 1
        %s220 = smul.addr %s219, 32
        %s221 = smul.addr %s220, 8
        %s222 = scalar_lea.vmem %s0, %s221
        %vm223 = vcmask 31744
        %224 = vst.msk [vmem:[#allocation2] sm:$0xff] %vm223, 0.0
        %225 = vst.msk [vmem:[#allocation2 + $0x8] sm:$0xff] %vm223, 0.0
        %vm226 = vcmask 25600
        %227 = vst.msk [vmem:[#allocation2 + $0x10] sm:$0x3] %vm226, 0.0
        %228 = vst.msk [vmem:[#allocation2 + $0x18] sm:$0xff] %vm223, 0.0
        %229 = vst.msk [vmem:[#allocation2 + $0x20] sm:$0xff] %vm223, 0.0
        %230 = vst.msk [vmem:[#allocation2 + $0x28] sm:$0x3] %vm226, 0.0
        %231 = vst.msk [vmem:[#allocation2 + $0x30] sm:$0xff] %vm223, 0.0
        %232 = vst.msk [vmem:[#allocation2 + $0x38] sm:$0xff] %vm223, 0.0
        %233 = vst.msk [vmem:[#allocation2 + $0x40] sm:$0x3] %vm226, 0.0
        %234 = vst.msk [vmem:[#allocation2 + $0x48] sm:$0xff] %vm223, 0.0
        %235 = vst.msk [vmem:[#allocation2 + $0x50] sm:$0xff] %vm223, 0.0
        %236 = vst.msk [vmem:[#allocation2 + $0x58] sm:$0x3] %vm226, 0.0
        %237 = vst.msk [vmem:[#allocation2 + $0x60] sm:$0xff] %vm223, 0.0
        %238 = vst.msk [vmem:[#allocation2 + $0x68] sm:$0xff] %vm223, 0.0
        %239 = vst.msk [vmem:[#allocation2 + $0x70] sm:$0x3] %vm226, 0.0
        %240 = vst.msk [vmem:[#allocation2 + $0x78] sm:$0xff] %vm223, 0.0
        %241 = vst.msk [vmem:[#allocation2 + $0x80] sm:$0xff] %vm223, 0.0
        %242 = vst.msk [vmem:[#allocation2 + $0x88] sm:$0x3] %vm226, 0.0
        %243 = vst.msk [vmem:[#allocation2 + $0x90] sm:$0xff] %vm223, 0.0
        %244 = vst.msk [vmem:[#allocation2 + $0x98] sm:$0xff] %vm223, 0.0
        %245 = vst.msk [vmem:[#allocation2 + $0xa0] sm:$0x3] %vm226, 0.0
        %246 = vst.msk [vmem:[#allocation2 + $0xa8] sm:$0xff] %vm223, 0.0
        %247 = vst.msk [vmem:[#allocation2 + $0xb0] sm:$0xff] %vm223, 0.0
        %248 = vst.msk [vmem:[#allocation2 + $0xb8] sm:$0x3] %vm226, 0.0
        %249 = vst.msk [vmem:[#allocation2 + $0xc0] sm:$0xff] %vm223, 0.0
        %250 = vst.msk [vmem:[#allocation2 + $0xc8] sm:$0xff] %vm223, 0.0
        %251 = vst.msk [vmem:[#allocation2 + $0xd0] sm:$0x3] %vm226, 0.0
        %252 = vst.msk [vmem:[#allocation2 + $0xd8] sm:$0xff] %vm223, 0.0
        %253 = vst.msk [vmem:[#allocation2 + $0xe0] sm:$0xff] %vm223, 0.0
        %254 = vst.msk [vmem:[#allocation2 + $0xe8] sm:$0x3] %vm226, 0.0
        %255 = vst.msk [vmem:[#allocation2 + $0xf0] sm:$0xff] %vm223, 0.0
        %256 = vst.msk [vmem:[#allocation2 + $0xf8] sm:$0xff] %vm223, 0.0
        %257 = vst.msk [vmem:[#allocation2 + $0x100] sm:$0x3] %vm226, 0.0
        %258 = vst.msk [vmem:[#allocation2 + $0x108] sm:$0xff] %vm223, 0.0
        %259 = vst.msk [vmem:[#allocation2 + $0x110] sm:$0xff] %vm223, 0.0
        %260 = vst.msk [vmem:[#allocation2 + $0x118] sm:$0x3] %vm226, 0.0
        %261 = vst.msk [vmem:[#allocation2 + $0x120] sm:$0xff] %vm223, 0.0
        %262 = vst.msk [vmem:[#allocation2 + $0x128] sm:$0xff] %vm223, 0.0
        %263 = vst.msk [vmem:[#allocation2 + $0x130] sm:$0x3] %vm226, 0.0
        %264 = vst.msk [vmem:[#allocation2 + $0x138] sm:$0xff] %vm223, 0.0
        %265 = vst.msk [vmem:[#allocation2 + $0x140] sm:$0xff] %vm223, 0.0
        %266 = vst.msk [vmem:[#allocation2 + $0x148] sm:$0x3] %vm226, 0.0
        %267 = vst.msk [vmem:[#allocation2 + $0x150] sm:$0xff] %vm223, 0.0
        %268 = vst.msk [vmem:[#allocation2 + $0x158] sm:$0xff] %vm223, 0.0
        %269 = vst.msk [vmem:[#allocation2 + $0x160] sm:$0x3] %vm226, 0.0
        %270 = vst.msk [vmem:[#allocation2 + $0x168] sm:$0xff] %vm223, 0.0
        %271 = vst.msk [vmem:[#allocation2 + $0x170] sm:$0xff] %vm223, 0.0
        %272 = vst.msk [vmem:[#allocation2 + $0x178] sm:$0x3] %vm226, 0.0
        %273 = vst.msk [vmem:[#allocation2 + $0x180] sm:$0xff] %vm223, 0.0
        %274 = vst.msk [vmem:[#allocation2 + $0x188] sm:$0xff] %vm223, 0.0
        %275 = vst.msk [vmem:[#allocation2 + $0x190] sm:$0x3] %vm226, 0.0
        %276 = vst.msk [vmem:[#allocation2 + $0x198] sm:$0xff] %vm223, 0.0
        %277 = vst.msk [vmem:[#allocation2 + $0x1a0] sm:$0xff] %vm223, 0.0
        %278 = vst.msk [vmem:[#allocation2 + $0x1a8] sm:$0x3] %vm226, 0.0
        %v279 = vld [vmem:[%s222] sm:$0xff]
        %v280 = vld [vmem:[%s222 + $0x8] sm:$0xff]
        %v281 = vld [vmem:[%s222 + $0x10] sm:$0xff]
        %v282 = vld [vmem:[%s222 + $0x18] sm:$0xff]
        %v283 = vld [vmem:[%s222 + $0x20] sm:$0xff]
        %v284 = vld [vmem:[%s222 + $0x28] sm:$0xff]
        %v285 = vld [vmem:[%s222 + $0x30] sm:$0xff]
        %v286 = vld [vmem:[%s222 + $0x38] sm:$0xff]
        %v287 = vld [vmem:[%s222 + $0x40] sm:$0xff]
        %v288 = vld [vmem:[%s222 + $0x48] sm:$0xff]
        %v289 = vld [vmem:[%s222 + $0x50] sm:$0xff]
        %v290 = vld [vmem:[%s222 + $0x58] sm:$0xff]
        %v291 = vld [vmem:[%s222 + $0x60] sm:$0xff]
        %v292 = vld [vmem:[%s222 + $0x68] sm:$0xff]
        %v293 = vld [vmem:[%s222 + $0x70] sm:$0xff]
        %v294 = vld [vmem:[%s222 + $0x78] sm:$0xff]
        %v295 = vld [vmem:[%s222 + $0x80] sm:$0xff]
        %v296 = vld [vmem:[%s222 + $0x88] sm:$0xff]
        %v297 = vld [vmem:[%s222 + $0x90] sm:$0xff]
        %v298 = vld [vmem:[%s222 + $0x98] sm:$0xff]
        %v299 = vld [vmem:[%s222 + $0xa0] sm:$0xff]
        %v300 = vld [vmem:[%s222 + $0xa8] sm:$0xff]
        %v301 = vld [vmem:[%s222 + $0xb0] sm:$0xff]
        %v302 = vld [vmem:[%s222 + $0xb8] sm:$0xff]
        %v303 = vld [vmem:[%s222 + $0xc0] sm:$0xff]
        %v304 = vld [vmem:[%s222 + $0xc8] sm:$0xff]
        %v305 = vld [vmem:[%s222 + $0xd0] sm:$0xff]
        %v306 = vld [vmem:[%s222 + $0xd8] sm:$0xff]
        %v307 = vld [vmem:[%s222 + $0xe0] sm:$0xff]
        %v308 = vld [vmem:[%s222 + $0xe8] sm:$0xff]
        %v309 = vld [vmem:[%s222 + $0xf0] sm:$0xff]
        %v310 = vld [vmem:[%s222 + $0xf8] sm:$0xff]
        %s311 = scalar_lea.vmem [#allocation2], 24
        %312 = vst.msk [vmem:[%s311 + $0x1] sm:$0xff] %vm223, %v279
        %313 = vst.msk [vmem:[%s311 + $0x9] sm:$0xff] %vm223, %v280
        %314 = vst.msk [vmem:[%s311 + $0x19] sm:$0xff] %vm223, %v281
        %315 = vst.msk [vmem:[%s311 + $0x21] sm:$0xff] %vm223, %v282
        %316 = vst.msk [vmem:[%s311 + $0x31] sm:$0xff] %vm223, %v283
        %317 = vst.msk [vmem:[%s311 + $0x39] sm:$0xff] %vm223, %v284
        %318 = vst.msk [vmem:[%s311 + $0x49] sm:$0xff] %vm223, %v285
        %319 = vst.msk [vmem:[%s311 + $0x51] sm:$0xff] %vm223, %v286
        %320 = vst.msk [vmem:[%s311 + $0x61] sm:$0xff] %vm223, %v287
        %321 = vst.msk [vmem:[%s311 + $0x69] sm:$0xff] %vm223, %v288
        %322 = vst.msk [vmem:[%s311 + $0x79] sm:$0xff] %vm223, %v289
        %323 = vst.msk [vmem:[%s311 + $0x81] sm:$0xff] %vm223, %v290
        %324 = vst.msk [vmem:[%s311 + $0x91] sm:$0xff] %vm223, %v291
        %325 = vst.msk [vmem:[%s311 + $0x99] sm:$0xff] %vm223, %v292
        %326 = vst.msk [vmem:[%s311 + $0xa9] sm:$0xff] %vm223, %v293
        %327 = vst.msk [vmem:[%s311 + $0xb1] sm:$0xff] %vm223, %v294
        %328 = vst.msk [vmem:[%s311 + $0xc1] sm:$0xff] %vm223, %v295
        %329 = vst.msk [vmem:[%s311 + $0xc9] sm:$0xff] %vm223, %v296
        %330 = vst.msk [vmem:[%s311 + $0xd9] sm:$0xff] %vm223, %v297
        %331 = vst.msk [vmem:[%s311 + $0xe1] sm:$0xff] %vm223, %v298
        %332 = vst.msk [vmem:[%s311 + $0xf1] sm:$0xff] %vm223, %v299
        %333 = vst.msk [vmem:[%s311 + $0xf9] sm:$0xff] %vm223, %v300
        %334 = vst.msk [vmem:[%s311 + $0x109] sm:$0xff] %vm223, %v301
        %335 = vst.msk [vmem:[%s311 + $0x111] sm:$0xff] %vm223, %v302
        %336 = vst.msk [vmem:[%s311 + $0x121] sm:$0xff] %vm223, %v303
        %337 = vst.msk [vmem:[%s311 + $0x129] sm:$0xff] %vm223, %v304
        %338 = vst.msk [vmem:[%s311 + $0x139] sm:$0xff] %vm223, %v305
        %339 = vst.msk [vmem:[%s311 + $0x141] sm:$0xff] %vm223, %v306
        %340 = vst.msk [vmem:[%s311 + $0x151] sm:$0xff] %vm223, %v307
        %341 = vst.msk [vmem:[%s311 + $0x159] sm:$0xff] %vm223, %v308
        %342 = vst.msk [vmem:[%s311 + $0x169] sm:$0xff] %vm223, %v309
        %343 = vst.msk [vmem:[%s311 + $0x171] sm:$0xff] %vm223, %v310
        %v344 = vld [vmem:[#allocation2] sm:$0xff]
        %v345 = vld [vmem:[#allocation2 + $0x8] sm:$0xff]
        %v346 = vld [vmem:[#allocation2 + $0x18] sm:$0xff]
        %v347 = vld [vmem:[#allocation2 + $0x20] sm:$0xff]
        %v348 = vld [vmem:[#allocation2 + $0x30] sm:$0xff]
        %v349 = vld [vmem:[#allocation2 + $0x38] sm:$0xff]
        %v350 = vld [vmem:[#allocation2 + $0x48] sm:$0xff]
        %v351 = vld [vmem:[#allocation2 + $0x50] sm:$0xff]
        %v352 = vld [vmem:[#allocation2 + $0x60] sm:$0xff]
        %v353 = vld [vmem:[#allocation2 + $0x68] sm:$0xff]
        %v354 = vld [vmem:[#allocation2 + $0x78] sm:$0xff]
        %v355 = vld [vmem:[#allocation2 + $0x80] sm:$0xff]
        %v356 = vld [vmem:[#allocation2 + $0x90] sm:$0xff]
        %v357 = vld [vmem:[#allocation2 + $0x98] sm:$0xff]
        %v358 = vld [vmem:[#allocation2 + $0xa8] sm:$0xff]
        %v359 = vld [vmem:[#allocation2 + $0xb0] sm:$0xff]
        %v360 = vld [vmem:[#allocation2 + $0xc0] sm:$0xff]
        %v361 = vld [vmem:[#allocation2 + $0xc8] sm:$0xff]
        %v362 = vld [vmem:[#allocation2 + $0xd8] sm:$0xff]
        %v363 = vld [vmem:[#allocation2 + $0xe0] sm:$0xff]
        %v364 = vld [vmem:[#allocation2 + $0xf0] sm:$0xff]
        %v365 = vld [vmem:[#allocation2 + $0xf8] sm:$0xff]
        %v366 = vld [vmem:[#allocation2 + $0x108] sm:$0xff]
        %v367 = vld [vmem:[#allocation2 + $0x110] sm:$0xff]
        %v368 = vld [vmem:[#allocation2 + $0x120] sm:$0xff]
        %v369 = vld [vmem:[#allocation2 + $0x128] sm:$0xff]
        %v370 = vld [vmem:[#allocation2 + $0x138] sm:$0xff]
        %v371 = vld [vmem:[#allocation2 + $0x140] sm:$0xff]
        %v372 = vld [vmem:[#allocation2 + $0x150] sm:$0xff]
        %v373 = vld [vmem:[#allocation2 + $0x158] sm:$0xff]
        %v374 = vld [vmem:[#allocation2 + $0x168] sm:$0xff]
        %v375 = vld [vmem:[#allocation2 + $0x170] sm:$0xff]
        %v376 = vld [vmem:[#allocation2 + $0x1] sm:$0xff]
        %v377 = vld [vmem:[#allocation2 + $0x9] sm:$0xff]
        %v378 = vld [vmem:[#allocation2 + $0x19] sm:$0xff]
        %v379 = vld [vmem:[#allocation2 + $0x21] sm:$0xff]
        %v380 = vld [vmem:[#allocation2 + $0x31] sm:$0xff]
        %v381 = vld [vmem:[#allocation2 + $0x39] sm:$0xff]
        %v382 = vld [vmem:[#allocation2 + $0x49] sm:$0xff]
        %v383 = vld [vmem:[#allocation2 + $0x51] sm:$0xff]
        %v384 = vld [vmem:[#allocation2 + $0x61] sm:$0xff]
        %v385 = vld [vmem:[#allocation2 + $0x69] sm:$0xff]
        %v386 = vld [vmem:[#allocation2 + $0x79] sm:$0xff]
        %v387 = vld [vmem:[#allocation2 + $0x81] sm:$0xff]
        %v388 = vld [vmem:[#allocation2 + $0x91] sm:$0xff]
        %v389 = vld [vmem:[#allocation2 + $0x99] sm:$0xff]
        %v390 = vld [vmem:[#allocation2 + $0xa9] sm:$0xff]
        %v391 = vld [vmem:[#allocation2 + $0xb1] sm:$0xff]
        %v392 = vld [vmem:[#allocation2 + $0xc1] sm:$0xff]
        %v393 = vld [vmem:[#allocation2 + $0xc9] sm:$0xff]
        %v394 = vld [vmem:[#allocation2 + $0xd9] sm:$0xff]
        %v395 = vld [vmem:[#allocation2 + $0xe1] sm:$0xff]
        %v396 = vld [vmem:[#allocation2 + $0xf1] sm:$0xff]
        %v397 = vld [vmem:[#allocation2 + $0xf9] sm:$0xff]
        %v398 = vld [vmem:[#allocation2 + $0x109] sm:$0xff]
        %v399 = vld [vmem:[#allocation2 + $0x111] sm:$0xff]
        %v400 = vld [vmem:[#allocation2 + $0x121] sm:$0xff]
        %v401 = vld [vmem:[#allocation2 + $0x129] sm:$0xff]
        %v402 = vld [vmem:[#allocation2 + $0x139] sm:$0xff]
        %v403 = vld [vmem:[#allocation2 + $0x141] sm:$0xff]
        %v404 = vld [vmem:[#allocation2 + $0x151] sm:$0xff]
        %v405 = vld [vmem:[#allocation2 + $0x159] sm:$0xff]
        %v406 = vld [vmem:[#allocation2 + $0x169] sm:$0xff]
        %v407 = vld [vmem:[#allocation2 + $0x171] sm:$0xff]
        %v408 = vld [vmem:[#allocation2 + $0x2] sm:$0xff]
        %v409 = vld [vmem:[#allocation2 + $0xa] sm:$0xff]
        %v410 = vld [vmem:[#allocation2 + $0x1a] sm:$0xff]
        %v411 = vld [vmem:[#allocation2 + $0x22] sm:$0xff]
        %v412 = vld [vmem:[#allocation2 + $0x32] sm:$0xff]
        %v413 = vld [vmem:[#allocation2 + $0x3a] sm:$0xff]
        %v414 = vld [vmem:[#allocation2 + $0x4a] sm:$0xff]
        %v415 = vld [vmem:[#allocation2 + $0x52] sm:$0xff]
        %v416 = vld [vmem:[#allocation2 + $0x62] sm:$0xff]
        %v417 = vld [vmem:[#allocation2 + $0x6a] sm:$0xff]
        %v418 = vld [vmem:[#allocation2 + $0x7a] sm:$0xff]
        %v419 = vld [vmem:[#allocation2 + $0x82] sm:$0xff]
        %v420 = vld [vmem:[#allocation2 + $0x92] sm:$0xff]
        %v421 = vld [vmem:[#allocation2 + $0x9a] sm:$0xff]
        %v422 = vld [vmem:[#allocation2 + $0xaa] sm:$0xff]
        %v423 = vld [vmem:[#allocation2 + $0xb2] sm:$0xff]
        %v424 = vld [vmem:[#allocation2 + $0xc2] sm:$0xff]
        %v425 = vld [vmem:[#allocation2 + $0xca] sm:$0xff]
        %v426 = vld [vmem:[#allocation2 + $0xda] sm:$0xff]
        %v427 = vld [vmem:[#allocation2 + $0xe2] sm:$0xff]
        %v428 = vld [vmem:[#allocation2 + $0xf2] sm:$0xff]
        %v429 = vld [vmem:[#allocation2 + $0xfa] sm:$0xff]
        %v430 = vld [vmem:[#allocation2 + $0x10a] sm:$0xff]
        %v431 = vld [vmem:[#allocation2 + $0x112] sm:$0xff]
        %v432 = vld [vmem:[#allocation2 + $0x122] sm:$0xff]
        %v433 = vld [vmem:[#allocation2 + $0x12a] sm:$0xff]
        %v434 = vld [vmem:[#allocation2 + $0x13a] sm:$0xff]
        %v435 = vld [vmem:[#allocation2 + $0x142] sm:$0xff]
        %v436 = vld [vmem:[#allocation2 + $0x152] sm:$0xff]
        %v437 = vld [vmem:[#allocation2 + $0x15a] sm:$0xff]
        %v438 = vld [vmem:[#allocation2 + $0x16a] sm:$0xff]
        %v439 = vld [vmem:[#allocation2 + $0x172] sm:$0xff]
        %v440 = vld [vmem:[%s311] sm:$0xff]
        %v441 = vld [vmem:[%s311 + $0x8] sm:$0xff]
        %v442 = vld [vmem:[%s311 + $0x18] sm:$0xff]
        %v443 = vld [vmem:[%s311 + $0x20] sm:$0xff]
        %v444 = vld [vmem:[%s311 + $0x30] sm:$0xff]
        %v445 = vld [vmem:[%s311 + $0x38] sm:$0xff]
        %v446 = vld [vmem:[%s311 + $0x48] sm:$0xff]
        %v447 = vld [vmem:[%s311 + $0x50] sm:$0xff]
        %v448 = vld [vmem:[%s311 + $0x60] sm:$0xff]
        %v449 = vld [vmem:[%s311 + $0x68] sm:$0xff]
        %v450 = vld [vmem:[%s311 + $0x78] sm:$0xff]
        %v451 = vld [vmem:[%s311 + $0x80] sm:$0xff]
        %v452 = vld [vmem:[%s311 + $0x90] sm:$0xff]
        %v453 = vld [vmem:[%s311 + $0x98] sm:$0xff]
        %v454 = vld [vmem:[%s311 + $0xa8] sm:$0xff]
        %v455 = vld [vmem:[%s311 + $0xb0] sm:$0xff]
        %v456 = vld [vmem:[%s311 + $0xc0] sm:$0xff]
        %v457 = vld [vmem:[%s311 + $0xc8] sm:$0xff]
        %v458 = vld [vmem:[%s311 + $0xd8] sm:$0xff]
        %v459 = vld [vmem:[%s311 + $0xe0] sm:$0xff]
        %v460 = vld [vmem:[%s311 + $0xf0] sm:$0xff]
        %v461 = vld [vmem:[%s311 + $0xf8] sm:$0xff]
        %v462 = vld [vmem:[%s311 + $0x108] sm:$0xff]
        %v463 = vld [vmem:[%s311 + $0x110] sm:$0xff]
        %v464 = vld [vmem:[%s311 + $0x120] sm:$0xff]
        %v465 = vld [vmem:[%s311 + $0x128] sm:$0xff]
        %v466 = vld [vmem:[%s311 + $0x138] sm:$0xff]
        %v467 = vld [vmem:[%s311 + $0x140] sm:$0xff]
        %v468 = vld [vmem:[%s311 + $0x150] sm:$0xff]
        %v469 = vld [vmem:[%s311 + $0x158] sm:$0xff]
        %v470 = vld [vmem:[%s311 + $0x168] sm:$0xff]
        %v471 = vld [vmem:[%s311 + $0x170] sm:$0xff]
        %v472 = vld [vmem:[%s311 + $0x1] sm:$0xff]
        %v473 = vld [vmem:[%s311 + $0x9] sm:$0xff]
        %v474 = vld [vmem:[%s311 + $0x19] sm:$0xff]
        %v475 = vld [vmem:[%s311 + $0x21] sm:$0xff]
        %v476 = vld [vmem:[%s311 + $0x31] sm:$0xff]
        %v477 = vld [vmem:[%s311 + $0x39] sm:$0xff]
        %v478 = vld [vmem:[%s311 + $0x49] sm:$0xff]
        %v479 = vld [vmem:[%s311 + $0x51] sm:$0xff]
        %v480 = vld [vmem:[%s311 + $0x61] sm:$0xff]
        %v481 = vld [vmem:[%s311 + $0x69] sm:$0xff]
        %v482 = vld [vmem:[%s311 + $0x79] sm:$0xff]
        %v483 = vld [vmem:[%s311 + $0x81] sm:$0xff]
        %v484 = vld [vmem:[%s311 + $0x91] sm:$0xff]
        %v485 = vld [vmem:[%s311 + $0x99] sm:$0xff]
        %v486 = vld [vmem:[%s311 + $0xa9] sm:$0xff]
        %v487 = vld [vmem:[%s311 + $0xb1] sm:$0xff]
        %v488 = vld [vmem:[%s311 + $0xc1] sm:$0xff]
        %v489 = vld [vmem:[%s311 + $0xc9] sm:$0xff]
        %v490 = vld [vmem:[%s311 + $0xd9] sm:$0xff]
        %v491 = vld [vmem:[%s311 + $0xe1] sm:$0xff]
        %v492 = vld [vmem:[%s311 + $0xf1] sm:$0xff]
        %v493 = vld [vmem:[%s311 + $0xf9] sm:$0xff]
        %v494 = vld [vmem:[%s311 + $0x109] sm:$0xff]
        %v495 = vld [vmem:[%s311 + $0x111] sm:$0xff]
        %v496 = vld [vmem:[%s311 + $0x121] sm:$0xff]
        %v497 = vld [vmem:[%s311 + $0x129] sm:$0xff]
        %v498 = vld [vmem:[%s311 + $0x139] sm:$0xff]
        %v499 = vld [vmem:[%s311 + $0x141] sm:$0xff]
        %v500 = vld [vmem:[%s311 + $0x151] sm:$0xff]
        %v501 = vld [vmem:[%s311 + $0x159] sm:$0xff]
        %v502 = vld [vmem:[%s311 + $0x169] sm:$0xff]
        %v503 = vld [vmem:[%s311 + $0x171] sm:$0xff]
        %v504 = vld [vmem:[%s311 + $0x2] sm:$0xff]
        %v505 = vld [vmem:[%s311 + $0xa] sm:$0xff]
        %v506 = vld [vmem:[%s311 + $0x1a] sm:$0xff]
        %v507 = vld [vmem:[%s311 + $0x22] sm:$0xff]
        %v508 = vld [vmem:[%s311 + $0x32] sm:$0xff]
        %v509 = vld [vmem:[%s311 + $0x3a] sm:$0xff]
        %v510 = vld [vmem:[%s311 + $0x4a] sm:$0xff]
        %v511 = vld [vmem:[%s311 + $0x52] sm:$0xff]
        %v512 = vld [vmem:[%s311 + $0x62] sm:$0xff]
        %v513 = vld [vmem:[%s311 + $0x6a] sm:$0xff]
        %v514 = vld [vmem:[%s311 + $0x7a] sm:$0xff]
        %v515 = vld [vmem:[%s311 + $0x82] sm:$0xff]
        %v516 = vld [vmem:[%s311 + $0x92] sm:$0xff]
        %v517 = vld [vmem:[%s311 + $0x9a] sm:$0xff]
        %v518 = vld [vmem:[%s311 + $0xaa] sm:$0xff]
        %v519 = vld [vmem:[%s311 + $0xb2] sm:$0xff]
        %v520 = vld [vmem:[%s311 + $0xc2] sm:$0xff]
        %v521 = vld [vmem:[%s311 + $0xca] sm:$0xff]
        %v522 = vld [vmem:[%s311 + $0xda] sm:$0xff]
        %v523 = vld [vmem:[%s311 + $0xe2] sm:$0xff]
        %v524 = vld [vmem:[%s311 + $0xf2] sm:$0xff]
        %v525 = vld [vmem:[%s311 + $0xfa] sm:$0xff]
        %v526 = vld [vmem:[%s311 + $0x10a] sm:$0xff]
        %v527 = vld [vmem:[%s311 + $0x112] sm:$0xff]
        %v528 = vld [vmem:[%s311 + $0x122] sm:$0xff]
        %v529 = vld [vmem:[%s311 + $0x12a] sm:$0xff]
        %v530 = vld [vmem:[%s311 + $0x13a] sm:$0xff]
        %v531 = vld [vmem:[%s311 + $0x142] sm:$0xff]
        %v532 = vld [vmem:[%s311 + $0x152] sm:$0xff]
        %v533 = vld [vmem:[%s311 + $0x15a] sm:$0xff]
        %v534 = vld [vmem:[%s311 + $0x16a] sm:$0xff]
        %v535 = vld [vmem:[%s311 + $0x172] sm:$0xff]
        %s536 = scalar_lea.vmem [#allocation2], 48
        %v537 = vld [vmem:[%s536] sm:$0xff]
        %v538 = vld [vmem:[%s536 + $0x8] sm:$0xff]
        %v539 = vld [vmem:[%s536 + $0x18] sm:$0xff]
        %v540 = vld [vmem:[%s536 + $0x20] sm:$0xff]
        %v541 = vld [vmem:[%s536 + $0x30] sm:$0xff]
        %v542 = vld [vmem:[%s536 + $0x38] sm:$0xff]
        %v543 = vld [vmem:[%s536 + $0x48] sm:$0xff]
        %v544 = vld [vmem:[%s536 + $0x50] sm:$0xff]
        %v545 = vld [vmem:[%s536 + $0x60] sm:$0xff]
        %v546 = vld [vmem:[%s536 + $0x68] sm:$0xff]
        %v547 = vld [vmem:[%s536 + $0x78] sm:$0xff]
        %v548 = vld [vmem:[%s536 + $0x80] sm:$0xff]
        %v549 = vld [vmem:[%s536 + $0x90] sm:$0xff]
        %v550 = vld [vmem:[%s536 + $0x98] sm:$0xff]
        %v551 = vld [vmem:[%s536 + $0xa8] sm:$0xff]
        %v552 = vld [vmem:[%s536 + $0xb0] sm:$0xff]
        %v553 = vld [vmem:[%s536 + $0xc0] sm:$0xff]
        %v554 = vld [vmem:[%s536 + $0xc8] sm:$0xff]
        %v555 = vld [vmem:[%s536 + $0xd8] sm:$0xff]
        %v556 = vld [vmem:[%s536 + $0xe0] sm:$0xff]
        %v557 = vld [vmem:[%s536 + $0xf0] sm:$0xff]
        %v558 = vld [vmem:[%s536 + $0xf8] sm:$0xff]
        %v559 = vld [vmem:[%s536 + $0x108] sm:$0xff]
        %v560 = vld [vmem:[%s536 + $0x110] sm:$0xff]
        %v561 = vld [vmem:[%s536 + $0x120] sm:$0xff]
        %v562 = vld [vmem:[%s536 + $0x128] sm:$0xff]
        %v563 = vld [vmem:[%s536 + $0x138] sm:$0xff]
        %v564 = vld [vmem:[%s536 + $0x140] sm:$0xff]
        %v565 = vld [vmem:[%s536 + $0x150] sm:$0xff]
        %v566 = vld [vmem:[%s536 + $0x158] sm:$0xff]
        %v567 = vld [vmem:[%s536 + $0x168] sm:$0xff]
        %v568 = vld [vmem:[%s536 + $0x170] sm:$0xff]
        %v569 = vld [vmem:[%s536 + $0x1] sm:$0xff]
        %v570 = vld [vmem:[%s536 + $0x9] sm:$0xff]
        %v571 = vld [vmem:[%s536 + $0x19] sm:$0xff]
        %v572 = vld [vmem:[%s536 + $0x21] sm:$0xff]
        %v573 = vld [vmem:[%s536 + $0x31] sm:$0xff]
        %v574 = vld [vmem:[%s536 + $0x39] sm:$0xff]
        %v575 = vld [vmem:[%s536 + $0x49] sm:$0xff]
        %v576 = vld [vmem:[%s536 + $0x51] sm:$0xff]
        %v577 = vld [vmem:[%s536 + $0x61] sm:$0xff]
        %v578 = vld [vmem:[%s536 + $0x69] sm:$0xff]
        %v579 = vld [vmem:[%s536 + $0x79] sm:$0xff]
        %v580 = vld [vmem:[%s536 + $0x81] sm:$0xff]
        %v581 = vld [vmem:[%s536 + $0x91] sm:$0xff]
        %v582 = vld [vmem:[%s536 + $0x99] sm:$0xff]
        %v583 = vld [vmem:[%s536 + $0xa9] sm:$0xff]
        %v584 = vld [vmem:[%s536 + $0xb1] sm:$0xff]
        %v585 = vld [vmem:[%s536 + $0xc1] sm:$0xff]
        %v586 = vld [vmem:[%s536 + $0xc9] sm:$0xff]
        %v587 = vld [vmem:[%s536 + $0xd9] sm:$0xff]
        %v588 = vld [vmem:[%s536 + $0xe1] sm:$0xff]
        %v589 = vld [vmem:[%s536 + $0xf1] sm:$0xff]
        %v590 = vld [vmem:[%s536 + $0xf9] sm:$0xff]
        %v591 = vld [vmem:[%s536 + $0x109] sm:$0xff]
        %v592 = vld [vmem:[%s536 + $0x111] sm:$0xff]
        %v593 = vld [vmem:[%s536 + $0x121] sm:$0xff]
        %v594 = vld [vmem:[%s536 + $0x129] sm:$0xff]
        %v595 = vld [vmem:[%s536 + $0x139] sm:$0xff]
        %v596 = vld [vmem:[%s536 + $0x141] sm:$0xff]
        %v597 = vld [vmem:[%s536 + $0x151] sm:$0xff]
        %v598 = vld [vmem:[%s536 + $0x159] sm:$0xff]
        %v599 = vld [vmem:[%s536 + $0x169] sm:$0xff]
        %v600 = vld [vmem:[%s536 + $0x171] sm:$0xff]
        %v601 = vld [vmem:[%s536 + $0x2] sm:$0xff]
        %v602 = vld [vmem:[%s536 + $0xa] sm:$0xff]
        %v603 = vld [vmem:[%s536 + $0x1a] sm:$0xff]
        %v604 = vld [vmem:[%s536 + $0x22] sm:$0xff]
        %v605 = vld [vmem:[%s536 + $0x32] sm:$0xff]
        %v606 = vld [vmem:[%s536 + $0x3a] sm:$0xff]
        %v607 = vld [vmem:[%s536 + $0x4a] sm:$0xff]
        %v608 = vld [vmem:[%s536 + $0x52] sm:$0xff]
        %v609 = vld [vmem:[%s536 + $0x62] sm:$0xff]
        %v610 = vld [vmem:[%s536 + $0x6a] sm:$0xff]
        %v611 = vld [vmem:[%s536 + $0x7a] sm:$0xff]
        %v612 = vld [vmem:[%s536 + $0x82] sm:$0xff]
        %v613 = vld [vmem:[%s536 + $0x92] sm:$0xff]
        %v614 = vld [vmem:[%s536 + $0x9a] sm:$0xff]
        %v615 = vld [vmem:[%s536 + $0xaa] sm:$0xff]
        %v616 = vld [vmem:[%s536 + $0xb2] sm:$0xff]
        %v617 = vld [vmem:[%s536 + $0xc2] sm:$0xff]
        %v618 = vld [vmem:[%s536 + $0xca] sm:$0xff]
        %v619 = vld [vmem:[%s536 + $0xda] sm:$0xff]
        %v620 = vld [vmem:[%s536 + $0xe2] sm:$0xff]
        %v621 = vld [vmem:[%s536 + $0xf2] sm:$0xff]
        %v622 = vld [vmem:[%s536 + $0xfa] sm:$0xff]
        %v623 = vld [vmem:[%s536 + $0x10a] sm:$0xff]
        %v624 = vld [vmem:[%s536 + $0x112] sm:$0xff]
        %v625 = vld [vmem:[%s536 + $0x122] sm:$0xff]
        %v626 = vld [vmem:[%s536 + $0x12a] sm:$0xff]
        %v627 = vld [vmem:[%s536 + $0x13a] sm:$0xff]
        %v628 = vld [vmem:[%s536 + $0x142] sm:$0xff]
        %v629 = vld [vmem:[%s536 + $0x152] sm:$0xff]
        %v630 = vld [vmem:[%s536 + $0x15a] sm:$0xff]
        %v631 = vld [vmem:[%s536 + $0x16a] sm:$0xff]
        %v632 = vld [vmem:[%s536 + $0x172] sm:$0xff]
        %665 = vrot.lane.b32.xlu0 %v376, 4
        %v666 = vpop.permute.xlu0 %665
        %667 = vrot.lane.b32.xlu0 %v377, 4
        %v668 = vpop.permute.xlu0 %667
        %669 = vrot.lane.b32.xlu0 %v378, 4
        %v670 = vpop.permute.xlu0 %669
        %671 = vrot.lane.b32.xlu0 %v379, 4
        %v672 = vpop.permute.xlu0 %671
        %673 = vrot.lane.b32.xlu0 %v380, 4
        %v674 = vpop.permute.xlu0 %673
        %675 = vrot.lane.b32.xlu0 %v381, 4
        %v676 = vpop.permute.xlu0 %675
        %677 = vrot.lane.b32.xlu0 %v382, 4
        %v678 = vpop.permute.xlu0 %677
        %679 = vrot.lane.b32.xlu0 %v383, 4
        %v680 = vpop.permute.xlu0 %679
        %681 = vrot.lane.b32.xlu0 %v384, 4
        %v682 = vpop.permute.xlu0 %681
        %683 = vrot.lane.b32.xlu0 %v385, 4
        %v684 = vpop.permute.xlu0 %683
        %685 = vrot.lane.b32.xlu0 %v386, 4
        %v686 = vpop.permute.xlu0 %685
        %687 = vrot.lane.b32.xlu0 %v387, 4
        %v688 = vpop.permute.xlu0 %687
        %689 = vrot.lane.b32.xlu0 %v388, 4
        %v690 = vpop.permute.xlu0 %689
        %691 = vrot.lane.b32.xlu0 %v389, 4
        %v692 = vpop.permute.xlu0 %691
        %693 = vrot.lane.b32.xlu0 %v390, 4
        %v694 = vpop.permute.xlu0 %693
        %695 = vrot.lane.b32.xlu0 %v391, 4
        %v696 = vpop.permute.xlu0 %695
        %697 = vrot.lane.b32.xlu0 %v392, 4
        %v698 = vpop.permute.xlu0 %697
        %699 = vrot.lane.b32.xlu0 %v393, 4
        %v700 = vpop.permute.xlu0 %699
        %701 = vrot.lane.b32.xlu0 %v394, 4
        %v702 = vpop.permute.xlu0 %701
        %703 = vrot.lane.b32.xlu0 %v395, 4
        %v704 = vpop.permute.xlu0 %703
        %705 = vrot.lane.b32.xlu0 %v396, 4
        %v706 = vpop.permute.xlu0 %705
        %707 = vrot.lane.b32.xlu0 %v397, 4
        %v708 = vpop.permute.xlu0 %707
        %709 = vrot.lane.b32.xlu0 %v398, 4
        %v710 = vpop.permute.xlu0 %709
        %711 = vrot.lane.b32.xlu0 %v399, 4
        %v712 = vpop.permute.xlu0 %711
        %713 = vrot.lane.b32.xlu0 %v400, 4
        %v714 = vpop.permute.xlu0 %713
        %715 = vrot.lane.b32.xlu0 %v401, 4
        %v716 = vpop.permute.xlu0 %715
        %717 = vrot.lane.b32.xlu0 %v402, 4
        %v718 = vpop.permute.xlu0 %717
        %719 = vrot.lane.b32.xlu0 %v403, 4
        %v720 = vpop.permute.xlu0 %719
        %721 = vrot.lane.b32.xlu0 %v404, 4
        %v722 = vpop.permute.xlu0 %721
        %723 = vrot.lane.b32.xlu0 %v405, 4
        %v724 = vpop.permute.xlu0 %723
        %725 = vrot.lane.b32.xlu0 %v406, 4
        %v726 = vpop.permute.xlu0 %725
        %727 = vrot.lane.b32.xlu0 %v407, 4
        %v728 = vpop.permute.xlu0 %727
        %793 = vrot.lane.b32.xlu0 %v408, 8
        %v794 = vpop.permute.xlu0 %793
        %795 = vrot.lane.b32.xlu0 %v409, 8
        %v796 = vpop.permute.xlu0 %795
        %797 = vrot.lane.b32.xlu0 %v410, 8
        %v798 = vpop.permute.xlu0 %797
        %799 = vrot.lane.b32.xlu0 %v411, 8
        %v800 = vpop.permute.xlu0 %799
        %801 = vrot.lane.b32.xlu0 %v412, 8
        %v802 = vpop.permute.xlu0 %801
        %803 = vrot.lane.b32.xlu0 %v413, 8
        %v804 = vpop.permute.xlu0 %803
        %805 = vrot.lane.b32.xlu0 %v414, 8
        %v806 = vpop.permute.xlu0 %805
        %807 = vrot.lane.b32.xlu0 %v415, 8
        %v808 = vpop.permute.xlu0 %807
        %809 = vrot.lane.b32.xlu0 %v416, 8
        %v810 = vpop.permute.xlu0 %809
        %811 = vrot.lane.b32.xlu0 %v417, 8
        %v812 = vpop.permute.xlu0 %811
        %813 = vrot.lane.b32.xlu0 %v418, 8
        %v814 = vpop.permute.xlu0 %813
        %815 = vrot.lane.b32.xlu0 %v419, 8
        %v816 = vpop.permute.xlu0 %815
        %817 = vrot.lane.b32.xlu0 %v420, 8
        %v818 = vpop.permute.xlu0 %817
        %819 = vrot.lane.b32.xlu0 %v421, 8
        %v820 = vpop.permute.xlu0 %819
        %821 = vrot.lane.b32.xlu0 %v422, 8
        %v822 = vpop.permute.xlu0 %821
        %823 = vrot.lane.b32.xlu0 %v423, 8
        %v824 = vpop.permute.xlu0 %823
        %825 = vrot.lane.b32.xlu0 %v424, 8
        %v826 = vpop.permute.xlu0 %825
        %827 = vrot.lane.b32.xlu0 %v425, 8
        %v828 = vpop.permute.xlu0 %827
        %829 = vrot.lane.b32.xlu0 %v426, 8
        %v830 = vpop.permute.xlu0 %829
        %831 = vrot.lane.b32.xlu0 %v427, 8
        %v832 = vpop.permute.xlu0 %831
        %833 = vrot.lane.b32.xlu0 %v428, 8
        %v834 = vpop.permute.xlu0 %833
        %835 = vrot.lane.b32.xlu0 %v429, 8
        %v836 = vpop.permute.xlu0 %835
        %837 = vrot.lane.b32.xlu0 %v430, 8
        %v838 = vpop.permute.xlu0 %837
        %839 = vrot.lane.b32.xlu0 %v431, 8
        %v840 = vpop.permute.xlu0 %839
        %841 = vrot.lane.b32.xlu0 %v432, 8
        %v842 = vpop.permute.xlu0 %841
        %843 = vrot.lane.b32.xlu0 %v433, 8
        %v844 = vpop.permute.xlu0 %843
        %845 = vrot.lane.b32.xlu0 %v434, 8
        %v846 = vpop.permute.xlu0 %845
        %847 = vrot.lane.b32.xlu0 %v435, 8
        %v848 = vpop.permute.xlu0 %847
        %849 = vrot.lane.b32.xlu0 %v436, 8
        %v850 = vpop.permute.xlu0 %849
        %851 = vrot.lane.b32.xlu0 %v437, 8
        %v852 = vpop.permute.xlu0 %851
        %853 = vrot.lane.b32.xlu0 %v438, 8
        %v854 = vpop.permute.xlu0 %853
        %855 = vrot.lane.b32.xlu0 %v439, 8
        %v856 = vpop.permute.xlu0 %855
        %921 = vrot.lane.b32.xlu0 %v440, 12
        %v922 = vpop.permute.xlu0 %921
        %923 = vrot.lane.b32.xlu0 %v441, 12
        %v924 = vpop.permute.xlu0 %923
        %925 = vrot.lane.b32.xlu0 %v442, 12
        %v926 = vpop.permute.xlu0 %925
        %927 = vrot.lane.b32.xlu0 %v443, 12
        %v928 = vpop.permute.xlu0 %927
        %929 = vrot.lane.b32.xlu0 %v444, 12
        %v930 = vpop.permute.xlu0 %929
        %931 = vrot.lane.b32.xlu0 %v445, 12
        %v932 = vpop.permute.xlu0 %931
        %933 = vrot.lane.b32.xlu0 %v446, 12
        %v934 = vpop.permute.xlu0 %933
        %935 = vrot.lane.b32.xlu0 %v447, 12
        %v936 = vpop.permute.xlu0 %935
        %937 = vrot.lane.b32.xlu0 %v448, 12
        %v938 = vpop.permute.xlu0 %937
        %939 = vrot.lane.b32.xlu0 %v449, 12
        %v940 = vpop.permute.xlu0 %939
        %941 = vrot.lane.b32.xlu0 %v450, 12
        %v942 = vpop.permute.xlu0 %941
        %943 = vrot.lane.b32.xlu0 %v451, 12
        %v944 = vpop.permute.xlu0 %943
        %945 = vrot.lane.b32.xlu0 %v452, 12
        %v946 = vpop.permute.xlu0 %945
        %947 = vrot.lane.b32.xlu0 %v453, 12
        %v948 = vpop.permute.xlu0 %947
        %949 = vrot.lane.b32.xlu0 %v454, 12
        %v950 = vpop.permute.xlu0 %949
        %951 = vrot.lane.b32.xlu0 %v455, 12
        %v952 = vpop.permute.xlu0 %951
        %953 = vrot.lane.b32.xlu0 %v456, 12
        %v954 = vpop.permute.xlu0 %953
        %955 = vrot.lane.b32.xlu0 %v457, 12
        %v956 = vpop.permute.xlu0 %955
        %957 = vrot.lane.b32.xlu0 %v458, 12
        %v958 = vpop.permute.xlu0 %957
        %959 = vrot.lane.b32.xlu0 %v459, 12
        %v960 = vpop.permute.xlu0 %959
        %961 = vrot.lane.b32.xlu0 %v460, 12
        %v962 = vpop.permute.xlu0 %961
        %963 = vrot.lane.b32.xlu0 %v461, 12
        %v964 = vpop.permute.xlu0 %963
        %965 = vrot.lane.b32.xlu0 %v462, 12
        %v966 = vpop.permute.xlu0 %965
        %967 = vrot.lane.b32.xlu0 %v463, 12
        %v968 = vpop.permute.xlu0 %967
        %969 = vrot.lane.b32.xlu0 %v464, 12
        %v970 = vpop.permute.xlu0 %969
        %971 = vrot.lane.b32.xlu0 %v465, 12
        %v972 = vpop.permute.xlu0 %971
        %973 = vrot.lane.b32.xlu0 %v466, 12
        %v974 = vpop.permute.xlu0 %973
        %975 = vrot.lane.b32.xlu0 %v467, 12
        %v976 = vpop.permute.xlu0 %975
        %977 = vrot.lane.b32.xlu0 %v468, 12
        %v978 = vpop.permute.xlu0 %977
        %979 = vrot.lane.b32.xlu0 %v469, 12
        %v980 = vpop.permute.xlu0 %979
        %981 = vrot.lane.b32.xlu0 %v470, 12
        %v982 = vpop.permute.xlu0 %981
        %983 = vrot.lane.b32.xlu0 %v471, 12
        %v984 = vpop.permute.xlu0 %983
        %1049 = vrot.lane.b32.xlu0 %v472, 16
        %v1050 = vpop.permute.xlu0 %1049
        %1051 = vrot.lane.b32.xlu0 %v473, 16
        %v1052 = vpop.permute.xlu0 %1051
        %1053 = vrot.lane.b32.xlu0 %v474, 16
        %v1054 = vpop.permute.xlu0 %1053
        %1055 = vrot.lane.b32.xlu0 %v475, 16
        %v1056 = vpop.permute.xlu0 %1055
        %1057 = vrot.lane.b32.xlu0 %v476, 16
        %v1058 = vpop.permute.xlu0 %1057
        %1059 = vrot.lane.b32.xlu0 %v477, 16
        %v1060 = vpop.permute.xlu0 %1059
        %1061 = vrot.lane.b32.xlu0 %v478, 16
        %v1062 = vpop.permute.xlu0 %1061
        %1063 = vrot.lane.b32.xlu0 %v479, 16
        %v1064 = vpop.permute.xlu0 %1063
        %1065 = vrot.lane.b32.xlu0 %v480, 16
        %v1066 = vpop.permute.xlu0 %1065
        %1067 = vrot.lane.b32.xlu0 %v481, 16
        %v1068 = vpop.permute.xlu0 %1067
        %1069 = vrot.lane.b32.xlu0 %v482, 16
        %v1070 = vpop.permute.xlu0 %1069
        %1071 = vrot.lane.b32.xlu0 %v483, 16
        %v1072 = vpop.permute.xlu0 %1071
        %1073 = vrot.lane.b32.xlu0 %v484, 16
        %v1074 = vpop.permute.xlu0 %1073
        %1075 = vrot.lane.b32.xlu0 %v485, 16
        %v1076 = vpop.permute.xlu0 %1075
        %1077 = vrot.lane.b32.xlu0 %v486, 16
        %v1078 = vpop.permute.xlu0 %1077
        %1079 = vrot.lane.b32.xlu0 %v487, 16
        %v1080 = vpop.permute.xlu0 %1079
        %1081 = vrot.lane.b32.xlu0 %v488, 16
        %v1082 = vpop.permute.xlu0 %1081
        %1083 = vrot.lane.b32.xlu0 %v489, 16
        %v1084 = vpop.permute.xlu0 %1083
        %1085 = vrot.lane.b32.xlu0 %v490, 16
        %v1086 = vpop.permute.xlu0 %1085
        %1087 = vrot.lane.b32.xlu0 %v491, 16
        %v1088 = vpop.permute.xlu0 %1087
        %1089 = vrot.lane.b32.xlu0 %v492, 16
        %v1090 = vpop.permute.xlu0 %1089
        %1091 = vrot.lane.b32.xlu0 %v493, 16
        %v1092 = vpop.permute.xlu0 %1091
        %1093 = vrot.lane.b32.xlu0 %v494, 16
        %v1094 = vpop.permute.xlu0 %1093
        %1095 = vrot.lane.b32.xlu0 %v495, 16
        %v1096 = vpop.permute.xlu0 %1095
        %1097 = vrot.lane.b32.xlu0 %v496, 16
        %v1098 = vpop.permute.xlu0 %1097
        %1099 = vrot.lane.b32.xlu0 %v497, 16
        %v1100 = vpop.permute.xlu0 %1099
        %1101 = vrot.lane.b32.xlu0 %v498, 16
        %v1102 = vpop.permute.xlu0 %1101
        %1103 = vrot.lane.b32.xlu0 %v499, 16
        %v1104 = vpop.permute.xlu0 %1103
        %1105 = vrot.lane.b32.xlu0 %v500, 16
        %v1106 = vpop.permute.xlu0 %1105
        %1107 = vrot.lane.b32.xlu0 %v501, 16
        %v1108 = vpop.permute.xlu0 %1107
        %1109 = vrot.lane.b32.xlu0 %v502, 16
        %v1110 = vpop.permute.xlu0 %1109
        %1111 = vrot.lane.b32.xlu0 %v503, 16
        %v1112 = vpop.permute.xlu0 %1111
        %1177 = vrot.lane.b32.xlu0 %v504, 20
        %v1178 = vpop.permute.xlu0 %1177
        %1179 = vrot.lane.b32.xlu0 %v505, 20
        %v1180 = vpop.permute.xlu0 %1179
        %1181 = vrot.lane.b32.xlu0 %v506, 20
        %v1182 = vpop.permute.xlu0 %1181
        %1183 = vrot.lane.b32.xlu0 %v507, 20
        %v1184 = vpop.permute.xlu0 %1183
        %1185 = vrot.lane.b32.xlu0 %v508, 20
        %v1186 = vpop.permute.xlu0 %1185
        %1187 = vrot.lane.b32.xlu0 %v509, 20
        %v1188 = vpop.permute.xlu0 %1187
        %1189 = vrot.lane.b32.xlu0 %v510, 20
        %v1190 = vpop.permute.xlu0 %1189
        %1191 = vrot.lane.b32.xlu0 %v511, 20
        %v1192 = vpop.permute.xlu0 %1191
        %1193 = vrot.lane.b32.xlu0 %v512, 20
        %v1194 = vpop.permute.xlu0 %1193
        %1195 = vrot.lane.b32.xlu0 %v513, 20
        %v1196 = vpop.permute.xlu0 %1195
        %1197 = vrot.lane.b32.xlu0 %v514, 20
        %v1198 = vpop.permute.xlu0 %1197
        %1199 = vrot.lane.b32.xlu0 %v515, 20
        %v1200 = vpop.permute.xlu0 %1199
        %1201 = vrot.lane.b32.xlu0 %v516, 20
        %v1202 = vpop.permute.xlu0 %1201
        %1203 = vrot.lane.b32.xlu0 %v517, 20
        %v1204 = vpop.permute.xlu0 %1203
        %1205 = vrot.lane.b32.xlu0 %v518, 20
        %v1206 = vpop.permute.xlu0 %1205
        %1207 = vrot.lane.b32.xlu0 %v519, 20
        %v1208 = vpop.permute.xlu0 %1207
        %1209 = vrot.lane.b32.xlu0 %v520, 20
        %v1210 = vpop.permute.xlu0 %1209
        %1211 = vrot.lane.b32.xlu0 %v521, 20
        %v1212 = vpop.permute.xlu0 %1211
        %1213 = vrot.lane.b32.xlu0 %v522, 20
        %v1214 = vpop.permute.xlu0 %1213
        %1215 = vrot.lane.b32.xlu0 %v523, 20
        %v1216 = vpop.permute.xlu0 %1215
        %1217 = vrot.lane.b32.xlu0 %v524, 20
        %v1218 = vpop.permute.xlu0 %1217
        %1219 = vrot.lane.b32.xlu0 %v525, 20
        %v1220 = vpop.permute.xlu0 %1219
        %1221 = vrot.lane.b32.xlu0 %v526, 20
        %v1222 = vpop.permute.xlu0 %1221
        %1223 = vrot.lane.b32.xlu0 %v527, 20
        %v1224 = vpop.permute.xlu0 %1223
        %1225 = vrot.lane.b32.xlu0 %v528, 20
        %v1226 = vpop.permute.xlu0 %1225
        %1227 = vrot.lane.b32.xlu0 %v529, 20
        %v1228 = vpop.permute.xlu0 %1227
        %1229 = vrot.lane.b32.xlu0 %v530, 20
        %v1230 = vpop.permute.xlu0 %1229
        %1231 = vrot.lane.b32.xlu0 %v531, 20
        %v1232 = vpop.permute.xlu0 %1231
        %1233 = vrot.lane.b32.xlu0 %v532, 20
        %v1234 = vpop.permute.xlu0 %1233
        %1235 = vrot.lane.b32.xlu0 %v533, 20
        %v1236 = vpop.permute.xlu0 %1235
        %1237 = vrot.lane.b32.xlu0 %v534, 20
        %v1238 = vpop.permute.xlu0 %1237
        %1239 = vrot.lane.b32.xlu0 %v535, 20
        %v1240 = vpop.permute.xlu0 %1239
        %1305 = vrot.lane.b32.xlu0 %v537, 24
        %v1306 = vpop.permute.xlu0 %1305
        %1307 = vrot.lane.b32.xlu0 %v538, 24
        %v1308 = vpop.permute.xlu0 %1307
        %1309 = vrot.lane.b32.xlu0 %v539, 24
        %v1310 = vpop.permute.xlu0 %1309
        %1311 = vrot.lane.b32.xlu0 %v540, 24
        %v1312 = vpop.permute.xlu0 %1311
        %1313 = vrot.lane.b32.xlu0 %v541, 24
        %v1314 = vpop.permute.xlu0 %1313
        %1315 = vrot.lane.b32.xlu0 %v542, 24
        %v1316 = vpop.permute.xlu0 %1315
        %1317 = vrot.lane.b32.xlu0 %v543, 24
        %v1318 = vpop.permute.xlu0 %1317
        %1319 = vrot.lane.b32.xlu0 %v544, 24
        %v1320 = vpop.permute.xlu0 %1319
        %1321 = vrot.lane.b32.xlu0 %v545, 24
        %v1322 = vpop.permute.xlu0 %1321
        %1323 = vrot.lane.b32.xlu0 %v546, 24
        %v1324 = vpop.permute.xlu0 %1323
        %1325 = vrot.lane.b32.xlu0 %v547, 24
        %v1326 = vpop.permute.xlu0 %1325
        %1327 = vrot.lane.b32.xlu0 %v548, 24
        %v1328 = vpop.permute.xlu0 %1327
        %1329 = vrot.lane.b32.xlu0 %v549, 24
        %v1330 = vpop.permute.xlu0 %1329
        %1331 = vrot.lane.b32.xlu0 %v550, 24
        %v1332 = vpop.permute.xlu0 %1331
        %1333 = vrot.lane.b32.xlu0 %v551, 24
        %v1334 = vpop.permute.xlu0 %1333
        %1335 = vrot.lane.b32.xlu0 %v552, 24
        %v1336 = vpop.permute.xlu0 %1335
        %1337 = vrot.lane.b32.xlu0 %v553, 24
        %v1338 = vpop.permute.xlu0 %1337
        %1339 = vrot.lane.b32.xlu0 %v554, 24
        %v1340 = vpop.permute.xlu0 %1339
        %1341 = vrot.lane.b32.xlu0 %v555, 24
        %v1342 = vpop.permute.xlu0 %1341
        %1343 = vrot.lane.b32.xlu0 %v556, 24
        %v1344 = vpop.permute.xlu0 %1343
        %1345 = vrot.lane.b32.xlu0 %v557, 24
        %v1346 = vpop.permute.xlu0 %1345
        %1347 = vrot.lane.b32.xlu0 %v558, 24
        %v1348 = vpop.permute.xlu0 %1347
        %1349 = vrot.lane.b32.xlu0 %v559, 24
        %v1350 = vpop.permute.xlu0 %1349
        %1351 = vrot.lane.b32.xlu0 %v560, 24
        %v1352 = vpop.permute.xlu0 %1351
        %1353 = vrot.lane.b32.xlu0 %v561, 24
        %v1354 = vpop.permute.xlu0 %1353
        %1355 = vrot.lane.b32.xlu0 %v562, 24
        %v1356 = vpop.permute.xlu0 %1355
        %1357 = vrot.lane.b32.xlu0 %v563, 24
        %v1358 = vpop.permute.xlu0 %1357
        %1359 = vrot.lane.b32.xlu0 %v564, 24
        %v1360 = vpop.permute.xlu0 %1359
        %1361 = vrot.lane.b32.xlu0 %v565, 24
        %v1362 = vpop.permute.xlu0 %1361
        %1363 = vrot.lane.b32.xlu0 %v566, 24
        %v1364 = vpop.permute.xlu0 %1363
        %1365 = vrot.lane.b32.xlu0 %v567, 24
        %v1366 = vpop.permute.xlu0 %1365
        %1367 = vrot.lane.b32.xlu0 %v568, 24
        %v1368 = vpop.permute.xlu0 %1367
        %1433 = vrot.lane.b32.xlu0 %v569, 28
        %v1434 = vpop.permute.xlu0 %1433
        %1435 = vrot.lane.b32.xlu0 %v570, 28
        %v1436 = vpop.permute.xlu0 %1435
        %1437 = vrot.lane.b32.xlu0 %v571, 28
        %v1438 = vpop.permute.xlu0 %1437
        %1439 = vrot.lane.b32.xlu0 %v572, 28
        %v1440 = vpop.permute.xlu0 %1439
        %1441 = vrot.lane.b32.xlu0 %v573, 28
        %v1442 = vpop.permute.xlu0 %1441
        %1443 = vrot.lane.b32.xlu0 %v574, 28
        %v1444 = vpop.permute.xlu0 %1443
        %1445 = vrot.lane.b32.xlu0 %v575, 28
        %v1446 = vpop.permute.xlu0 %1445
        %1447 = vrot.lane.b32.xlu0 %v576, 28
        %v1448 = vpop.permute.xlu0 %1447
        %1449 = vrot.lane.b32.xlu0 %v577, 28
        %v1450 = vpop.permute.xlu0 %1449
        %1451 = vrot.lane.b32.xlu0 %v578, 28
        %v1452 = vpop.permute.xlu0 %1451
        %1453 = vrot.lane.b32.xlu0 %v579, 28
        %v1454 = vpop.permute.xlu0 %1453
        %1455 = vrot.lane.b32.xlu0 %v580, 28
        %v1456 = vpop.permute.xlu0 %1455
        %1457 = vrot.lane.b32.xlu0 %v581, 28
        %v1458 = vpop.permute.xlu0 %1457
        %1459 = vrot.lane.b32.xlu0 %v582, 28
        %v1460 = vpop.permute.xlu0 %1459
        %1461 = vrot.lane.b32.xlu0 %v583, 28
        %v1462 = vpop.permute.xlu0 %1461
        %1463 = vrot.lane.b32.xlu0 %v584, 28
        %v1464 = vpop.permute.xlu0 %1463
        %1465 = vrot.lane.b32.xlu0 %v585, 28
        %v1466 = vpop.permute.xlu0 %1465
        %1467 = vrot.lane.b32.xlu0 %v586, 28
        %v1468 = vpop.permute.xlu0 %1467
        %1469 = vrot.lane.b32.xlu0 %v587, 28
        %v1470 = vpop.permute.xlu0 %1469
        %1471 = vrot.lane.b32.xlu0 %v588, 28
        %v1472 = vpop.permute.xlu0 %1471
        %1473 = vrot.lane.b32.xlu0 %v589, 28
        %v1474 = vpop.permute.xlu0 %1473
        %1475 = vrot.lane.b32.xlu0 %v590, 28
        %v1476 = vpop.permute.xlu0 %1475
        %1477 = vrot.lane.b32.xlu0 %v591, 28
        %v1478 = vpop.permute.xlu0 %1477
        %1479 = vrot.lane.b32.xlu0 %v592, 28
        %v1480 = vpop.permute.xlu0 %1479
        %1481 = vrot.lane.b32.xlu0 %v593, 28
        %v1482 = vpop.permute.xlu0 %1481
        %1483 = vrot.lane.b32.xlu0 %v594, 28
        %v1484 = vpop.permute.xlu0 %1483
        %1485 = vrot.lane.b32.xlu0 %v595, 28
        %v1486 = vpop.permute.xlu0 %1485
        %1487 = vrot.lane.b32.xlu0 %v596, 28
        %v1488 = vpop.permute.xlu0 %1487
        %1489 = vrot.lane.b32.xlu0 %v597, 28
        %v1490 = vpop.permute.xlu0 %1489
        %1491 = vrot.lane.b32.xlu0 %v598, 28
        %v1492 = vpop.permute.xlu0 %1491
        %1493 = vrot.lane.b32.xlu0 %v599, 28
        %v1494 = vpop.permute.xlu0 %1493
        %1495 = vrot.lane.b32.xlu0 %v600, 28
        %v1496 = vpop.permute.xlu0 %1495
        %1561 = vrot.lane.b32.xlu0 %v601, 32
        %v1562 = vpop.permute.xlu0 %1561
        %1563 = vrot.lane.b32.xlu0 %v602, 32
        %v1564 = vpop.permute.xlu0 %1563
        %1565 = vrot.lane.b32.xlu0 %v603, 32
        %v1566 = vpop.permute.xlu0 %1565
        %1567 = vrot.lane.b32.xlu0 %v604, 32
        %v1568 = vpop.permute.xlu0 %1567
        %1569 = vrot.lane.b32.xlu0 %v605, 32
        %v1570 = vpop.permute.xlu0 %1569
        %1571 = vrot.lane.b32.xlu0 %v606, 32
        %v1572 = vpop.permute.xlu0 %1571
        %1573 = vrot.lane.b32.xlu0 %v607, 32
        %v1574 = vpop.permute.xlu0 %1573
        %1575 = vrot.lane.b32.xlu0 %v608, 32
        %v1576 = vpop.permute.xlu0 %1575
        %1577 = vrot.lane.b32.xlu0 %v609, 32
        %v1578 = vpop.permute.xlu0 %1577
        %1579 = vrot.lane.b32.xlu0 %v610, 32
        %v1580 = vpop.permute.xlu0 %1579
        %1581 = vrot.lane.b32.xlu0 %v611, 32
        %v1582 = vpop.permute.xlu0 %1581
        %1583 = vrot.lane.b32.xlu0 %v612, 32
        %v1584 = vpop.permute.xlu0 %1583
        %1585 = vrot.lane.b32.xlu0 %v613, 32
        %v1586 = vpop.permute.xlu0 %1585
        %1587 = vrot.lane.b32.xlu0 %v614, 32
        %v1588 = vpop.permute.xlu0 %1587
        %1589 = vrot.lane.b32.xlu0 %v615, 32
        %v1590 = vpop.permute.xlu0 %1589
        %1591 = vrot.lane.b32.xlu0 %v616, 32
        %v1592 = vpop.permute.xlu0 %1591
        %1593 = vrot.lane.b32.xlu0 %v617, 32
        %v1594 = vpop.permute.xlu0 %1593
        %1595 = vrot.lane.b32.xlu0 %v618, 32
        %v1596 = vpop.permute.xlu0 %1595
        %1597 = vrot.lane.b32.xlu0 %v619, 32
        %v1598 = vpop.permute.xlu0 %1597
        %1599 = vrot.lane.b32.xlu0 %v620, 32
        %v1600 = vpop.permute.xlu0 %1599
        %1601 = vrot.lane.b32.xlu0 %v621, 32
        %v1602 = vpop.permute.xlu0 %1601
        %1603 = vrot.lane.b32.xlu0 %v622, 32
        %v1604 = vpop.permute.xlu0 %1603
        %1605 = vrot.lane.b32.xlu0 %v623, 32
        %v1606 = vpop.permute.xlu0 %1605
        %1607 = vrot.lane.b32.xlu0 %v624, 32
        %v1608 = vpop.permute.xlu0 %1607
        %1609 = vrot.lane.b32.xlu0 %v625, 32
        %v1610 = vpop.permute.xlu0 %1609
        %1611 = vrot.lane.b32.xlu0 %v626, 32
        %v1612 = vpop.permute.xlu0 %1611
        %1613 = vrot.lane.b32.xlu0 %v627, 32
        %v1614 = vpop.permute.xlu0 %1613
        %1615 = vrot.lane.b32.xlu0 %v628, 32
        %v1616 = vpop.permute.xlu0 %1615
        %1617 = vrot.lane.b32.xlu0 %v629, 32
        %v1618 = vpop.permute.xlu0 %1617
        %1619 = vrot.lane.b32.xlu0 %v630, 32
        %v1620 = vpop.permute.xlu0 %1619
        %1621 = vrot.lane.b32.xlu0 %v631, 32
        %v1622 = vpop.permute.xlu0 %1621
        %1623 = vrot.lane.b32.xlu0 %v632, 32
        %v1624 = vpop.permute.xlu0 %1623
        %v1657 = vsel %vm223, %v344, %v666
        %v1658 = vsel %vm223, %v345, %v668
        %v1659 = vsel %vm223, %v346, %v670
        %v1660 = vsel %vm223, %v347, %v672
        %v1661 = vsel %vm223, %v348, %v674
        %v1662 = vsel %vm223, %v349, %v676
        %v1663 = vsel %vm223, %v350, %v678
        %v1664 = vsel %vm223, %v351, %v680
        %v1665 = vsel %vm223, %v352, %v682
        %v1666 = vsel %vm223, %v353, %v684
        %v1667 = vsel %vm223, %v354, %v686
        %v1668 = vsel %vm223, %v355, %v688
        %v1669 = vsel %vm223, %v356, %v690
        %v1670 = vsel %vm223, %v357, %v692
        %v1671 = vsel %vm223, %v358, %v694
        %v1672 = vsel %vm223, %v359, %v696
        %v1673 = vsel %vm223, %v360, %v698
        %v1674 = vsel %vm223, %v361, %v700
        %v1675 = vsel %vm223, %v362, %v702
        %v1676 = vsel %vm223, %v363, %v704
        %v1677 = vsel %vm223, %v364, %v706
        %v1678 = vsel %vm223, %v365, %v708
        %v1679 = vsel %vm223, %v366, %v710
        %v1680 = vsel %vm223, %v367, %v712
        %v1681 = vsel %vm223, %v368, %v714
        %v1682 = vsel %vm223, %v369, %v716
        %v1683 = vsel %vm223, %v370, %v718
        %v1684 = vsel %vm223, %v371, %v720
        %v1685 = vsel %vm223, %v372, %v722
        %v1686 = vsel %vm223, %v373, %v724
        %v1687 = vsel %vm223, %v374, %v726
        %v1688 = vsel %vm223, %v375, %v728
        %vm1689 = vcmask 64512
        %v1690 = vsel %vm1689, %v1657, %v794
        %v1691 = vsel %vm1689, %v1658, %v796
        %v1692 = vsel %vm1689, %v1659, %v798
        %v1693 = vsel %vm1689, %v1660, %v800
        %v1694 = vsel %vm1689, %v1661, %v802
        %v1695 = vsel %vm1689, %v1662, %v804
        %v1696 = vsel %vm1689, %v1663, %v806
        %v1697 = vsel %vm1689, %v1664, %v808
        %v1698 = vsel %vm1689, %v1665, %v810
        %v1699 = vsel %vm1689, %v1666, %v812
        %v1700 = vsel %vm1689, %v1667, %v814
        %v1701 = vsel %vm1689, %v1668, %v816
        %v1702 = vsel %vm1689, %v1669, %v818
        %v1703 = vsel %vm1689, %v1670, %v820
        %v1704 = vsel %vm1689, %v1671, %v822
        %v1705 = vsel %vm1689, %v1672, %v824
        %v1706 = vsel %vm1689, %v1673, %v826
        %v1707 = vsel %vm1689, %v1674, %v828
        %v1708 = vsel %vm1689, %v1675, %v830
        %v1709 = vsel %vm1689, %v1676, %v832
        %v1710 = vsel %vm1689, %v1677, %v834
        %v1711 = vsel %vm1689, %v1678, %v836
        %v1712 = vsel %vm1689, %v1679, %v838
        %v1713 = vsel %vm1689, %v1680, %v840
        %v1714 = vsel %vm1689, %v1681, %v842
        %v1715 = vsel %vm1689, %v1682, %v844
        %v1716 = vsel %vm1689, %v1683, %v846
        %v1717 = vsel %vm1689, %v1684, %v848
        %v1718 = vsel %vm1689, %v1685, %v850
        %v1719 = vsel %vm1689, %v1686, %v852
        %v1720 = vsel %vm1689, %v1687, %v854
        %v1721 = vsel %vm1689, %v1688, %v856
        %vm1722 = vcmask 97280
        %v1723 = vsel %vm1722, %v1690, %v922
        %v1724 = vsel %vm1722, %v1691, %v924
        %v1725 = vsel %vm1722, %v1692, %v926
        %v1726 = vsel %vm1722, %v1693, %v928
        %v1727 = vsel %vm1722, %v1694, %v930
        %v1728 = vsel %vm1722, %v1695, %v932
        %v1729 = vsel %vm1722, %v1696, %v934
        %v1730 = vsel %vm1722, %v1697, %v936
        %v1731 = vsel %vm1722, %v1698, %v938
        %v1732 = vsel %vm1722, %v1699, %v940
        %v1733 = vsel %vm1722, %v1700, %v942
        %v1734 = vsel %vm1722, %v1701, %v944
        %v1735 = vsel %vm1722, %v1702, %v946
        %v1736 = vsel %vm1722, %v1703, %v948
        %v1737 = vsel %vm1722, %v1704, %v950
        %v1738 = vsel %vm1722, %v1705, %v952
        %v1739 = vsel %vm1722, %v1706, %v954
        %v1740 = vsel %vm1722, %v1707, %v956
        %v1741 = vsel %vm1722, %v1708, %v958
        %v1742 = vsel %vm1722, %v1709, %v960
        %v1743 = vsel %vm1722, %v1710, %v962
        %v1744 = vsel %vm1722, %v1711, %v964
        %v1745 = vsel %vm1722, %v1712, %v966
        %v1746 = vsel %vm1722, %v1713, %v968
        %v1747 = vsel %vm1722, %v1714, %v970
        %v1748 = vsel %vm1722, %v1715, %v972
        %v1749 = vsel %vm1722, %v1716, %v974
        %v1750 = vsel %vm1722, %v1717, %v976
        %v1751 = vsel %vm1722, %v1718, %v978
        %v1752 = vsel %vm1722, %v1719, %v980
        %v1753 = vsel %vm1722, %v1720, %v982
        %v1754 = vsel %vm1722, %v1721, %v984
        %vm1755 = vcmask 130048
        %v1756 = vsel %vm1755, %v1723, %v1050
        %v1757 = vsel %vm1755, %v1724, %v1052
        %v1758 = vsel %vm1755, %v1725, %v1054
        %v1759 = vsel %vm1755, %v1726, %v1056
        %v1760 = vsel %vm1755, %v1727, %v1058
        %v1761 = vsel %vm1755, %v1728, %v1060
        %v1762 = vsel %vm1755, %v1729, %v1062
        %v1763 = vsel %vm1755, %v1730, %v1064
        %v1764 = vsel %vm1755, %v1731, %v1066
        %v1765 = vsel %vm1755, %v1732, %v1068
        %v1766 = vsel %vm1755, %v1733, %v1070
        %v1767 = vsel %vm1755, %v1734, %v1072
        %v1768 = vsel %vm1755, %v1735, %v1074
        %v1769 = vsel %vm1755, %v1736, %v1076
        %v1770 = vsel %vm1755, %v1737, %v1078
        %v1771 = vsel %vm1755, %v1738, %v1080
        %v1772 = vsel %vm1755, %v1739, %v1082
        %v1773 = vsel %vm1755, %v1740, %v1084
        %v1774 = vsel %vm1755, %v1741, %v1086
        %v1775 = vsel %vm1755, %v1742, %v1088
        %v1776 = vsel %vm1755, %v1743, %v1090
        %v1777 = vsel %vm1755, %v1744, %v1092
        %v1778 = vsel %vm1755, %v1745, %v1094
        %v1779 = vsel %vm1755, %v1746, %v1096
        %v1780 = vsel %vm1755, %v1747, %v1098
        %v1781 = vsel %vm1755, %v1748, %v1100
        %v1782 = vsel %vm1755, %v1749, %v1102
        %v1783 = vsel %vm1755, %v1750, %v1104
        %v1784 = vsel %vm1755, %v1751, %v1106
        %v1785 = vsel %vm1755, %v1752, %v1108
        %v1786 = vsel %vm1755, %v1753, %v1110
        %v1787 = vsel %vm1755, %v1754, %v1112
        %vm1788 = vcmask 162816
        %v1789 = vsel %vm1788, %v1756, %v1178
        %v1790 = vsel %vm1788, %v1757, %v1180
        %v1791 = vsel %vm1788, %v1758, %v1182
        %v1792 = vsel %vm1788, %v1759, %v1184
        %v1793 = vsel %vm1788, %v1760, %v1186
        %v1794 = vsel %vm1788, %v1761, %v1188
        %v1795 = vsel %vm1788, %v1762, %v1190
        %v1796 = vsel %vm1788, %v1763, %v1192
        %v1797 = vsel %vm1788, %v1764, %v1194
        %v1798 = vsel %vm1788, %v1765, %v1196
        %v1799 = vsel %vm1788, %v1766, %v1198
        %v1800 = vsel %vm1788, %v1767, %v1200
        %v1801 = vsel %vm1788, %v1768, %v1202
        %v1802 = vsel %vm1788, %v1769, %v1204
        %v1803 = vsel %vm1788, %v1770, %v1206
        %v1804 = vsel %vm1788, %v1771, %v1208
        %v1805 = vsel %vm1788, %v1772, %v1210
        %v1806 = vsel %vm1788, %v1773, %v1212
        %v1807 = vsel %vm1788, %v1774, %v1214
        %v1808 = vsel %vm1788, %v1775, %v1216
        %v1809 = vsel %vm1788, %v1776, %v1218
        %v1810 = vsel %vm1788, %v1777, %v1220
        %v1811 = vsel %vm1788, %v1778, %v1222
        %v1812 = vsel %vm1788, %v1779, %v1224
        %v1813 = vsel %vm1788, %v1780, %v1226
        %v1814 = vsel %vm1788, %v1781, %v1228
        %v1815 = vsel %vm1788, %v1782, %v1230
        %v1816 = vsel %vm1788, %v1783, %v1232
        %v1817 = vsel %vm1788, %v1784, %v1234
        %v1818 = vsel %vm1788, %v1785, %v1236
        %v1819 = vsel %vm1788, %v1786, %v1238
        %v1820 = vsel %vm1788, %v1787, %v1240
        %vm1821 = vcmask 195584
        %v1822 = vsel %vm1821, %v1789, %v1306
        %v1823 = vsel %vm1821, %v1790, %v1308
        %v1824 = vsel %vm1821, %v1791, %v1310
        %v1825 = vsel %vm1821, %v1792, %v1312
        %v1826 = vsel %vm1821, %v1793, %v1314
        %v1827 = vsel %vm1821, %v1794, %v1316
        %v1828 = vsel %vm1821, %v1795, %v1318
        %v1829 = vsel %vm1821, %v1796, %v1320
        %v1830 = vsel %vm1821, %v1797, %v1322
        %v1831 = vsel %vm1821, %v1798, %v1324
        %v1832 = vsel %vm1821, %v1799, %v1326
        %v1833 = vsel %vm1821, %v1800, %v1328
        %v1834 = vsel %vm1821, %v1801, %v1330
        %v1835 = vsel %vm1821, %v1802, %v1332
        %v1836 = vsel %vm1821, %v1803, %v1334
        %v1837 = vsel %vm1821, %v1804, %v1336
        %v1838 = vsel %vm1821, %v1805, %v1338
        %v1839 = vsel %vm1821, %v1806, %v1340
        %v1840 = vsel %vm1821, %v1807, %v1342
        %v1841 = vsel %vm1821, %v1808, %v1344
        %v1842 = vsel %vm1821, %v1809, %v1346
        %v1843 = vsel %vm1821, %v1810, %v1348
        %v1844 = vsel %vm1821, %v1811, %v1350
        %v1845 = vsel %vm1821, %v1812, %v1352
        %v1846 = vsel %vm1821, %v1813, %v1354
        %v1847 = vsel %vm1821, %v1814, %v1356
        %v1848 = vsel %vm1821, %v1815, %v1358
        %v1849 = vsel %vm1821, %v1816, %v1360
        %v1850 = vsel %vm1821, %v1817, %v1362
        %v1851 = vsel %vm1821, %v1818, %v1364
        %v1852 = vsel %vm1821, %v1819, %v1366
        %v1853 = vsel %vm1821, %v1820, %v1368
        %vm1854 = vcmask 228352
        %v1855 = vsel %vm1854, %v1822, %v1434
        %v1856 = vsel %vm1854, %v1823, %v1436
        %v1857 = vsel %vm1854, %v1824, %v1438
        %v1858 = vsel %vm1854, %v1825, %v1440
        %v1859 = vsel %vm1854, %v1826, %v1442
        %v1860 = vsel %vm1854, %v1827, %v1444
        %v1861 = vsel %vm1854, %v1828, %v1446
        %v1862 = vsel %vm1854, %v1829, %v1448
        %v1863 = vsel %vm1854, %v1830, %v1450
        %v1864 = vsel %vm1854, %v1831, %v1452
        %v1865 = vsel %vm1854, %v1832, %v1454
        %v1866 = vsel %vm1854, %v1833, %v1456
        %v1867 = vsel %vm1854, %v1834, %v1458
        %v1868 = vsel %vm1854, %v1835, %v1460
        %v1869 = vsel %vm1854, %v1836, %v1462
        %v1870 = vsel %vm1854, %v1837, %v1464
        %v1871 = vsel %vm1854, %v1838, %v1466
        %v1872 = vsel %vm1854, %v1839, %v1468
        %v1873 = vsel %vm1854, %v1840, %v1470
        %v1874 = vsel %vm1854, %v1841, %v1472
        %v1875 = vsel %vm1854, %v1842, %v1474
        %v1876 = vsel %vm1854, %v1843, %v1476
        %v1877 = vsel %vm1854, %v1844, %v1478
        %v1878 = vsel %vm1854, %v1845, %v1480
        %v1879 = vsel %vm1854, %v1846, %v1482
        %v1880 = vsel %vm1854, %v1847, %v1484
        %v1881 = vsel %vm1854, %v1848, %v1486
        %v1882 = vsel %vm1854, %v1849, %v1488
        %v1883 = vsel %vm1854, %v1850, %v1490
        %v1884 = vsel %vm1854, %v1851, %v1492
        %v1885 = vsel %vm1854, %v1852, %v1494
        %v1886 = vsel %vm1854, %v1853, %v1496
        %vm1887 = vcmask 261120
        %v1888 = vsel %vm1887, %v1855, %v1562
        %v1889 = vsel %vm1887, %v1856, %v1564
        %v1890 = vsel %vm1887, %v1857, %v1566
        %v1891 = vsel %vm1887, %v1858, %v1568
        %v1892 = vsel %vm1887, %v1859, %v1570
        %v1893 = vsel %vm1887, %v1860, %v1572
        %v1894 = vsel %vm1887, %v1861, %v1574
        %v1895 = vsel %vm1887, %v1862, %v1576
        %v1896 = vsel %vm1887, %v1863, %v1578
        %v1897 = vsel %vm1887, %v1864, %v1580
        %v1898 = vsel %vm1887, %v1865, %v1582
        %v1899 = vsel %vm1887, %v1866, %v1584
        %v1900 = vsel %vm1887, %v1867, %v1586
        %v1901 = vsel %vm1887, %v1868, %v1588
        %v1902 = vsel %vm1887, %v1869, %v1590
        %v1903 = vsel %vm1887, %v1870, %v1592
        %v1904 = vsel %vm1887, %v1871, %v1594
        %v1905 = vsel %vm1887, %v1872, %v1596
        %v1906 = vsel %vm1887, %v1873, %v1598
        %v1907 = vsel %vm1887, %v1874, %v1600
        %v1908 = vsel %vm1887, %v1875, %v1602
        %v1909 = vsel %vm1887, %v1876, %v1604
        %v1910 = vsel %vm1887, %v1877, %v1606
        %v1911 = vsel %vm1887, %v1878, %v1608
        %v1912 = vsel %vm1887, %v1879, %v1610
        %v1913 = vsel %vm1887, %v1880, %v1612
        %v1914 = vsel %vm1887, %v1881, %v1614
        %v1915 = vsel %vm1887, %v1882, %v1616
        %v1916 = vsel %vm1887, %v1883, %v1618
        %v1917 = vsel %vm1887, %v1884, %v1620
        %v1918 = vsel %vm1887, %v1885, %v1622
        %v1919 = vsel %vm1887, %v1886, %v1624
        %v1920 = vld [vmem:[%s1] sm:$0xff]
        %v1921 = vld [vmem:[%s1 + $0x8] sm:$0xff]
        %v1922 = vld [vmem:[%s1 + $0x10] sm:$0xff]
        %v1923 = vld [vmem:[%s1 + $0x18] sm:$0xff]
        %v1924 = vld [vmem:[%s1 + $0x20] sm:$0xf]
        %v1925 = vld [vmem:[%s2] sm:$0x1]
        %v1927 = vlaneseq
        %v1928 = vshrl.u32 %v1927, 7
        %v1929 = vsub.s32 0, %v1928
        %v1930 = vrot.slane %v1925, %v1929
        %vm1932 = vcmask 293888
        %v1934 = vsel %vm1932, %v1888, 0
        %v1937 = vsel %vm1932, %v1889, 0
        %v1940 = vsel %vm1932, %v1890, 0
        %v1943 = vsel %vm1932, %v1891, 0
        %v1946 = vsel %vm1932, %v1892, 0
        %v1949 = vsel %vm1932, %v1893, 0
        %v1952 = vsel %vm1932, %v1894, 0
        %v1955 = vsel %vm1932, %v1895, 0
        %v1958 = vsel %vm1932, %v1896, 0
        %v1961 = vsel %vm1932, %v1897, 0
        %v1964 = vsel %vm1932, %v1898, 0
        %v1967 = vsel %vm1932, %v1899, 0
        %v1970 = vsel %vm1932, %v1900, 0
        %v1973 = vsel %vm1932, %v1901, 0
        %v1976 = vsel %vm1932, %v1902, 0
        %v1979 = vsel %vm1932, %v1903, 0
        %v1982 = vsel %vm1932, %v1904, 0
        %v1985 = vsel %vm1932, %v1905, 0
        %v1988 = vsel %vm1932, %v1906, 0
        %v1991 = vsel %vm1932, %v1907, 0
        %v1994 = vsel %vm1932, %v1908, 0
        %v1997 = vsel %vm1932, %v1909, 0
        %v2000 = vsel %vm1932, %v1910, 0
        %v2003 = vsel %vm1932, %v1911, 0
        %v2006 = vsel %vm1932, %v1912, 0
        %v2009 = vsel %vm1932, %v1913, 0
        %v2012 = vsel %vm1932, %v1914, 0
        %v2015 = vsel %vm1932, %v1915, 0
        %v2018 = vsel %vm1932, %v1916, 0
        %v2021 = vsel %vm1932, %v1917, 0
        %v2024 = vsel %vm1932, %v1918, 0
        %v2027 = vsel %vm1932, %v1919, 0
        %vm2029 = vcmask 1043456
        %v2031 = vsel %vm2029, %v1924, 0
        %2033 = vmatprep.subr.mxu0 0.0
        %2034 = vmatpush1.msra.mxu0 %v1920
        %2035 = vmatprep.subr.mxu0 0.0
        %2036 = vmatpush1.msra.mxu0 %v1921
        %2037 = vmatprep.subr.mxu0 0.0
        %2038 = vmatpush1.msra.mxu0 %v1922
        %2039 = vmatprep.subr.mxu0 0.0
        %2040 = vmatpush1.msra.mxu0 %v1923
        %2041 = vmatprep.subr.mxu0 0.0
        %2042 = vmatpush1.msra.mxu0 %v2031
        %2043 = vmatprep.subr.mxu0 0.0
        %2044 = vmatpush1.msra.mxu0 0.0
        %2045 = vmatprep.subr.mxu0 0.0
        %2046 = vmatpush1.msra.mxu0 0.0
        %2047 = vmatprep.subr.mxu0 0.0
        %2048 = vmatpush1.msra.mxu0 0.0
        %2049 = vmatprep.subr.mxu0 0.0
        %2050 = vmatpush1.msra.mxu0 0.0
        %2051 = vmatprep.subr.mxu0 0.0
        %2052 = vmatpush1.msra.mxu0 0.0
        %2053 = vmatprep.subr.mxu0 0.0
        %2054 = vmatpush1.msra.mxu0 0.0
        %2055 = vmatprep.subr.mxu0 0.0
        %2056 = vmatpush1.msra.mxu0 0.0
        %2057 = vmatprep.subr.mxu0 0.0
        %2058 = vmatpush1.msra.mxu0 0.0
        %2059 = vmatprep.subr.mxu0 0.0
        %2060 = vmatpush1.msra.mxu0 0.0
        %2061 = vmatprep.subr.mxu0 0.0
        %2062 = vmatpush1.msra.mxu0 0.0
        %2063 = vmatprep.subr.mxu0 0.0
        %2064 = vmatpush1.msra.mxu0 0.0
        %2065 = vmatprep.subr.mxu0 0.0
        %2066 = vmatpush1.msra.mxu0 0.0
        %2067 = vmatprep.subr.mxu0 0.0
        %2068 = vmatpush1.msra.mxu0 0.0
        %2069 = vmatprep.subr.mxu0 0.0
        %2070 = vmatpush1.msra.mxu0 0.0
        %2071 = vmatprep.subr.mxu0 0.0
        %2072 = vmatpush1.msra.mxu0 0.0
        %2073 = vmatprep.subr.mxu0 0.0
        %2074 = vmatpush1.msra.mxu0 0.0
        %2075 = vmatprep.subr.mxu0 0.0
        %2076 = vmatpush1.msra.mxu0 0.0
        %2077 = vmatprep.subr.mxu0 0.0
        %2078 = vmatpush1.msra.mxu0 0.0
        %2079 = vmatprep.subr.mxu0 0.0
        %2080 = vmatpush1.msra.mxu0 0.0
        %2081 = vmatprep.subr.mxu0 0.0
        %2082 = vmatpush1.msra.mxu0 0.0
        %2083 = vmatprep.subr.mxu0 0.0
        %2084 = vmatpush1.msra.mxu0 0.0
        %2085 = vmatprep.subr.mxu0 0.0
        %2086 = vmatpush1.msra.mxu0 0.0
        %2087 = vmatprep.subr.mxu0 0.0
        %2088 = vmatpush1.msra.mxu0 0.0
        %2089 = vmatprep.subr.mxu0 0.0
        %2090 = vmatpush1.msra.mxu0 0.0
        %2091 = vmatprep.subr.mxu0 0.0
        %2092 = vmatpush1.msra.mxu0 0.0
        %2093 = vmatprep.subr.mxu0 0.0
        %2094 = vmatpush1.msra.mxu0 0.0
        %2095 = vmatprep.subr.mxu0 0.0
        %2096 = vmatpush1.msra.mxu0 0.0
        %2097 = vmatprep.mubr.f32.mxu0 0.0
        %2098 = vmatmul.mubr.f32.gmra.mrb[0].mxu0 %v1934
        %v2099 = vpop.f32.mrb[0].mxu0
        %v2100 = vadd.f32 %v1930, %v2099
        %v2101 = vpop.f32.mrb[0].mxu0
        %2102 = vmatprep.mubr.f32.mxu0 0.0
        %2103 = vmatmul.mubr.f32.gmra.mrb[0].mxu0 %v1937
        %v2104 = vpop.f32.mrb[0].mxu0
        %v2105 = vadd.f32 %v1930, %v2104
        %v2106 = vpop.f32.mrb[0].mxu0
        %2107 = vmatprep.mubr.f32.mxu0 0.0
        %2108 = vmatmul.mubr.f32.gmra.mrb[0].mxu0 %v1940
        %v2109 = vpop.f32.mrb[0].mxu0
        %v2110 = vadd.f32 %v1930, %v2109
        %v2111 = vpop.f32.mrb[0].mxu0
        %2112 = vmatprep.mubr.f32.mxu0 0.0
        %2113 = vmatmul.mubr.f32.gmra.mrb[0].mxu0 %v1943
        %v2114 = vpop.f32.mrb[0].mxu0
        %v2115 = vadd.f32 %v1930, %v2114
        %v2116 = vpop.f32.mrb[0].mxu0
        %2117 = vmatprep.mubr.f32.mxu0 0.0
        %2118 = vmatmul.mubr.f32.gmra.mrb[0].mxu0 %v1946
        %v2119 = vpop.f32.mrb[0].mxu0
        %v2120 = vadd.f32 %v1930, %v2119
        %v2121 = vpop.f32.mrb[0].mxu0
        %2122 = vmatprep.mubr.f32.mxu0 0.0
        %2123 = vmatmul.mubr.f32.gmra.mrb[0].mxu0 %v1949
        %v2124 = vpop.f32.mrb[0].mxu0
        %v2125 = vadd.f32 %v1930, %v2124
        %v2126 = vpop.f32.mrb[0].mxu0
        %2127 = vmatprep.mubr.f32.mxu0 0.0
        %2128 = vmatmul.mubr.f32.gmra.mrb[0].mxu0 %v1952
        %v2129 = vpop.f32.mrb[0].mxu0
        %v2130 = vadd.f32 %v1930, %v2129
        %v2131 = vpop.f32.mrb[0].mxu0
        %2132 = vmatprep.mubr.f32.mxu0 0.0
        %2133 = vmatmul.mubr.f32.gmra.mrb[0].mxu0 %v1955
        %v2134 = vpop.f32.mrb[0].mxu0
        %v2135 = vadd.f32 %v1930, %v2134
        %v2136 = vpop.f32.mrb[0].mxu0
        %2137 = vmatprep.mubr.f32.mxu0 0.0
        %2138 = vmatmul.mubr.f32.gmra.mrb[0].mxu0 %v1958
        %v2139 = vpop.f32.mrb[0].mxu0
        %v2140 = vadd.f32 %v1930, %v2139
        %v2141 = vpop.f32.mrb[0].mxu0
        %2142 = vmatprep.mubr.f32.mxu0 0.0
        %2143 = vmatmul.mubr.f32.gmra.mrb[0].mxu0 %v1961
        %v2144 = vpop.f32.mrb[0].mxu0
        %v2145 = vadd.f32 %v1930, %v2144
        %v2146 = vpop.f32.mrb[0].mxu0
        %2147 = vmatprep.mubr.f32.mxu0 0.0
        %2148 = vmatmul.mubr.f32.gmra.mrb[0].mxu0 %v1964
        %v2149 = vpop.f32.mrb[0].mxu0
        %v2150 = vadd.f32 %v1930, %v2149
        %v2151 = vpop.f32.mrb[0].mxu0
        %2152 = vmatprep.mubr.f32.mxu0 0.0
        %2153 = vmatmul.mubr.f32.gmra.mrb[0].mxu0 %v1967
        %v2154 = vpop.f32.mrb[0].mxu0
        %v2155 = vadd.f32 %v1930, %v2154
        %v2156 = vpop.f32.mrb[0].mxu0
        %2157 = vmatprep.mubr.f32.mxu0 0.0
        %2158 = vmatmul.mubr.f32.gmra.mrb[0].mxu0 %v1970
        %v2159 = vpop.f32.mrb[0].mxu0
        %v2160 = vadd.f32 %v1930, %v2159
        %v2161 = vpop.f32.mrb[0].mxu0
        %2162 = vmatprep.mubr.f32.mxu0 0.0
        %2163 = vmatmul.mubr.f32.gmra.mrb[0].mxu0 %v1973
        %v2164 = vpop.f32.mrb[0].mxu0
        %v2165 = vadd.f32 %v1930, %v2164
        %v2166 = vpop.f32.mrb[0].mxu0
        %2167 = vmatprep.mubr.f32.mxu0 0.0
        %2168 = vmatmul.mubr.f32.gmra.mrb[0].mxu0 %v1976
        %v2169 = vpop.f32.mrb[0].mxu0
        %v2170 = vadd.f32 %v1930, %v2169
        %v2171 = vpop.f32.mrb[0].mxu0
        %2172 = vmatprep.mubr.f32.mxu0 0.0
        %2173 = vmatmul.mubr.f32.gmra.mrb[0].mxu0 %v1979
        %v2174 = vpop.f32.mrb[0].mxu0
        %v2175 = vadd.f32 %v1930, %v2174
        %v2176 = vpop.f32.mrb[0].mxu0
        %2177 = vmatprep.mubr.f32.mxu0 0.0
        %2178 = vmatmul.mubr.f32.gmra.mrb[0].mxu0 %v1982
        %v2179 = vpop.f32.mrb[0].mxu0
        %v2180 = vadd.f32 %v1930, %v2179
        %v2181 = vpop.f32.mrb[0].mxu0
        %2182 = vmatprep.mubr.f32.mxu0 0.0
        %2183 = vmatmul.mubr.f32.gmra.mrb[0].mxu0 %v1985
        %v2184 = vpop.f32.mrb[0].mxu0
        %v2185 = vadd.f32 %v1930, %v2184
        %v2186 = vpop.f32.mrb[0].mxu0
        %2187 = vmatprep.mubr.f32.mxu0 0.0
        %2188 = vmatmul.mubr.f32.gmra.mrb[0].mxu0 %v1988
        %v2189 = vpop.f32.mrb[0].mxu0
        %v2190 = vadd.f32 %v1930, %v2189
        %v2191 = vpop.f32.mrb[0].mxu0
        %2192 = vmatprep.mubr.f32.mxu0 0.0
        %2193 = vmatmul.mubr.f32.gmra.mrb[0].mxu0 %v1991
        %v2194 = vpop.f32.mrb[0].mxu0
        %v2195 = vadd.f32 %v1930, %v2194
        %v2196 = vpop.f32.mrb[0].mxu0
        %2197 = vmatprep.mubr.f32.mxu0 0.0
        %2198 = vmatmul.mubr.f32.gmra.mrb[0].mxu0 %v1994
        %v2199 = vpop.f32.mrb[0].mxu0
        %v2200 = vadd.f32 %v1930, %v2199
        %v2201 = vpop.f32.mrb[0].mxu0
        %2202 = vmatprep.mubr.f32.mxu0 0.0
        %2203 = vmatmul.mubr.f32.gmra.mrb[0].mxu0 %v1997
        %v2204 = vpop.f32.mrb[0].mxu0
        %v2205 = vadd.f32 %v1930, %v2204
        %v2206 = vpop.f32.mrb[0].mxu0
        %2207 = vmatprep.mubr.f32.mxu0 0.0
        %2208 = vmatmul.mubr.f32.gmra.mrb[0].mxu0 %v2000
        %v2209 = vpop.f32.mrb[0].mxu0
        %v2210 = vadd.f32 %v1930, %v2209
        %v2211 = vpop.f32.mrb[0].mxu0
        %2212 = vmatprep.mubr.f32.mxu0 0.0
        %2213 = vmatmul.mubr.f32.gmra.mrb[0].mxu0 %v2003
        %v2214 = vpop.f32.mrb[0].mxu0
        %v2215 = vadd.f32 %v1930, %v2214
        %v2216 = vpop.f32.mrb[0].mxu0
        %2217 = vmatprep.mubr.f32.mxu0 0.0
        %2218 = vmatmul.mubr.f32.gmra.mrb[0].mxu0 %v2006
        %v2219 = vpop.f32.mrb[0].mxu0
        %v2220 = vadd.f32 %v1930, %v2219
        %v2221 = vpop.f32.mrb[0].mxu0
        %2222 = vmatprep.mubr.f32.mxu0 0.0
        %2223 = vmatmul.mubr.f32.gmra.mrb[0].mxu0 %v2009
        %v2224 = vpop.f32.mrb[0].mxu0
        %v2225 = vadd.f32 %v1930, %v2224
        %v2226 = vpop.f32.mrb[0].mxu0
        %2227 = vmatprep.mubr.f32.mxu0 0.0
        %2228 = vmatmul.mubr.f32.gmra.mrb[0].mxu0 %v2012
        %v2229 = vpop.f32.mrb[0].mxu0
        %v2230 = vadd.f32 %v1930, %v2229
        %v2231 = vpop.f32.mrb[0].mxu0
        %2232 = vmatprep.mubr.f32.mxu0 0.0
        %2233 = vmatmul.mubr.f32.gmra.mrb[0].mxu0 %v2015
        %v2234 = vpop.f32.mrb[0].mxu0
        %v2235 = vadd.f32 %v1930, %v2234
        %v2236 = vpop.f32.mrb[0].mxu0
        %2237 = vmatprep.mubr.f32.mxu0 0.0
        %2238 = vmatmul.mubr.f32.gmra.mrb[0].mxu0 %v2018
        %v2239 = vpop.f32.mrb[0].mxu0
        %v2240 = vadd.f32 %v1930, %v2239
        %v2241 = vpop.f32.mrb[0].mxu0
        %2242 = vmatprep.mubr.f32.mxu0 0.0
        %2243 = vmatmul.mubr.f32.gmra.mrb[0].mxu0 %v2021
        %v2244 = vpop.f32.mrb[0].mxu0
        %v2245 = vadd.f32 %v1930, %v2244
        %v2246 = vpop.f32.mrb[0].mxu0
        %2247 = vmatprep.mubr.f32.mxu0 0.0
        %2248 = vmatmul.mubr.f32.gmra.mrb[0].mxu0 %v2024
        %v2249 = vpop.f32.mrb[0].mxu0
        %v2250 = vadd.f32 %v1930, %v2249
        %v2251 = vpop.f32.mrb[0].mxu0
        %2252 = vmatprep.mubr.f32.mxu0 0.0
        %2253 = vmatmul.mubr.f32.gmra.mrb[0].mxu0 %v2027
        %v2254 = vpop.f32.mrb[0].mxu0
        %v2255 = vadd.f32 %v1930, %v2254
        %v2256 = vpop.f32.mrb[0].mxu0
        %2257 = vdwg.mxu0
        %v2258 = vmax.f32 %v2100, 0.0
        %v2259 = vmax.f32 %v2105, 0.0
        %v2260 = vmax.f32 %v2110, 0.0
        %v2261 = vmax.f32 %v2115, 0.0
        %v2262 = vmax.f32 %v2120, 0.0
        %v2263 = vmax.f32 %v2125, 0.0
        %v2264 = vmax.f32 %v2130, 0.0
        %v2265 = vmax.f32 %v2135, 0.0
        %v2266 = vmax.f32 %v2140, 0.0
        %v2267 = vmax.f32 %v2145, 0.0
        %v2268 = vmax.f32 %v2150, 0.0
        %v2269 = vmax.f32 %v2155, 0.0
        %v2270 = vmax.f32 %v2160, 0.0
        %v2271 = vmax.f32 %v2165, 0.0
        %v2272 = vmax.f32 %v2170, 0.0
        %v2273 = vmax.f32 %v2175, 0.0
        %v2274 = vmax.f32 %v2180, 0.0
        %v2275 = vmax.f32 %v2185, 0.0
        %v2276 = vmax.f32 %v2190, 0.0
        %v2277 = vmax.f32 %v2195, 0.0
        %v2278 = vmax.f32 %v2200, 0.0
        %v2279 = vmax.f32 %v2205, 0.0
        %v2280 = vmax.f32 %v2210, 0.0
        %v2281 = vmax.f32 %v2215, 0.0
        %v2282 = vmax.f32 %v2220, 0.0
        %v2283 = vmax.f32 %v2225, 0.0
        %v2284 = vmax.f32 %v2230, 0.0
        %v2285 = vmax.f32 %v2235, 0.0
        %v2286 = vmax.f32 %v2240, 0.0
        %v2287 = vmax.f32 %v2245, 0.0
        %v2288 = vmax.f32 %v2250, 0.0
        %v2289 = vmax.f32 %v2255, 0.0
        %2290 = vst.msk [vmem:[#allocation3] sm:$0xff] %vm1887, 0.0
        %2291 = vst.msk [vmem:[#allocation3 + $0x8] sm:$0xff] %vm1887, 0.0
        %vm2292 = vcmask 254976
        %2293 = vst.msk [vmem:[#allocation3 + $0x10] sm:$0x3] %vm2292, 0.0
        %2294 = vst.msk [vmem:[#allocation3 + $0x18] sm:$0xff] %vm1887, 0.0
        %2295 = vst.msk [vmem:[#allocation3 + $0x20] sm:$0xff] %vm1887, 0.0
        %2296 = vst.msk [vmem:[#allocation3 + $0x28] sm:$0x3] %vm2292, 0.0
        %2297 = vst.msk [vmem:[#allocation3 + $0x30] sm:$0xff] %vm1887, 0.0
        %2298 = vst.msk [vmem:[#allocation3 + $0x38] sm:$0xff] %vm1887, 0.0
        %2299 = vst.msk [vmem:[#allocation3 + $0x40] sm:$0x3] %vm2292, 0.0
        %2300 = vst.msk [vmem:[#allocation3 + $0x48] sm:$0xff] %vm1887, 0.0
        %2301 = vst.msk [vmem:[#allocation3 + $0x50] sm:$0xff] %vm1887, 0.0
        %2302 = vst.msk [vmem:[#allocation3 + $0x58] sm:$0x3] %vm2292, 0.0
        %2303 = vst.msk [vmem:[#allocation3 + $0x60] sm:$0xff] %vm1887, 0.0
        %2304 = vst.msk [vmem:[#allocation3 + $0x68] sm:$0xff] %vm1887, 0.0
        %2305 = vst.msk [vmem:[#allocation3 + $0x70] sm:$0x3] %vm2292, 0.0
        %2306 = vst.msk [vmem:[#allocation3 + $0x78] sm:$0xff] %vm1887, 0.0
        %2307 = vst.msk [vmem:[#allocation3 + $0x80] sm:$0xff] %vm1887, 0.0
        %2308 = vst.msk [vmem:[#allocation3 + $0x88] sm:$0x3] %vm2292, 0.0
        %2309 = vst.msk [vmem:[#allocation3 + $0x90] sm:$0xff] %vm1887, 0.0
        %2310 = vst.msk [vmem:[#allocation3 + $0x98] sm:$0xff] %vm1887, 0.0
        %2311 = vst.msk [vmem:[#allocation3 + $0xa0] sm:$0x3] %vm2292, 0.0
        %2312 = vst.msk [vmem:[#allocation3 + $0xa8] sm:$0xff] %vm1887, 0.0
        %2313 = vst.msk [vmem:[#allocation3 + $0xb0] sm:$0xff] %vm1887, 0.0
        %2314 = vst.msk [vmem:[#allocation3 + $0xb8] sm:$0x3] %vm2292, 0.0
        %2315 = vst.msk [vmem:[#allocation3 + $0xc0] sm:$0xff] %vm1887, 0.0
        %2316 = vst.msk [vmem:[#allocation3 + $0xc8] sm:$0xff] %vm1887, 0.0
        %2317 = vst.msk [vmem:[#allocation3 + $0xd0] sm:$0x3] %vm2292, 0.0
        %2318 = vst.msk [vmem:[#allocation3 + $0xd8] sm:$0xff] %vm1887, 0.0
        %2319 = vst.msk [vmem:[#allocation3 + $0xe0] sm:$0xff] %vm1887, 0.0
        %2320 = vst.msk [vmem:[#allocation3 + $0xe8] sm:$0x3] %vm2292, 0.0
        %2321 = vst.msk [vmem:[#allocation3 + $0xf0] sm:$0xff] %vm1887, 0.0
        %2322 = vst.msk [vmem:[#allocation3 + $0xf8] sm:$0xff] %vm1887, 0.0
        %2323 = vst.msk [vmem:[#allocation3 + $0x100] sm:$0x3] %vm2292, 0.0
        %2324 = vst.msk [vmem:[#allocation3 + $0x108] sm:$0xff] %vm1887, 0.0
        %2325 = vst.msk [vmem:[#allocation3 + $0x110] sm:$0xff] %vm1887, 0.0
        %2326 = vst.msk [vmem:[#allocation3 + $0x118] sm:$0x3] %vm2292, 0.0
        %2327 = vst.msk [vmem:[#allocation3 + $0x120] sm:$0xff] %vm1887, 0.0
        %2328 = vst.msk [vmem:[#allocation3 + $0x128] sm:$0xff] %vm1887, 0.0
        %2329 = vst.msk [vmem:[#allocation3 + $0x130] sm:$0x3] %vm2292, 0.0
        %2330 = vst.msk [vmem:[#allocation3 + $0x138] sm:$0xff] %vm1887, 0.0
        %2331 = vst.msk [vmem:[#allocation3 + $0x140] sm:$0xff] %vm1887, 0.0
        %2332 = vst.msk [vmem:[#allocation3 + $0x148] sm:$0x3] %vm2292, 0.0
        %2333 = vst.msk [vmem:[#allocation3 + $0x150] sm:$0xff] %vm1887, 0.0
        %2334 = vst.msk [vmem:[#allocation3 + $0x158] sm:$0xff] %vm1887, 0.0
        %2335 = vst.msk [vmem:[#allocation3 + $0x160] sm:$0x3] %vm2292, 0.0
        %2336 = vst.msk [vmem:[#allocation3 + $0x168] sm:$0xff] %vm1887, 0.0
        %2337 = vst.msk [vmem:[#allocation3 + $0x170] sm:$0xff] %vm1887, 0.0
        %2338 = vst.msk [vmem:[#allocation3 + $0x178] sm:$0x3] %vm2292, 0.0
        %2339 = vst.msk [vmem:[#allocation3 + $0x180] sm:$0xff] %vm1887, 0.0
        %2340 = vst.msk [vmem:[#allocation3 + $0x188] sm:$0xff] %vm1887, 0.0
        %2341 = vst.msk [vmem:[#allocation3 + $0x190] sm:$0x3] %vm2292, 0.0
        %2342 = vst.msk [vmem:[#allocation3 + $0x198] sm:$0xff] %vm1887, 0.0
        %2343 = vst.msk [vmem:[#allocation3 + $0x1a0] sm:$0xff] %vm1887, 0.0
        %2344 = vst.msk [vmem:[#allocation3 + $0x1a8] sm:$0x3] %vm2292, 0.0
        %s2345 = scalar_lea.vmem [#allocation3], 24
        %2346 = vst.msk [vmem:[%s2345 + $0x1] sm:$0xff] %vm1887, %v2258
        %2347 = vst.msk [vmem:[%s2345 + $0x9] sm:$0xff] %vm1887, %v2259
        %s2348 = scalar_lea.vmem [#allocation3], 48
        %2349 = vst.msk [vmem:[%s2348 + $0x1] sm:$0xff] %vm1887, %v2260
        %2350 = vst.msk [vmem:[%s2348 + $0x9] sm:$0xff] %vm1887, %v2261
        %s2351 = scalar_lea.vmem [#allocation3], 72
        %2352 = vst.msk [vmem:[%s2351 + $0x1] sm:$0xff] %vm1887, %v2262
        %2353 = vst.msk [vmem:[%s2351 + $0x9] sm:$0xff] %vm1887, %v2263
        %s2354 = scalar_lea.vmem [#allocation3], 96
        %2355 = vst.msk [vmem:[%s2354 + $0x1] sm:$0xff] %vm1887, %v2264
        %2356 = vst.msk [vmem:[%s2354 + $0x9] sm:$0xff] %vm1887, %v2265
        %s2357 = scalar_lea.vmem [#allocation3], 120
        %2358 = vst.msk [vmem:[%s2357 + $0x1] sm:$0xff] %vm1887, %v2266
        %2359 = vst.msk [vmem:[%s2357 + $0x9] sm:$0xff] %vm1887, %v2267
        %s2360 = scalar_lea.vmem [#allocation3], 144
        %2361 = vst.msk [vmem:[%s2360 + $0x1] sm:$0xff] %vm1887, %v2268
        %2362 = vst.msk [vmem:[%s2360 + $0x9] sm:$0xff] %vm1887, %v2269
        %s2363 = scalar_lea.vmem [#allocation3], 168
        %2364 = vst.msk [vmem:[%s2363 + $0x1] sm:$0xff] %vm1887, %v2270
        %2365 = vst.msk [vmem:[%s2363 + $0x9] sm:$0xff] %vm1887, %v2271
        %s2366 = scalar_lea.vmem [#allocation3], 192
        %2367 = vst.msk [vmem:[%s2366 + $0x1] sm:$0xff] %vm1887, %v2272
        %2368 = vst.msk [vmem:[%s2366 + $0x9] sm:$0xff] %vm1887, %v2273
        %s2369 = scalar_lea.vmem [#allocation3], 216
        %2370 = vst.msk [vmem:[%s2369 + $0x1] sm:$0xff] %vm1887, %v2274
        %2371 = vst.msk [vmem:[%s2369 + $0x9] sm:$0xff] %vm1887, %v2275
        %s2372 = scalar_lea.vmem [#allocation3], 240
        %2373 = vst.msk [vmem:[%s2372 + $0x1] sm:$0xff] %vm1887, %v2276
        %2374 = vst.msk [vmem:[%s2372 + $0x9] sm:$0xff] %vm1887, %v2277
        %s2375 = scalar_lea.vmem [#allocation3], 264
        %2376 = vst.msk [vmem:[%s2375 + $0x1] sm:$0xff] %vm1887, %v2278
        %2377 = vst.msk [vmem:[%s2375 + $0x9] sm:$0xff] %vm1887, %v2279
        %s2378 = scalar_lea.vmem [#allocation3], 288
        %2379 = vst.msk [vmem:[%s2378 + $0x1] sm:$0xff] %vm1887, %v2280
        %2380 = vst.msk [vmem:[%s2378 + $0x9] sm:$0xff] %vm1887, %v2281
        %s2381 = scalar_lea.vmem [#allocation3], 312
        %2382 = vst.msk [vmem:[%s2381 + $0x1] sm:$0xff] %vm1887, %v2282
        %2383 = vst.msk [vmem:[%s2381 + $0x9] sm:$0xff] %vm1887, %v2283
        %s2384 = scalar_lea.vmem [#allocation3], 336
        %2385 = vst.msk [vmem:[%s2384 + $0x1] sm:$0xff] %vm1887, %v2284
        %2386 = vst.msk [vmem:[%s2384 + $0x9] sm:$0xff] %vm1887, %v2285
        %s2387 = scalar_lea.vmem [#allocation3], 360
        %2388 = vst.msk [vmem:[%s2387 + $0x1] sm:$0xff] %vm1887, %v2286
        %2389 = vst.msk [vmem:[%s2387 + $0x9] sm:$0xff] %vm1887, %v2287
        %s2390 = scalar_lea.vmem [#allocation3], 384
        %2391 = vst.msk [vmem:[%s2390 + $0x1] sm:$0xff] %vm1887, %v2288
        %2392 = vst.msk [vmem:[%s2390 + $0x9] sm:$0xff] %vm1887, %v2289
        %v2393 = vld [vmem:[#allocation3] sm:$0xff]
        %v2394 = vld [vmem:[#allocation3 + $0x8] sm:$0xff]
        %v2395 = vld [vmem:[#allocation3 + $0x18] sm:$0xff]
        %v2396 = vld [vmem:[#allocation3 + $0x20] sm:$0xff]
        %v2397 = vld [vmem:[#allocation3 + $0x30] sm:$0xff]
        %v2398 = vld [vmem:[#allocation3 + $0x38] sm:$0xff]
        %v2399 = vld [vmem:[#allocation3 + $0x48] sm:$0xff]
        %v2400 = vld [vmem:[#allocation3 + $0x50] sm:$0xff]
        %v2401 = vld [vmem:[#allocation3 + $0x60] sm:$0xff]
        %v2402 = vld [vmem:[#allocation3 + $0x68] sm:$0xff]
        %v2403 = vld [vmem:[#allocation3 + $0x78] sm:$0xff]
        %v2404 = vld [vmem:[#allocation3 + $0x80] sm:$0xff]
        %v2405 = vld [vmem:[#allocation3 + $0x90] sm:$0xff]
        %v2406 = vld [vmem:[#allocation3 + $0x98] sm:$0xff]
        %v2407 = vld [vmem:[#allocation3 + $0xa8] sm:$0xff]
        %v2408 = vld [vmem:[#allocation3 + $0xb0] sm:$0xff]
        %v2409 = vld [vmem:[#allocation3 + $0xc0] sm:$0xff]
        %v2410 = vld [vmem:[#allocation3 + $0xc8] sm:$0xff]
        %v2411 = vld [vmem:[#allocation3 + $0xd8] sm:$0xff]
        %v2412 = vld [vmem:[#allocation3 + $0xe0] sm:$0xff]
        %v2413 = vld [vmem:[#allocation3 + $0xf0] sm:$0xff]
        %v2414 = vld [vmem:[#allocation3 + $0xf8] sm:$0xff]
        %v2415 = vld [vmem:[#allocation3 + $0x108] sm:$0xff]
        %v2416 = vld [vmem:[#allocation3 + $0x110] sm:$0xff]
        %v2417 = vld [vmem:[#allocation3 + $0x120] sm:$0xff]
        %v2418 = vld [vmem:[#allocation3 + $0x128] sm:$0xff]
        %v2419 = vld [vmem:[#allocation3 + $0x138] sm:$0xff]
        %v2420 = vld [vmem:[#allocation3 + $0x140] sm:$0xff]
        %v2421 = vld [vmem:[#allocation3 + $0x150] sm:$0xff]
        %v2422 = vld [vmem:[#allocation3 + $0x158] sm:$0xff]
        %v2423 = vld [vmem:[#allocation3 + $0x168] sm:$0xff]
        %v2424 = vld [vmem:[#allocation3 + $0x170] sm:$0xff]
        %v2425 = vld [vmem:[#allocation3 + $0x1] sm:$0xff]
        %v2426 = vld [vmem:[#allocation3 + $0x9] sm:$0xff]
        %v2427 = vld [vmem:[#allocation3 + $0x19] sm:$0xff]
        %v2428 = vld [vmem:[#allocation3 + $0x21] sm:$0xff]
        %v2429 = vld [vmem:[#allocation3 + $0x31] sm:$0xff]
        %v2430 = vld [vmem:[#allocation3 + $0x39] sm:$0xff]
        %v2431 = vld [vmem:[#allocation3 + $0x49] sm:$0xff]
        %v2432 = vld [vmem:[#allocation3 + $0x51] sm:$0xff]
        %v2433 = vld [vmem:[#allocation3 + $0x61] sm:$0xff]
        %v2434 = vld [vmem:[#allocation3 + $0x69] sm:$0xff]
        %v2435 = vld [vmem:[#allocation3 + $0x79] sm:$0xff]
        %v2436 = vld [vmem:[#allocation3 + $0x81] sm:$0xff]
        %v2437 = vld [vmem:[#allocation3 + $0x91] sm:$0xff]
        %v2438 = vld [vmem:[#allocation3 + $0x99] sm:$0xff]
        %v2439 = vld [vmem:[#allocation3 + $0xa9] sm:$0xff]
        %v2440 = vld [vmem:[#allocation3 + $0xb1] sm:$0xff]
        %v2441 = vld [vmem:[#allocation3 + $0xc1] sm:$0xff]
        %v2442 = vld [vmem:[#allocation3 + $0xc9] sm:$0xff]
        %v2443 = vld [vmem:[#allocation3 + $0xd9] sm:$0xff]
        %v2444 = vld [vmem:[#allocation3 + $0xe1] sm:$0xff]
        %v2445 = vld [vmem:[#allocation3 + $0xf1] sm:$0xff]
        %v2446 = vld [vmem:[#allocation3 + $0xf9] sm:$0xff]
        %v2447 = vld [vmem:[#allocation3 + $0x109] sm:$0xff]
        %v2448 = vld [vmem:[#allocation3 + $0x111] sm:$0xff]
        %v2449 = vld [vmem:[#allocation3 + $0x121] sm:$0xff]
        %v2450 = vld [vmem:[#allocation3 + $0x129] sm:$0xff]
        %v2451 = vld [vmem:[#allocation3 + $0x139] sm:$0xff]
        %v2452 = vld [vmem:[#allocation3 + $0x141] sm:$0xff]
        %v2453 = vld [vmem:[#allocation3 + $0x151] sm:$0xff]
        %v2454 = vld [vmem:[#allocation3 + $0x159] sm:$0xff]
        %v2455 = vld [vmem:[#allocation3 + $0x169] sm:$0xff]
        %v2456 = vld [vmem:[#allocation3 + $0x171] sm:$0xff]
        %v2457 = vld [vmem:[#allocation3 + $0x2] sm:$0xff]
        %v2458 = vld [vmem:[#allocation3 + $0xa] sm:$0xff]
        %v2459 = vld [vmem:[#allocation3 + $0x1a] sm:$0xff]
        %v2460 = vld [vmem:[#allocation3 + $0x22] sm:$0xff]
        %v2461 = vld [vmem:[#allocation3 + $0x32] sm:$0xff]
        %v2462 = vld [vmem:[#allocation3 + $0x3a] sm:$0xff]
        %v2463 = vld [vmem:[#allocation3 + $0x4a] sm:$0xff]
        %v2464 = vld [vmem:[#allocation3 + $0x52] sm:$0xff]
        %v2465 = vld [vmem:[#allocation3 + $0x62] sm:$0xff]
        %v2466 = vld [vmem:[#allocation3 + $0x6a] sm:$0xff]
        %v2467 = vld [vmem:[#allocation3 + $0x7a] sm:$0xff]
        %v2468 = vld [vmem:[#allocation3 + $0x82] sm:$0xff]
        %v2469 = vld [vmem:[#allocation3 + $0x92] sm:$0xff]
        %v2470 = vld [vmem:[#allocation3 + $0x9a] sm:$0xff]
        %v2471 = vld [vmem:[#allocation3 + $0xaa] sm:$0xff]
        %v2472 = vld [vmem:[#allocation3 + $0xb2] sm:$0xff]
        %v2473 = vld [vmem:[#allocation3 + $0xc2] sm:$0xff]
        %v2474 = vld [vmem:[#allocation3 + $0xca] sm:$0xff]
        %v2475 = vld [vmem:[#allocation3 + $0xda] sm:$0xff]
        %v2476 = vld [vmem:[#allocation3 + $0xe2] sm:$0xff]
        %v2477 = vld [vmem:[#allocation3 + $0xf2] sm:$0xff]
        %v2478 = vld [vmem:[#allocation3 + $0xfa] sm:$0xff]
        %v2479 = vld [vmem:[#allocation3 + $0x10a] sm:$0xff]
        %v2480 = vld [vmem:[#allocation3 + $0x112] sm:$0xff]
        %v2481 = vld [vmem:[#allocation3 + $0x122] sm:$0xff]
        %v2482 = vld [vmem:[#allocation3 + $0x12a] sm:$0xff]
        %v2483 = vld [vmem:[#allocation3 + $0x13a] sm:$0xff]
        %v2484 = vld [vmem:[#allocation3 + $0x142] sm:$0xff]
        %v2485 = vld [vmem:[#allocation3 + $0x152] sm:$0xff]
        %v2486 = vld [vmem:[#allocation3 + $0x15a] sm:$0xff]
        %v2487 = vld [vmem:[#allocation3 + $0x16a] sm:$0xff]
        %v2488 = vld [vmem:[#allocation3 + $0x172] sm:$0xff]
        %v2489 = vld [vmem:[%s2345] sm:$0xff]
        %v2490 = vld [vmem:[%s2345 + $0x8] sm:$0xff]
        %v2491 = vld [vmem:[%s2345 + $0x18] sm:$0xff]
        %v2492 = vld [vmem:[%s2345 + $0x20] sm:$0xff]
        %v2493 = vld [vmem:[%s2345 + $0x30] sm:$0xff]
        %v2494 = vld [vmem:[%s2345 + $0x38] sm:$0xff]
        %v2495 = vld [vmem:[%s2345 + $0x48] sm:$0xff]
        %v2496 = vld [vmem:[%s2345 + $0x50] sm:$0xff]
        %v2497 = vld [vmem:[%s2345 + $0x60] sm:$0xff]
        %v2498 = vld [vmem:[%s2345 + $0x68] sm:$0xff]
        %v2499 = vld [vmem:[%s2345 + $0x78] sm:$0xff]
        %v2500 = vld [vmem:[%s2345 + $0x80] sm:$0xff]
        %v2501 = vld [vmem:[%s2345 + $0x90] sm:$0xff]
        %v2502 = vld [vmem:[%s2345 + $0x98] sm:$0xff]
        %v2503 = vld [vmem:[%s2345 + $0xa8] sm:$0xff]
        %v2504 = vld [vmem:[%s2345 + $0xb0] sm:$0xff]
        %v2505 = vld [vmem:[%s2345 + $0xc0] sm:$0xff]
        %v2506 = vld [vmem:[%s2345 + $0xc8] sm:$0xff]
        %v2507 = vld [vmem:[%s2345 + $0xd8] sm:$0xff]
        %v2508 = vld [vmem:[%s2345 + $0xe0] sm:$0xff]
        %v2509 = vld [vmem:[%s2345 + $0xf0] sm:$0xff]
        %v2510 = vld [vmem:[%s2345 + $0xf8] sm:$0xff]
        %v2511 = vld [vmem:[%s2345 + $0x108] sm:$0xff]
        %v2512 = vld [vmem:[%s2345 + $0x110] sm:$0xff]
        %v2513 = vld [vmem:[%s2345 + $0x120] sm:$0xff]
        %v2514 = vld [vmem:[%s2345 + $0x128] sm:$0xff]
        %v2515 = vld [vmem:[%s2345 + $0x138] sm:$0xff]
        %v2516 = vld [vmem:[%s2345 + $0x140] sm:$0xff]
        %v2517 = vld [vmem:[%s2345 + $0x150] sm:$0xff]
        %v2518 = vld [vmem:[%s2345 + $0x158] sm:$0xff]
        %v2519 = vld [vmem:[%s2345 + $0x168] sm:$0xff]
        %v2520 = vld [vmem:[%s2345 + $0x170] sm:$0xff]
        %v2521 = vld [vmem:[%s2345 + $0x1] sm:$0xff]
        %v2522 = vld [vmem:[%s2345 + $0x9] sm:$0xff]
        %v2523 = vld [vmem:[%s2345 + $0x19] sm:$0xff]
        %v2524 = vld [vmem:[%s2345 + $0x21] sm:$0xff]
        %v2525 = vld [vmem:[%s2345 + $0x31] sm:$0xff]
        %v2526 = vld [vmem:[%s2345 + $0x39] sm:$0xff]
        %v2527 = vld [vmem:[%s2345 + $0x49] sm:$0xff]
        %v2528 = vld [vmem:[%s2345 + $0x51] sm:$0xff]
        %v2529 = vld [vmem:[%s2345 + $0x61] sm:$0xff]
        %v2530 = vld [vmem:[%s2345 + $0x69] sm:$0xff]
        %v2531 = vld [vmem:[%s2345 + $0x79] sm:$0xff]
        %v2532 = vld [vmem:[%s2345 + $0x81] sm:$0xff]
        %v2533 = vld [vmem:[%s2345 + $0x91] sm:$0xff]
        %v2534 = vld [vmem:[%s2345 + $0x99] sm:$0xff]
        %v2535 = vld [vmem:[%s2345 + $0xa9] sm:$0xff]
        %v2536 = vld [vmem:[%s2345 + $0xb1] sm:$0xff]
        %v2537 = vld [vmem:[%s2345 + $0xc1] sm:$0xff]
        %v2538 = vld [vmem:[%s2345 + $0xc9] sm:$0xff]
        %v2539 = vld [vmem:[%s2345 + $0xd9] sm:$0xff]
        %v2540 = vld [vmem:[%s2345 + $0xe1] sm:$0xff]
        %v2541 = vld [vmem:[%s2345 + $0xf1] sm:$0xff]
        %v2542 = vld [vmem:[%s2345 + $0xf9] sm:$0xff]
        %v2543 = vld [vmem:[%s2345 + $0x109] sm:$0xff]
        %v2544 = vld [vmem:[%s2345 + $0x111] sm:$0xff]
        %v2545 = vld [vmem:[%s2345 + $0x121] sm:$0xff]
        %v2546 = vld [vmem:[%s2345 + $0x129] sm:$0xff]
        %v2547 = vld [vmem:[%s2345 + $0x139] sm:$0xff]
        %v2548 = vld [vmem:[%s2345 + $0x141] sm:$0xff]
        %v2549 = vld [vmem:[%s2345 + $0x151] sm:$0xff]
        %v2550 = vld [vmem:[%s2345 + $0x159] sm:$0xff]
        %v2551 = vld [vmem:[%s2345 + $0x169] sm:$0xff]
        %v2552 = vld [vmem:[%s2345 + $0x171] sm:$0xff]
        %v2553 = vld [vmem:[%s2345 + $0x2] sm:$0xff]
        %v2554 = vld [vmem:[%s2345 + $0xa] sm:$0xff]
        %v2555 = vld [vmem:[%s2345 + $0x1a] sm:$0xff]
        %v2556 = vld [vmem:[%s2345 + $0x22] sm:$0xff]
        %v2557 = vld [vmem:[%s2345 + $0x32] sm:$0xff]
        %v2558 = vld [vmem:[%s2345 + $0x3a] sm:$0xff]
        %v2559 = vld [vmem:[%s2345 + $0x4a] sm:$0xff]
        %v2560 = vld [vmem:[%s2345 + $0x52] sm:$0xff]
        %v2561 = vld [vmem:[%s2345 + $0x62] sm:$0xff]
        %v2562 = vld [vmem:[%s2345 + $0x6a] sm:$0xff]
        %v2563 = vld [vmem:[%s2345 + $0x7a] sm:$0xff]
        %v2564 = vld [vmem:[%s2345 + $0x82] sm:$0xff]
        %v2565 = vld [vmem:[%s2345 + $0x92] sm:$0xff]
        %v2566 = vld [vmem:[%s2345 + $0x9a] sm:$0xff]
        %v2567 = vld [vmem:[%s2345 + $0xaa] sm:$0xff]
        %v2568 = vld [vmem:[%s2345 + $0xb2] sm:$0xff]
        %v2569 = vld [vmem:[%s2345 + $0xc2] sm:$0xff]
        %v2570 = vld [vmem:[%s2345 + $0xca] sm:$0xff]
        %v2571 = vld [vmem:[%s2345 + $0xda] sm:$0xff]
        %v2572 = vld [vmem:[%s2345 + $0xe2] sm:$0xff]
        %v2573 = vld [vmem:[%s2345 + $0xf2] sm:$0xff]
        %v2574 = vld [vmem:[%s2345 + $0xfa] sm:$0xff]
        %v2575 = vld [vmem:[%s2345 + $0x10a] sm:$0xff]
        %v2576 = vld [vmem:[%s2345 + $0x112] sm:$0xff]
        %v2577 = vld [vmem:[%s2345 + $0x122] sm:$0xff]
        %v2578 = vld [vmem:[%s2345 + $0x12a] sm:$0xff]
        %v2579 = vld [vmem:[%s2345 + $0x13a] sm:$0xff]
        %v2580 = vld [vmem:[%s2345 + $0x142] sm:$0xff]
        %v2581 = vld [vmem:[%s2345 + $0x152] sm:$0xff]
        %v2582 = vld [vmem:[%s2345 + $0x15a] sm:$0xff]
        %v2583 = vld [vmem:[%s2345 + $0x16a] sm:$0xff]
        %v2584 = vld [vmem:[%s2345 + $0x172] sm:$0xff]
        %v2585 = vld [vmem:[%s2348] sm:$0xff]
        %v2586 = vld [vmem:[%s2348 + $0x8] sm:$0xff]
        %v2587 = vld [vmem:[%s2348 + $0x18] sm:$0xff]
        %v2588 = vld [vmem:[%s2348 + $0x20] sm:$0xff]
        %v2589 = vld [vmem:[%s2348 + $0x30] sm:$0xff]
        %v2590 = vld [vmem:[%s2348 + $0x38] sm:$0xff]
        %v2591 = vld [vmem:[%s2348 + $0x48] sm:$0xff]
        %v2592 = vld [vmem:[%s2348 + $0x50] sm:$0xff]
        %v2593 = vld [vmem:[%s2348 + $0x60] sm:$0xff]
        %v2594 = vld [vmem:[%s2348 + $0x68] sm:$0xff]
        %v2595 = vld [vmem:[%s2348 + $0x78] sm:$0xff]
        %v2596 = vld [vmem:[%s2348 + $0x80] sm:$0xff]
        %v2597 = vld [vmem:[%s2348 + $0x90] sm:$0xff]
        %v2598 = vld [vmem:[%s2348 + $0x98] sm:$0xff]
        %v2599 = vld [vmem:[%s2348 + $0xa8] sm:$0xff]
        %v2600 = vld [vmem:[%s2348 + $0xb0] sm:$0xff]
        %v2601 = vld [vmem:[%s2348 + $0xc0] sm:$0xff]
        %v2602 = vld [vmem:[%s2348 + $0xc8] sm:$0xff]
        %v2603 = vld [vmem:[%s2348 + $0xd8] sm:$0xff]
        %v2604 = vld [vmem:[%s2348 + $0xe0] sm:$0xff]
        %v2605 = vld [vmem:[%s2348 + $0xf0] sm:$0xff]
        %v2606 = vld [vmem:[%s2348 + $0xf8] sm:$0xff]
        %v2607 = vld [vmem:[%s2348 + $0x108] sm:$0xff]
        %v2608 = vld [vmem:[%s2348 + $0x110] sm:$0xff]
        %v2609 = vld [vmem:[%s2348 + $0x120] sm:$0xff]
        %v2610 = vld [vmem:[%s2348 + $0x128] sm:$0xff]
        %v2611 = vld [vmem:[%s2348 + $0x138] sm:$0xff]
        %v2612 = vld [vmem:[%s2348 + $0x140] sm:$0xff]
        %v2613 = vld [vmem:[%s2348 + $0x150] sm:$0xff]
        %v2614 = vld [vmem:[%s2348 + $0x158] sm:$0xff]
        %v2615 = vld [vmem:[%s2348 + $0x168] sm:$0xff]
        %v2616 = vld [vmem:[%s2348 + $0x170] sm:$0xff]
        %v2617 = vld [vmem:[%s2348 + $0x1] sm:$0xff]
        %v2618 = vld [vmem:[%s2348 + $0x9] sm:$0xff]
        %v2619 = vld [vmem:[%s2348 + $0x19] sm:$0xff]
        %v2620 = vld [vmem:[%s2348 + $0x21] sm:$0xff]
        %v2621 = vld [vmem:[%s2348 + $0x31] sm:$0xff]
        %v2622 = vld [vmem:[%s2348 + $0x39] sm:$0xff]
        %v2623 = vld [vmem:[%s2348 + $0x49] sm:$0xff]
        %v2624 = vld [vmem:[%s2348 + $0x51] sm:$0xff]
        %v2625 = vld [vmem:[%s2348 + $0x61] sm:$0xff]
        %v2626 = vld [vmem:[%s2348 + $0x69] sm:$0xff]
        %v2627 = vld [vmem:[%s2348 + $0x79] sm:$0xff]
        %v2628 = vld [vmem:[%s2348 + $0x81] sm:$0xff]
        %v2629 = vld [vmem:[%s2348 + $0x91] sm:$0xff]
        %v2630 = vld [vmem:[%s2348 + $0x99] sm:$0xff]
        %v2631 = vld [vmem:[%s2348 + $0xa9] sm:$0xff]
        %v2632 = vld [vmem:[%s2348 + $0xb1] sm:$0xff]
        %v2633 = vld [vmem:[%s2348 + $0xc1] sm:$0xff]
        %v2634 = vld [vmem:[%s2348 + $0xc9] sm:$0xff]
        %v2635 = vld [vmem:[%s2348 + $0xd9] sm:$0xff]
        %v2636 = vld [vmem:[%s2348 + $0xe1] sm:$0xff]
        %v2637 = vld [vmem:[%s2348 + $0xf1] sm:$0xff]
        %v2638 = vld [vmem:[%s2348 + $0xf9] sm:$0xff]
        %v2639 = vld [vmem:[%s2348 + $0x109] sm:$0xff]
        %v2640 = vld [vmem:[%s2348 + $0x111] sm:$0xff]
        %v2641 = vld [vmem:[%s2348 + $0x121] sm:$0xff]
        %v2642 = vld [vmem:[%s2348 + $0x129] sm:$0xff]
        %v2643 = vld [vmem:[%s2348 + $0x139] sm:$0xff]
        %v2644 = vld [vmem:[%s2348 + $0x141] sm:$0xff]
        %v2645 = vld [vmem:[%s2348 + $0x151] sm:$0xff]
        %v2646 = vld [vmem:[%s2348 + $0x159] sm:$0xff]
        %v2647 = vld [vmem:[%s2348 + $0x169] sm:$0xff]
        %v2648 = vld [vmem:[%s2348 + $0x171] sm:$0xff]
        %v2649 = vld [vmem:[%s2348 + $0x2] sm:$0xff]
        %v2650 = vld [vmem:[%s2348 + $0xa] sm:$0xff]
        %v2651 = vld [vmem:[%s2348 + $0x1a] sm:$0xff]
        %v2652 = vld [vmem:[%s2348 + $0x22] sm:$0xff]
        %v2653 = vld [vmem:[%s2348 + $0x32] sm:$0xff]
        %v2654 = vld [vmem:[%s2348 + $0x3a] sm:$0xff]
        %v2655 = vld [vmem:[%s2348 + $0x4a] sm:$0xff]
        %v2656 = vld [vmem:[%s2348 + $0x52] sm:$0xff]
        %v2657 = vld [vmem:[%s2348 + $0x62] sm:$0xff]
        %v2658 = vld [vmem:[%s2348 + $0x6a] sm:$0xff]
        %v2659 = vld [vmem:[%s2348 + $0x7a] sm:$0xff]
        %v2660 = vld [vmem:[%s2348 + $0x82] sm:$0xff]
        %v2661 = vld [vmem:[%s2348 + $0x92] sm:$0xff]
        %v2662 = vld [vmem:[%s2348 + $0x9a] sm:$0xff]
        %v2663 = vld [vmem:[%s2348 + $0xaa] sm:$0xff]
        %v2664 = vld [vmem:[%s2348 + $0xb2] sm:$0xff]
        %v2665 = vld [vmem:[%s2348 + $0xc2] sm:$0xff]
        %v2666 = vld [vmem:[%s2348 + $0xca] sm:$0xff]
        %v2667 = vld [vmem:[%s2348 + $0xda] sm:$0xff]
        %v2668 = vld [vmem:[%s2348 + $0xe2] sm:$0xff]
        %v2669 = vld [vmem:[%s2348 + $0xf2] sm:$0xff]
        %v2670 = vld [vmem:[%s2348 + $0xfa] sm:$0xff]
        %v2671 = vld [vmem:[%s2348 + $0x10a] sm:$0xff]
        %v2672 = vld [vmem:[%s2348 + $0x112] sm:$0xff]
        %v2673 = vld [vmem:[%s2348 + $0x122] sm:$0xff]
        %v2674 = vld [vmem:[%s2348 + $0x12a] sm:$0xff]
        %v2675 = vld [vmem:[%s2348 + $0x13a] sm:$0xff]
        %v2676 = vld [vmem:[%s2348 + $0x142] sm:$0xff]
        %v2677 = vld [vmem:[%s2348 + $0x152] sm:$0xff]
        %v2678 = vld [vmem:[%s2348 + $0x15a] sm:$0xff]
        %v2679 = vld [vmem:[%s2348 + $0x16a] sm:$0xff]
        %v2680 = vld [vmem:[%s2348 + $0x172] sm:$0xff]
        %2713 = vrot.lane.b32.xlu0 %v2425, 32
        %v2714 = vpop.permute.xlu0 %2713
        %2715 = vrot.lane.b32.xlu0 %v2426, 32
        %v2716 = vpop.permute.xlu0 %2715
        %2717 = vrot.lane.b32.xlu0 %v2427, 32
        %v2718 = vpop.permute.xlu0 %2717
        %2719 = vrot.lane.b32.xlu0 %v2428, 32
        %v2720 = vpop.permute.xlu0 %2719
        %2721 = vrot.lane.b32.xlu0 %v2429, 32
        %v2722 = vpop.permute.xlu0 %2721
        %2723 = vrot.lane.b32.xlu0 %v2430, 32
        %v2724 = vpop.permute.xlu0 %2723
        %2725 = vrot.lane.b32.xlu0 %v2431, 32
        %v2726 = vpop.permute.xlu0 %2725
        %2727 = vrot.lane.b32.xlu0 %v2432, 32
        %v2728 = vpop.permute.xlu0 %2727
        %2729 = vrot.lane.b32.xlu0 %v2433, 32
        %v2730 = vpop.permute.xlu0 %2729
        %2731 = vrot.lane.b32.xlu0 %v2434, 32
        %v2732 = vpop.permute.xlu0 %2731
        %2733 = vrot.lane.b32.xlu0 %v2435, 32
        %v2734 = vpop.permute.xlu0 %2733
        %2735 = vrot.lane.b32.xlu0 %v2436, 32
        %v2736 = vpop.permute.xlu0 %2735
        %2737 = vrot.lane.b32.xlu0 %v2437, 32
        %v2738 = vpop.permute.xlu0 %2737
        %2739 = vrot.lane.b32.xlu0 %v2438, 32
        %v2740 = vpop.permute.xlu0 %2739
        %2741 = vrot.lane.b32.xlu0 %v2439, 32
        %v2742 = vpop.permute.xlu0 %2741
        %2743 = vrot.lane.b32.xlu0 %v2440, 32
        %v2744 = vpop.permute.xlu0 %2743
        %2745 = vrot.lane.b32.xlu0 %v2441, 32
        %v2746 = vpop.permute.xlu0 %2745
        %2747 = vrot.lane.b32.xlu0 %v2442, 32
        %v2748 = vpop.permute.xlu0 %2747
        %2749 = vrot.lane.b32.xlu0 %v2443, 32
        %v2750 = vpop.permute.xlu0 %2749
        %2751 = vrot.lane.b32.xlu0 %v2444, 32
        %v2752 = vpop.permute.xlu0 %2751
        %2753 = vrot.lane.b32.xlu0 %v2445, 32
        %v2754 = vpop.permute.xlu0 %2753
        %2755 = vrot.lane.b32.xlu0 %v2446, 32
        %v2756 = vpop.permute.xlu0 %2755
        %2757 = vrot.lane.b32.xlu0 %v2447, 32
        %v2758 = vpop.permute.xlu0 %2757
        %2759 = vrot.lane.b32.xlu0 %v2448, 32
        %v2760 = vpop.permute.xlu0 %2759
        %2761 = vrot.lane.b32.xlu0 %v2449, 32
        %v2762 = vpop.permute.xlu0 %2761
        %2763 = vrot.lane.b32.xlu0 %v2450, 32
        %v2764 = vpop.permute.xlu0 %2763
        %2765 = vrot.lane.b32.xlu0 %v2451, 32
        %v2766 = vpop.permute.xlu0 %2765
        %2767 = vrot.lane.b32.xlu0 %v2452, 32
        %v2768 = vpop.permute.xlu0 %2767
        %2769 = vrot.lane.b32.xlu0 %v2453, 32
        %v2770 = vpop.permute.xlu0 %2769
        %2771 = vrot.lane.b32.xlu0 %v2454, 32
        %v2772 = vpop.permute.xlu0 %2771
        %2773 = vrot.lane.b32.xlu0 %v2455, 32
        %v2774 = vpop.permute.xlu0 %2773
        %2775 = vrot.lane.b32.xlu0 %v2456, 32
        %v2776 = vpop.permute.xlu0 %2775
        %2841 = vrot.lane.b32.xlu0 %v2457, 64
        %v2842 = vpop.permute.xlu0 %2841
        %2843 = vrot.lane.b32.xlu0 %v2458, 64
        %v2844 = vpop.permute.xlu0 %2843
        %2845 = vrot.lane.b32.xlu0 %v2459, 64
        %v2846 = vpop.permute.xlu0 %2845
        %2847 = vrot.lane.b32.xlu0 %v2460, 64
        %v2848 = vpop.permute.xlu0 %2847
        %2849 = vrot.lane.b32.xlu0 %v2461, 64
        %v2850 = vpop.permute.xlu0 %2849
        %2851 = vrot.lane.b32.xlu0 %v2462, 64
        %v2852 = vpop.permute.xlu0 %2851
        %2853 = vrot.lane.b32.xlu0 %v2463, 64
        %v2854 = vpop.permute.xlu0 %2853
        %2855 = vrot.lane.b32.xlu0 %v2464, 64
        %v2856 = vpop.permute.xlu0 %2855
        %2857 = vrot.lane.b32.xlu0 %v2465, 64
        %v2858 = vpop.permute.xlu0 %2857
        %2859 = vrot.lane.b32.xlu0 %v2466, 64
        %v2860 = vpop.permute.xlu0 %2859
        %2861 = vrot.lane.b32.xlu0 %v2467, 64
        %v2862 = vpop.permute.xlu0 %2861
        %2863 = vrot.lane.b32.xlu0 %v2468, 64
        %v2864 = vpop.permute.xlu0 %2863
        %2865 = vrot.lane.b32.xlu0 %v2469, 64
        %v2866 = vpop.permute.xlu0 %2865
        %2867 = vrot.lane.b32.xlu0 %v2470, 64
        %v2868 = vpop.permute.xlu0 %2867
        %2869 = vrot.lane.b32.xlu0 %v2471, 64
        %v2870 = vpop.permute.xlu0 %2869
        %2871 = vrot.lane.b32.xlu0 %v2472, 64
        %v2872 = vpop.permute.xlu0 %2871
        %2873 = vrot.lane.b32.xlu0 %v2473, 64
        %v2874 = vpop.permute.xlu0 %2873
        %2875 = vrot.lane.b32.xlu0 %v2474, 64
        %v2876 = vpop.permute.xlu0 %2875
        %2877 = vrot.lane.b32.xlu0 %v2475, 64
        %v2878 = vpop.permute.xlu0 %2877
        %2879 = vrot.lane.b32.xlu0 %v2476, 64
        %v2880 = vpop.permute.xlu0 %2879
        %2881 = vrot.lane.b32.xlu0 %v2477, 64
        %v2882 = vpop.permute.xlu0 %2881
        %2883 = vrot.lane.b32.xlu0 %v2478, 64
        %v2884 = vpop.permute.xlu0 %2883
        %2885 = vrot.lane.b32.xlu0 %v2479, 64
        %v2886 = vpop.permute.xlu0 %2885
        %2887 = vrot.lane.b32.xlu0 %v2480, 64
        %v2888 = vpop.permute.xlu0 %2887
        %2889 = vrot.lane.b32.xlu0 %v2481, 64
        %v2890 = vpop.permute.xlu0 %2889
        %2891 = vrot.lane.b32.xlu0 %v2482, 64
        %v2892 = vpop.permute.xlu0 %2891
        %2893 = vrot.lane.b32.xlu0 %v2483, 64
        %v2894 = vpop.permute.xlu0 %2893
        %2895 = vrot.lane.b32.xlu0 %v2484, 64
        %v2896 = vpop.permute.xlu0 %2895
        %2897 = vrot.lane.b32.xlu0 %v2485, 64
        %v2898 = vpop.permute.xlu0 %2897
        %2899 = vrot.lane.b32.xlu0 %v2486, 64
        %v2900 = vpop.permute.xlu0 %2899
        %2901 = vrot.lane.b32.xlu0 %v2487, 64
        %v2902 = vpop.permute.xlu0 %2901
        %2903 = vrot.lane.b32.xlu0 %v2488, 64
        %v2904 = vpop.permute.xlu0 %2903
        %2969 = vrot.lane.b32.xlu0 %v2489, 96
        %v2970 = vpop.permute.xlu0 %2969
        %2971 = vrot.lane.b32.xlu0 %v2490, 96
        %v2972 = vpop.permute.xlu0 %2971
        %2973 = vrot.lane.b32.xlu0 %v2491, 96
        %v2974 = vpop.permute.xlu0 %2973
        %2975 = vrot.lane.b32.xlu0 %v2492, 96
        %v2976 = vpop.permute.xlu0 %2975
        %2977 = vrot.lane.b32.xlu0 %v2493, 96
        %v2978 = vpop.permute.xlu0 %2977
        %2979 = vrot.lane.b32.xlu0 %v2494, 96
        %v2980 = vpop.permute.xlu0 %2979
        %2981 = vrot.lane.b32.xlu0 %v2495, 96
        %v2982 = vpop.permute.xlu0 %2981
        %2983 = vrot.lane.b32.xlu0 %v2496, 96
        %v2984 = vpop.permute.xlu0 %2983
        %2985 = vrot.lane.b32.xlu0 %v2497, 96
        %v2986 = vpop.permute.xlu0 %2985
        %2987 = vrot.lane.b32.xlu0 %v2498, 96
        %v2988 = vpop.permute.xlu0 %2987
        %2989 = vrot.lane.b32.xlu0 %v2499, 96
        %v2990 = vpop.permute.xlu0 %2989
        %2991 = vrot.lane.b32.xlu0 %v2500, 96
        %v2992 = vpop.permute.xlu0 %2991
        %2993 = vrot.lane.b32.xlu0 %v2501, 96
        %v2994 = vpop.permute.xlu0 %2993
        %2995 = vrot.lane.b32.xlu0 %v2502, 96
        %v2996 = vpop.permute.xlu0 %2995
        %2997 = vrot.lane.b32.xlu0 %v2503, 96
        %v2998 = vpop.permute.xlu0 %2997
        %2999 = vrot.lane.b32.xlu0 %v2504, 96
        %v3000 = vpop.permute.xlu0 %2999
        %3001 = vrot.lane.b32.xlu0 %v2505, 96
        %v3002 = vpop.permute.xlu0 %3001
        %3003 = vrot.lane.b32.xlu0 %v2506, 96
        %v3004 = vpop.permute.xlu0 %3003
        %3005 = vrot.lane.b32.xlu0 %v2507, 96
        %v3006 = vpop.permute.xlu0 %3005
        %3007 = vrot.lane.b32.xlu0 %v2508, 96
        %v3008 = vpop.permute.xlu0 %3007
        %3009 = vrot.lane.b32.xlu0 %v2509, 96
        %v3010 = vpop.permute.xlu0 %3009
        %3011 = vrot.lane.b32.xlu0 %v2510, 96
        %v3012 = vpop.permute.xlu0 %3011
        %3013 = vrot.lane.b32.xlu0 %v2511, 96
        %v3014 = vpop.permute.xlu0 %3013
        %3015 = vrot.lane.b32.xlu0 %v2512, 96
        %v3016 = vpop.permute.xlu0 %3015
        %3017 = vrot.lane.b32.xlu0 %v2513, 96
        %v3018 = vpop.permute.xlu0 %3017
        %3019 = vrot.lane.b32.xlu0 %v2514, 96
        %v3020 = vpop.permute.xlu0 %3019
        %3021 = vrot.lane.b32.xlu0 %v2515, 96
        %v3022 = vpop.permute.xlu0 %3021
        %3023 = vrot.lane.b32.xlu0 %v2516, 96
        %v3024 = vpop.permute.xlu0 %3023
        %3025 = vrot.lane.b32.xlu0 %v2517, 96
        %v3026 = vpop.permute.xlu0 %3025
        %3027 = vrot.lane.b32.xlu0 %v2518, 96
        %v3028 = vpop.permute.xlu0 %3027
        %3029 = vrot.lane.b32.xlu0 %v2519, 96
        %v3030 = vpop.permute.xlu0 %3029
        %3031 = vrot.lane.b32.xlu0 %v2520, 96
        %v3032 = vpop.permute.xlu0 %3031
        %3097 = vrot.lane.b32.xlu0 %v2553, 32
        %v3098 = vpop.permute.xlu0 %3097
        %3099 = vrot.lane.b32.xlu0 %v2554, 32
        %v3100 = vpop.permute.xlu0 %3099
        %3101 = vrot.lane.b32.xlu0 %v2555, 32
        %v3102 = vpop.permute.xlu0 %3101
        %3103 = vrot.lane.b32.xlu0 %v2556, 32
        %v3104 = vpop.permute.xlu0 %3103
        %3105 = vrot.lane.b32.xlu0 %v2557, 32
        %v3106 = vpop.permute.xlu0 %3105
        %3107 = vrot.lane.b32.xlu0 %v2558, 32
        %v3108 = vpop.permute.xlu0 %3107
        %3109 = vrot.lane.b32.xlu0 %v2559, 32
        %v3110 = vpop.permute.xlu0 %3109
        %3111 = vrot.lane.b32.xlu0 %v2560, 32
        %v3112 = vpop.permute.xlu0 %3111
        %3113 = vrot.lane.b32.xlu0 %v2561, 32
        %v3114 = vpop.permute.xlu0 %3113
        %3115 = vrot.lane.b32.xlu0 %v2562, 32
        %v3116 = vpop.permute.xlu0 %3115
        %3117 = vrot.lane.b32.xlu0 %v2563, 32
        %v3118 = vpop.permute.xlu0 %3117
        %3119 = vrot.lane.b32.xlu0 %v2564, 32
        %v3120 = vpop.permute.xlu0 %3119
        %3121 = vrot.lane.b32.xlu0 %v2565, 32
        %v3122 = vpop.permute.xlu0 %3121
        %3123 = vrot.lane.b32.xlu0 %v2566, 32
        %v3124 = vpop.permute.xlu0 %3123
        %3125 = vrot.lane.b32.xlu0 %v2567, 32
        %v3126 = vpop.permute.xlu0 %3125
        %3127 = vrot.lane.b32.xlu0 %v2568, 32
        %v3128 = vpop.permute.xlu0 %3127
        %3129 = vrot.lane.b32.xlu0 %v2569, 32
        %v3130 = vpop.permute.xlu0 %3129
        %3131 = vrot.lane.b32.xlu0 %v2570, 32
        %v3132 = vpop.permute.xlu0 %3131
        %3133 = vrot.lane.b32.xlu0 %v2571, 32
        %v3134 = vpop.permute.xlu0 %3133
        %3135 = vrot.lane.b32.xlu0 %v2572, 32
        %v3136 = vpop.permute.xlu0 %3135
        %3137 = vrot.lane.b32.xlu0 %v2573, 32
        %v3138 = vpop.permute.xlu0 %3137
        %3139 = vrot.lane.b32.xlu0 %v2574, 32
        %v3140 = vpop.permute.xlu0 %3139
        %3141 = vrot.lane.b32.xlu0 %v2575, 32
        %v3142 = vpop.permute.xlu0 %3141
        %3143 = vrot.lane.b32.xlu0 %v2576, 32
        %v3144 = vpop.permute.xlu0 %3143
        %3145 = vrot.lane.b32.xlu0 %v2577, 32
        %v3146 = vpop.permute.xlu0 %3145
        %3147 = vrot.lane.b32.xlu0 %v2578, 32
        %v3148 = vpop.permute.xlu0 %3147
        %3149 = vrot.lane.b32.xlu0 %v2579, 32
        %v3150 = vpop.permute.xlu0 %3149
        %3151 = vrot.lane.b32.xlu0 %v2580, 32
        %v3152 = vpop.permute.xlu0 %3151
        %3153 = vrot.lane.b32.xlu0 %v2581, 32
        %v3154 = vpop.permute.xlu0 %3153
        %3155 = vrot.lane.b32.xlu0 %v2582, 32
        %v3156 = vpop.permute.xlu0 %3155
        %3157 = vrot.lane.b32.xlu0 %v2583, 32
        %v3158 = vpop.permute.xlu0 %3157
        %3159 = vrot.lane.b32.xlu0 %v2584, 32
        %v3160 = vpop.permute.xlu0 %3159
        %3225 = vrot.lane.b32.xlu0 %v2585, 64
        %v3226 = vpop.permute.xlu0 %3225
        %3227 = vrot.lane.b32.xlu0 %v2586, 64
        %v3228 = vpop.permute.xlu0 %3227
        %3229 = vrot.lane.b32.xlu0 %v2587, 64
        %v3230 = vpop.permute.xlu0 %3229
        %3231 = vrot.lane.b32.xlu0 %v2588, 64
        %v3232 = vpop.permute.xlu0 %3231
        %3233 = vrot.lane.b32.xlu0 %v2589, 64
        %v3234 = vpop.permute.xlu0 %3233
        %3235 = vrot.lane.b32.xlu0 %v2590, 64
        %v3236 = vpop.permute.xlu0 %3235
        %3237 = vrot.lane.b32.xlu0 %v2591, 64
        %v3238 = vpop.permute.xlu0 %3237
        %3239 = vrot.lane.b32.xlu0 %v2592, 64
        %v3240 = vpop.permute.xlu0 %3239
        %3241 = vrot.lane.b32.xlu0 %v2593, 64
        %v3242 = vpop.permute.xlu0 %3241
        %3243 = vrot.lane.b32.xlu0 %v2594, 64
        %v3244 = vpop.permute.xlu0 %3243
        %3245 = vrot.lane.b32.xlu0 %v2595, 64
        %v3246 = vpop.permute.xlu0 %3245
        %3247 = vrot.lane.b32.xlu0 %v2596, 64
        %v3248 = vpop.permute.xlu0 %3247
        %3249 = vrot.lane.b32.xlu0 %v2597, 64
        %v3250 = vpop.permute.xlu0 %3249
        %3251 = vrot.lane.b32.xlu0 %v2598, 64
        %v3252 = vpop.permute.xlu0 %3251
        %3253 = vrot.lane.b32.xlu0 %v2599, 64
        %v3254 = vpop.permute.xlu0 %3253
        %3255 = vrot.lane.b32.xlu0 %v2600, 64
        %v3256 = vpop.permute.xlu0 %3255
        %3257 = vrot.lane.b32.xlu0 %v2601, 64
        %v3258 = vpop.permute.xlu0 %3257
        %3259 = vrot.lane.b32.xlu0 %v2602, 64
        %v3260 = vpop.permute.xlu0 %3259
        %3261 = vrot.lane.b32.xlu0 %v2603, 64
        %v3262 = vpop.permute.xlu0 %3261
        %3263 = vrot.lane.b32.xlu0 %v2604, 64
        %v3264 = vpop.permute.xlu0 %3263
        %3265 = vrot.lane.b32.xlu0 %v2605, 64
        %v3266 = vpop.permute.xlu0 %3265
        %3267 = vrot.lane.b32.xlu0 %v2606, 64
        %v3268 = vpop.permute.xlu0 %3267
        %3269 = vrot.lane.b32.xlu0 %v2607, 64
        %v3270 = vpop.permute.xlu0 %3269
        %3271 = vrot.lane.b32.xlu0 %v2608, 64
        %v3272 = vpop.permute.xlu0 %3271
        %3273 = vrot.lane.b32.xlu0 %v2609, 64
        %v3274 = vpop.permute.xlu0 %3273
        %3275 = vrot.lane.b32.xlu0 %v2610, 64
        %v3276 = vpop.permute.xlu0 %3275
        %3277 = vrot.lane.b32.xlu0 %v2611, 64
        %v3278 = vpop.permute.xlu0 %3277
        %3279 = vrot.lane.b32.xlu0 %v2612, 64
        %v3280 = vpop.permute.xlu0 %3279
        %3281 = vrot.lane.b32.xlu0 %v2613, 64
        %v3282 = vpop.permute.xlu0 %3281
        %3283 = vrot.lane.b32.xlu0 %v2614, 64
        %v3284 = vpop.permute.xlu0 %3283
        %3285 = vrot.lane.b32.xlu0 %v2615, 64
        %v3286 = vpop.permute.xlu0 %3285
        %3287 = vrot.lane.b32.xlu0 %v2616, 64
        %v3288 = vpop.permute.xlu0 %3287
        %3353 = vrot.lane.b32.xlu0 %v2617, 96
        %v3354 = vpop.permute.xlu0 %3353
        %3355 = vrot.lane.b32.xlu0 %v2618, 96
        %v3356 = vpop.permute.xlu0 %3355
        %3357 = vrot.lane.b32.xlu0 %v2619, 96
        %v3358 = vpop.permute.xlu0 %3357
        %3359 = vrot.lane.b32.xlu0 %v2620, 96
        %v3360 = vpop.permute.xlu0 %3359
        %3361 = vrot.lane.b32.xlu0 %v2621, 96
        %v3362 = vpop.permute.xlu0 %3361
        %3363 = vrot.lane.b32.xlu0 %v2622, 96
        %v3364 = vpop.permute.xlu0 %3363
        %3365 = vrot.lane.b32.xlu0 %v2623, 96
        %v3366 = vpop.permute.xlu0 %3365
        %3367 = vrot.lane.b32.xlu0 %v2624, 96
        %v3368 = vpop.permute.xlu0 %3367
        %3369 = vrot.lane.b32.xlu0 %v2625, 96
        %v3370 = vpop.permute.xlu0 %3369
        %3371 = vrot.lane.b32.xlu0 %v2626, 96
        %v3372 = vpop.permute.xlu0 %3371
        %3373 = vrot.lane.b32.xlu0 %v2627, 96
        %v3374 = vpop.permute.xlu0 %3373
        %3375 = vrot.lane.b32.xlu0 %v2628, 96
        %v3376 = vpop.permute.xlu0 %3375
        %3377 = vrot.lane.b32.xlu0 %v2629, 96
        %v3378 = vpop.permute.xlu0 %3377
        %3379 = vrot.lane.b32.xlu0 %v2630, 96
        %v3380 = vpop.permute.xlu0 %3379
        %3381 = vrot.lane.b32.xlu0 %v2631, 96
        %v3382 = vpop.permute.xlu0 %3381
        %3383 = vrot.lane.b32.xlu0 %v2632, 96
        %v3384 = vpop.permute.xlu0 %3383
        %3385 = vrot.lane.b32.xlu0 %v2633, 96
        %v3386 = vpop.permute.xlu0 %3385
        %3387 = vrot.lane.b32.xlu0 %v2634, 96
        %v3388 = vpop.permute.xlu0 %3387
        %3389 = vrot.lane.b32.xlu0 %v2635, 96
        %v3390 = vpop.permute.xlu0 %3389
        %3391 = vrot.lane.b32.xlu0 %v2636, 96
        %v3392 = vpop.permute.xlu0 %3391
        %3393 = vrot.lane.b32.xlu0 %v2637, 96
        %v3394 = vpop.permute.xlu0 %3393
        %3395 = vrot.lane.b32.xlu0 %v2638, 96
        %v3396 = vpop.permute.xlu0 %3395
        %3397 = vrot.lane.b32.xlu0 %v2639, 96
        %v3398 = vpop.permute.xlu0 %3397
        %3399 = vrot.lane.b32.xlu0 %v2640, 96
        %v3400 = vpop.permute.xlu0 %3399
        %3401 = vrot.lane.b32.xlu0 %v2641, 96
        %v3402 = vpop.permute.xlu0 %3401
        %3403 = vrot.lane.b32.xlu0 %v2642, 96
        %v3404 = vpop.permute.xlu0 %3403
        %3405 = vrot.lane.b32.xlu0 %v2643, 96
        %v3406 = vpop.permute.xlu0 %3405
        %3407 = vrot.lane.b32.xlu0 %v2644, 96
        %v3408 = vpop.permute.xlu0 %3407
        %3409 = vrot.lane.b32.xlu0 %v2645, 96
        %v3410 = vpop.permute.xlu0 %3409
        %3411 = vrot.lane.b32.xlu0 %v2646, 96
        %v3412 = vpop.permute.xlu0 %3411
        %3413 = vrot.lane.b32.xlu0 %v2647, 96
        %v3414 = vpop.permute.xlu0 %3413
        %3415 = vrot.lane.b32.xlu0 %v2648, 96
        %v3416 = vpop.permute.xlu0 %3415
        %v3449 = vsel %vm1887, %v2393, %v2714
        %v3450 = vsel %vm1887, %v2394, %v2716
        %v3451 = vsel %vm1887, %v2395, %v2718
        %v3452 = vsel %vm1887, %v2396, %v2720
        %v3453 = vsel %vm1887, %v2397, %v2722
        %v3454 = vsel %vm1887, %v2398, %v2724
        %v3455 = vsel %vm1887, %v2399, %v2726
        %v3456 = vsel %vm1887, %v2400, %v2728
        %v3457 = vsel %vm1887, %v2401, %v2730
        %v3458 = vsel %vm1887, %v2402, %v2732
        %v3459 = vsel %vm1887, %v2403, %v2734
        %v3460 = vsel %vm1887, %v2404, %v2736
        %v3461 = vsel %vm1887, %v2405, %v2738
        %v3462 = vsel %vm1887, %v2406, %v2740
        %v3463 = vsel %vm1887, %v2407, %v2742
        %v3464 = vsel %vm1887, %v2408, %v2744
        %v3465 = vsel %vm1887, %v2409, %v2746
        %v3466 = vsel %vm1887, %v2410, %v2748
        %v3467 = vsel %vm1887, %v2411, %v2750
        %v3468 = vsel %vm1887, %v2412, %v2752
        %v3469 = vsel %vm1887, %v2413, %v2754
        %v3470 = vsel %vm1887, %v2414, %v2756
        %v3471 = vsel %vm1887, %v2415, %v2758
        %v3472 = vsel %vm1887, %v2416, %v2760
        %v3473 = vsel %vm1887, %v2417, %v2762
        %v3474 = vsel %vm1887, %v2418, %v2764
        %v3475 = vsel %vm1887, %v2419, %v2766
        %v3476 = vsel %vm1887, %v2420, %v2768
        %v3477 = vsel %vm1887, %v2421, %v2770
        %v3478 = vsel %vm1887, %v2422, %v2772
        %v3479 = vsel %vm1887, %v2423, %v2774
        %v3480 = vsel %vm1887, %v2424, %v2776
        %vm3481 = vcmask 523264
        %v3482 = vsel %vm3481, %v3449, %v2842
        %v3483 = vsel %vm3481, %v3450, %v2844
        %v3484 = vsel %vm3481, %v3451, %v2846
        %v3485 = vsel %vm3481, %v3452, %v2848
        %v3486 = vsel %vm3481, %v3453, %v2850
        %v3487 = vsel %vm3481, %v3454, %v2852
        %v3488 = vsel %vm3481, %v3455, %v2854
        %v3489 = vsel %vm3481, %v3456, %v2856
        %v3490 = vsel %vm3481, %v3457, %v2858
        %v3491 = vsel %vm3481, %v3458, %v2860
        %v3492 = vsel %vm3481, %v3459, %v2862
        %v3493 = vsel %vm3481, %v3460, %v2864
        %v3494 = vsel %vm3481, %v3461, %v2866
        %v3495 = vsel %vm3481, %v3462, %v2868
        %v3496 = vsel %vm3481, %v3463, %v2870
        %v3497 = vsel %vm3481, %v3464, %v2872
        %v3498 = vsel %vm3481, %v3465, %v2874
        %v3499 = vsel %vm3481, %v3466, %v2876
        %v3500 = vsel %vm3481, %v3467, %v2878
        %v3501 = vsel %vm3481, %v3468, %v2880
        %v3502 = vsel %vm3481, %v3469, %v2882
        %v3503 = vsel %vm3481, %v3470, %v2884
        %v3504 = vsel %vm3481, %v3471, %v2886
        %v3505 = vsel %vm3481, %v3472, %v2888
        %v3506 = vsel %vm3481, %v3473, %v2890
        %v3507 = vsel %vm3481, %v3474, %v2892
        %v3508 = vsel %vm3481, %v3475, %v2894
        %v3509 = vsel %vm3481, %v3476, %v2896
        %v3510 = vsel %vm3481, %v3477, %v2898
        %v3511 = vsel %vm3481, %v3478, %v2900
        %v3512 = vsel %vm3481, %v3479, %v2902
        %v3513 = vsel %vm3481, %v3480, %v2904
        %vm3514 = vcmask 785408
        %v3515 = vsel %vm3514, %v3482, %v2970
        %v3516 = vsel %vm3514, %v3483, %v2972
        %v3517 = vsel %vm3514, %v3484, %v2974
        %v3518 = vsel %vm3514, %v3485, %v2976
        %v3519 = vsel %vm3514, %v3486, %v2978
        %v3520 = vsel %vm3514, %v3487, %v2980
        %v3521 = vsel %vm3514, %v3488, %v2982
        %v3522 = vsel %vm3514, %v3489, %v2984
        %v3523 = vsel %vm3514, %v3490, %v2986
        %v3524 = vsel %vm3514, %v3491, %v2988
        %v3525 = vsel %vm3514, %v3492, %v2990
        %v3526 = vsel %vm3514, %v3493, %v2992
        %v3527 = vsel %vm3514, %v3494, %v2994
        %v3528 = vsel %vm3514, %v3495, %v2996
        %v3529 = vsel %vm3514, %v3496, %v2998
        %v3530 = vsel %vm3514, %v3497, %v3000
        %v3531 = vsel %vm3514, %v3498, %v3002
        %v3532 = vsel %vm3514, %v3499, %v3004
        %v3533 = vsel %vm3514, %v3500, %v3006
        %v3534 = vsel %vm3514, %v3501, %v3008
        %v3535 = vsel %vm3514, %v3502, %v3010
        %v3536 = vsel %vm3514, %v3503, %v3012
        %v3537 = vsel %vm3514, %v3504, %v3014
        %v3538 = vsel %vm3514, %v3505, %v3016
        %v3539 = vsel %vm3514, %v3506, %v3018
        %v3540 = vsel %vm3514, %v3507, %v3020
        %v3541 = vsel %vm3514, %v3508, %v3022
        %v3542 = vsel %vm3514, %v3509, %v3024
        %v3543 = vsel %vm3514, %v3510, %v3026
        %v3544 = vsel %vm3514, %v3511, %v3028
        %v3545 = vsel %vm3514, %v3512, %v3030
        %v3546 = vsel %vm3514, %v3513, %v3032
        %v3547 = vsel %vm1887, %v2521, %v3098
        %v3548 = vsel %vm1887, %v2522, %v3100
        %v3549 = vsel %vm1887, %v2523, %v3102
        %v3550 = vsel %vm1887, %v2524, %v3104
        %v3551 = vsel %vm1887, %v2525, %v3106
        %v3552 = vsel %vm1887, %v2526, %v3108
        %v3553 = vsel %vm1887, %v2527, %v3110
        %v3554 = vsel %vm1887, %v2528, %v3112
        %v3555 = vsel %vm1887, %v2529, %v3114
        %v3556 = vsel %vm1887, %v2530, %v3116
        %v3557 = vsel %vm1887, %v2531, %v3118
        %v3558 = vsel %vm1887, %v2532, %v3120
        %v3559 = vsel %vm1887, %v2533, %v3122
        %v3560 = vsel %vm1887, %v2534, %v3124
        %v3561 = vsel %vm1887, %v2535, %v3126
        %v3562 = vsel %vm1887, %v2536, %v3128
        %v3563 = vsel %vm1887, %v2537, %v3130
        %v3564 = vsel %vm1887, %v2538, %v3132
        %v3565 = vsel %vm1887, %v2539, %v3134
        %v3566 = vsel %vm1887, %v2540, %v3136
        %v3567 = vsel %vm1887, %v2541, %v3138
        %v3568 = vsel %vm1887, %v2542, %v3140
        %v3569 = vsel %vm1887, %v2543, %v3142
        %v3570 = vsel %vm1887, %v2544, %v3144
        %v3571 = vsel %vm1887, %v2545, %v3146
        %v3572 = vsel %vm1887, %v2546, %v3148
        %v3573 = vsel %vm1887, %v2547, %v3150
        %v3574 = vsel %vm1887, %v2548, %v3152
        %v3575 = vsel %vm1887, %v2549, %v3154
        %v3576 = vsel %vm1887, %v2550, %v3156
        %v3577 = vsel %vm1887, %v2551, %v3158
        %v3578 = vsel %vm1887, %v2552, %v3160
        %v3579 = vsel %vm3481, %v3547, %v3226
        %v3580 = vsel %vm3481, %v3548, %v3228
        %v3581 = vsel %vm3481, %v3549, %v3230
        %v3582 = vsel %vm3481, %v3550, %v3232
        %v3583 = vsel %vm3481, %v3551, %v3234
        %v3584 = vsel %vm3481, %v3552, %v3236
        %v3585 = vsel %vm3481, %v3553, %v3238
        %v3586 = vsel %vm3481, %v3554, %v3240
        %v3587 = vsel %vm3481, %v3555, %v3242
        %v3588 = vsel %vm3481, %v3556, %v3244
        %v3589 = vsel %vm3481, %v3557, %v3246
        %v3590 = vsel %vm3481, %v3558, %v3248
        %v3591 = vsel %vm3481, %v3559, %v3250
        %v3592 = vsel %vm3481, %v3560, %v3252
        %v3593 = vsel %vm3481, %v3561, %v3254
        %v3594 = vsel %vm3481, %v3562, %v3256
        %v3595 = vsel %vm3481, %v3563, %v3258
        %v3596 = vsel %vm3481, %v3564, %v3260
        %v3597 = vsel %vm3481, %v3565, %v3262
        %v3598 = vsel %vm3481, %v3566, %v3264
        %v3599 = vsel %vm3481, %v3567, %v3266
        %v3600 = vsel %vm3481, %v3568, %v3268
        %v3601 = vsel %vm3481, %v3569, %v3270
        %v3602 = vsel %vm3481, %v3570, %v3272
        %v3603 = vsel %vm3481, %v3571, %v3274
        %v3604 = vsel %vm3481, %v3572, %v3276
        %v3605 = vsel %vm3481, %v3573, %v3278
        %v3606 = vsel %vm3481, %v3574, %v3280
        %v3607 = vsel %vm3481, %v3575, %v3282
        %v3608 = vsel %vm3481, %v3576, %v3284
        %v3609 = vsel %vm3481, %v3577, %v3286
        %v3610 = vsel %vm3481, %v3578, %v3288
        %v3611 = vsel %vm3514, %v3579, %v3354
        %v3612 = vsel %vm3514, %v3580, %v3356
        %v3613 = vsel %vm3514, %v3581, %v3358
        %v3614 = vsel %vm3514, %v3582, %v3360
        %v3615 = vsel %vm3514, %v3583, %v3362
        %v3616 = vsel %vm3514, %v3584, %v3364
        %v3617 = vsel %vm3514, %v3585, %v3366
        %v3618 = vsel %vm3514, %v3586, %v3368
        %v3619 = vsel %vm3514, %v3587, %v3370
        %v3620 = vsel %vm3514, %v3588, %v3372
        %v3621 = vsel %vm3514, %v3589, %v3374
        %v3622 = vsel %vm3514, %v3590, %v3376
        %v3623 = vsel %vm3514, %v3591, %v3378
        %v3624 = vsel %vm3514, %v3592, %v3380
        %v3625 = vsel %vm3514, %v3593, %v3382
        %v3626 = vsel %vm3514, %v3594, %v3384
        %v3627 = vsel %vm3514, %v3595, %v3386
        %v3628 = vsel %vm3514, %v3596, %v3388
        %v3629 = vsel %vm3514, %v3597, %v3390
        %v3630 = vsel %vm3514, %v3598, %v3392
        %v3631 = vsel %vm3514, %v3599, %v3394
        %v3632 = vsel %vm3514, %v3600, %v3396
        %v3633 = vsel %vm3514, %v3601, %v3398
        %v3634 = vsel %vm3514, %v3602, %v3400
        %v3635 = vsel %vm3514, %v3603, %v3402
        %v3636 = vsel %vm3514, %v3604, %v3404
        %v3637 = vsel %vm3514, %v3605, %v3406
        %v3638 = vsel %vm3514, %v3606, %v3408
        %v3639 = vsel %vm3514, %v3607, %v3410
        %v3640 = vsel %vm3514, %v3608, %v3412
        %v3641 = vsel %vm3514, %v3609, %v3414
        %v3642 = vsel %vm3514, %v3610, %v3416
        %v3643 = vld [vmem:[%s3] sm:$0xff]
        %v3644 = vld [vmem:[%s3 + $0x8] sm:$0xff]
        %v3645 = vld [vmem:[%s3 + $0x10] sm:$0xff]
        %v3646 = vld [vmem:[%s3 + $0x18] sm:$0xff]
        %v3647 = vld [vmem:[%s3 + $0x20] sm:$0xff]
        %v3648 = vld [vmem:[%s3 + $0x28] sm:$0xff]
        %v3649 = vld [vmem:[%s3 + $0x30] sm:$0xff]
        %v3650 = vld [vmem:[%s3 + $0x38] sm:$0xff]
        %v3651 = vld [vmem:[%s3 + $0x40] sm:$0xff]
        %v3652 = vld [vmem:[%s3 + $0x48] sm:$0xff]
        %v3653 = vld [vmem:[%s3 + $0x50] sm:$0xff]
        %v3654 = vld [vmem:[%s3 + $0x58] sm:$0xff]
        %v3655 = vld [vmem:[%s3 + $0x60] sm:$0xff]
        %v3656 = vld [vmem:[%s3 + $0x68] sm:$0xff]
        %v3657 = vld [vmem:[%s3 + $0x70] sm:$0xff]
        %v3658 = vld [vmem:[%s3 + $0x78] sm:$0xff]
        %v3659 = vld [vmem:[%s3 + $0x80] sm:$0xff]
        %v3660 = vld [vmem:[%s3 + $0x88] sm:$0xff]
        %v3661 = vld [vmem:[%s3 + $0x90] sm:$0xff]
        %v3662 = vld [vmem:[%s3 + $0x98] sm:$0xff]
        %v3663 = vld [vmem:[%s3 + $0xa0] sm:$0xff]
        %v3664 = vld [vmem:[%s3 + $0xa8] sm:$0xff]
        %v3665 = vld [vmem:[%s3 + $0xb0] sm:$0xff]
        %v3666 = vld [vmem:[%s3 + $0xb8] sm:$0xff]
        %v3667 = vld [vmem:[%s3 + $0xc0] sm:$0xff]
        %v3668 = vld [vmem:[%s3 + $0xc8] sm:$0xff]
        %v3669 = vld [vmem:[%s3 + $0xd0] sm:$0xff]
        %v3670 = vld [vmem:[%s3 + $0xd8] sm:$0xff]
        %v3671 = vld [vmem:[%s3 + $0xe0] sm:$0xff]
        %v3672 = vld [vmem:[%s3 + $0xe8] sm:$0xff]
        %v3673 = vld [vmem:[%s3 + $0xf0] sm:$0xff]
        %v3674 = vld [vmem:[%s3 + $0xf8] sm:$0xff]
        %v3675 = vld [vmem:[%s3 + $0x100] sm:$0xff]
        %v3676 = vld [vmem:[%s3 + $0x108] sm:$0xff]
        %v3677 = vld [vmem:[%s3 + $0x110] sm:$0xff]
        %v3678 = vld [vmem:[%s3 + $0x118] sm:$0xff]
        %v3679 = vld [vmem:[%s4] sm:$0x1]
        %v3681 = vlaneseq
        %v3682 = vshrl.u32 %v3681, 7
        %v3683 = vsub.s32 0, %v3682
        %v3684 = vrot.slane %v3679, %v3683
        %v3687 = vsel %vm1887, %v2649, 0
        %v3690 = vsel %vm1887, %v2650, 0
        %v3693 = vsel %vm1887, %v2651, 0
        %v3696 = vsel %vm1887, %v2652, 0
        %v3699 = vsel %vm1887, %v2653, 0
        %v3702 = vsel %vm1887, %v2654, 0
        %v3705 = vsel %vm1887, %v2655, 0
        %v3708 = vsel %vm1887, %v2656, 0
        %v3711 = vsel %vm1887, %v2657, 0
        %v3714 = vsel %vm1887, %v2658, 0
        %v3717 = vsel %vm1887, %v2659, 0
        %v3720 = vsel %vm1887, %v2660, 0
        %v3723 = vsel %vm1887, %v2661, 0
        %v3726 = vsel %vm1887, %v2662, 0
        %v3729 = vsel %vm1887, %v2663, 0
        %v3732 = vsel %vm1887, %v2664, 0
        %v3735 = vsel %vm1887, %v2665, 0
        %v3738 = vsel %vm1887, %v2666, 0
        %v3741 = vsel %vm1887, %v2667, 0
        %v3744 = vsel %vm1887, %v2668, 0
        %v3747 = vsel %vm1887, %v2669, 0
        %v3750 = vsel %vm1887, %v2670, 0
        %v3753 = vsel %vm1887, %v2671, 0
        %v3756 = vsel %vm1887, %v2672, 0
        %v3759 = vsel %vm1887, %v2673, 0
        %v3762 = vsel %vm1887, %v2674, 0
        %v3765 = vsel %vm1887, %v2675, 0
        %v3768 = vsel %vm1887, %v2676, 0
        %v3771 = vsel %vm1887, %v2677, 0
        %v3774 = vsel %vm1887, %v2678, 0
        %v3777 = vsel %vm1887, %v2679, 0
        %v3780 = vsel %vm1887, %v2680, 0
        %3782 = vmatprep.subr.mxu0 0.0
        %3783 = vmatpush1.msra.mxu0 %v3643
        %3784 = vmatprep.subr.mxu0 0.0
        %3785 = vmatpush1.msra.mxu0 %v3644
        %3786 = vmatprep.subr.mxu0 0.0
        %3787 = vmatpush1.msra.mxu0 %v3645
        %3788 = vmatprep.subr.mxu0 0.0
        %3789 = vmatpush1.msra.mxu0 %v3646
        %3790 = vmatprep.subr.mxu0 0.0
        %3791 = vmatpush1.msra.mxu0 %v3647
        %3792 = vmatprep.subr.mxu0 0.0
        %3793 = vmatpush1.msra.mxu0 %v3648
        %3794 = vmatprep.subr.mxu0 0.0
        %3795 = vmatpush1.msra.mxu0 %v3649
        %3796 = vmatprep.subr.mxu0 0.0
        %3797 = vmatpush1.msra.mxu0 %v3650
        %3798 = vmatprep.subr.mxu0 0.0
        %3799 = vmatpush1.msra.mxu0 %v3651
        %3800 = vmatprep.subr.mxu0 0.0
        %3801 = vmatpush1.msra.mxu0 %v3652
        %3802 = vmatprep.subr.mxu0 0.0
        %3803 = vmatpush1.msra.mxu0 %v3653
        %3804 = vmatprep.subr.mxu0 0.0
        %3805 = vmatpush1.msra.mxu0 %v3654
        %3806 = vmatprep.subr.mxu0 0.0
        %3807 = vmatpush1.msra.mxu0 %v3655
        %3808 = vmatprep.subr.mxu0 0.0
        %3809 = vmatpush1.msra.mxu0 %v3656
        %3810 = vmatprep.subr.mxu0 0.0
        %3811 = vmatpush1.msra.mxu0 %v3657
        %3812 = vmatprep.subr.mxu0 0.0
        %3813 = vmatpush1.msra.mxu0 %v3658
        %3814 = vmatprep.subr.mxu0 0.0
        %3815 = vmatpush1.msra.mxu0 %v3659
        %3816 = vmatprep.subr.mxu0 0.0
        %3817 = vmatpush1.msra.mxu0 %v3660
        %3818 = vmatprep.subr.mxu0 0.0
        %3819 = vmatpush1.msra.mxu0 %v3661
        %3820 = vmatprep.subr.mxu0 0.0
        %3821 = vmatpush1.msra.mxu0 %v3662
        %3822 = vmatprep.subr.mxu0 0.0
        %3823 = vmatpush1.msra.mxu0 %v3663
        %3824 = vmatprep.subr.mxu0 0.0
        %3825 = vmatpush1.msra.mxu0 %v3664
        %3826 = vmatprep.subr.mxu0 0.0
        %3827 = vmatpush1.msra.mxu0 %v3665
        %3828 = vmatprep.subr.mxu0 0.0
        %3829 = vmatpush1.msra.mxu0 %v3666
        %3830 = vmatprep.subr.mxu0 0.0
        %3831 = vmatpush1.msra.mxu0 %v3667
        %3832 = vmatprep.subr.mxu0 0.0
        %3833 = vmatpush1.msra.mxu0 %v3668
        %3834 = vmatprep.subr.mxu0 0.0
        %3835 = vmatpush1.msra.mxu0 %v3669
        %3836 = vmatprep.subr.mxu0 0.0
        %3837 = vmatpush1.msra.mxu0 %v3670
        %3838 = vmatprep.subr.mxu0 0.0
        %3839 = vmatpush1.msra.mxu0 %v3671
        %3840 = vmatprep.subr.mxu0 0.0
        %3841 = vmatpush1.msra.mxu0 %v3672
        %3842 = vmatprep.subr.mxu0 0.0
        %3843 = vmatpush1.msra.mxu0 %v3673
        %3844 = vmatprep.subr.mxu0 0.0
        %3845 = vmatpush1.msra.mxu0 %v3674
        %3846 = vmatprep.mubr.f32.mxu0 %v3611
        %3847 = vmatmul.mubr.f32.gmra.mrb[0].mxu0 %v3515
        %v3848 = vpop.f32.mrb[0].mxu0
        %v3849 = vadd.f32 %v3684, %v3848
        %v3850 = vpop.f32.mrb[0].mxu0
        %3851 = vmatprep.mubr.f32.mxu0 %v3612
        %3852 = vmatmul.mubr.f32.gmra.mrb[0].mxu0 %v3516
        %v3853 = vpop.f32.mrb[0].mxu0
        %v3854 = vadd.f32 %v3684, %v3853
        %v3855 = vpop.f32.mrb[0].mxu0
        %3856 = vmatprep.mubr.f32.mxu0 %v3613
        %3857 = vmatmul.mubr.f32.gmra.mrb[0].mxu0 %v3517
        %v3858 = vpop.f32.mrb[0].mxu0
        %v3859 = vadd.f32 %v3684, %v3858
        %v3860 = vpop.f32.mrb[0].mxu0
        %3861 = vmatprep.mubr.f32.mxu0 %v3614
        %3862 = vmatmul.mubr.f32.gmra.mrb[0].mxu0 %v3518
        %v3863 = vpop.f32.mrb[0].mxu0
        %v3864 = vadd.f32 %v3684, %v3863
        %v3865 = vpop.f32.mrb[0].mxu0
        %3866 = vmatprep.mubr.f32.mxu0 %v3615
        %3867 = vmatmul.mubr.f32.gmra.mrb[0].mxu0 %v3519
        %v3868 = vpop.f32.mrb[0].mxu0
        %v3869 = vadd.f32 %v3684, %v3868
        %v3870 = vpop.f32.mrb[0].mxu0
        %3871 = vmatprep.mubr.f32.mxu0 %v3616
        %3872 = vmatmul.mubr.f32.gmra.mrb[0].mxu0 %v3520
        %v3873 = vpop.f32.mrb[0].mxu0
        %v3874 = vadd.f32 %v3684, %v3873
        %v3875 = vpop.f32.mrb[0].mxu0
        %3876 = vmatprep.mubr.f32.mxu0 %v3617
        %3877 = vmatmul.mubr.f32.gmra.mrb[0].mxu0 %v3521
        %v3878 = vpop.f32.mrb[0].mxu0
        %v3879 = vadd.f32 %v3684, %v3878
        %v3880 = vpop.f32.mrb[0].mxu0
        %3881 = vmatprep.mubr.f32.mxu0 %v3618
        %3882 = vmatmul.mubr.f32.gmra.mrb[0].mxu0 %v3522
        %v3883 = vpop.f32.mrb[0].mxu0
        %v3884 = vadd.f32 %v3684, %v3883
        %v3885 = vpop.f32.mrb[0].mxu0
        %3886 = vmatprep.mubr.f32.mxu0 %v3619
        %3887 = vmatmul.mubr.f32.gmra.mrb[0].mxu0 %v3523
        %v3888 = vpop.f32.mrb[0].mxu0
        %v3889 = vadd.f32 %v3684, %v3888
        %v3890 = vpop.f32.mrb[0].mxu0
        %3891 = vmatprep.mubr.f32.mxu0 %v3620
        %3892 = vmatmul.mubr.f32.gmra.mrb[0].mxu0 %v3524
        %v3893 = vpop.f32.mrb[0].mxu0
        %v3894 = vadd.f32 %v3684, %v3893
        %v3895 = vpop.f32.mrb[0].mxu0
        %3896 = vmatprep.mubr.f32.mxu0 %v3621
        %3897 = vmatmul.mubr.f32.gmra.mrb[0].mxu0 %v3525
        %v3898 = vpop.f32.mrb[0].mxu0
        %v3899 = vadd.f32 %v3684, %v3898
        %v3900 = vpop.f32.mrb[0].mxu0
        %3901 = vmatprep.mubr.f32.mxu0 %v3622
        %3902 = vmatmul.mubr.f32.gmra.mrb[0].mxu0 %v3526
        %v3903 = vpop.f32.mrb[0].mxu0
        %v3904 = vadd.f32 %v3684, %v3903
        %v3905 = vpop.f32.mrb[0].mxu0
        %3906 = vmatprep.mubr.f32.mxu0 %v3623
        %3907 = vmatmul.mubr.f32.gmra.mrb[0].mxu0 %v3527
        %v3908 = vpop.f32.mrb[0].mxu0
        %v3909 = vadd.f32 %v3684, %v3908
        %v3910 = vpop.f32.mrb[0].mxu0
        %3911 = vmatprep.mubr.f32.mxu0 %v3624
        %3912 = vmatmul.mubr.f32.gmra.mrb[0].mxu0 %v3528
        %v3913 = vpop.f32.mrb[0].mxu0
        %v3914 = vadd.f32 %v3684, %v3913
        %v3915 = vpop.f32.mrb[0].mxu0
        %3916 = vmatprep.mubr.f32.mxu0 %v3625
        %3917 = vmatmul.mubr.f32.gmra.mrb[0].mxu0 %v3529
        %v3918 = vpop.f32.mrb[0].mxu0
        %v3919 = vadd.f32 %v3684, %v3918
        %v3920 = vpop.f32.mrb[0].mxu0
        %3921 = vmatprep.mubr.f32.mxu0 %v3626
        %3922 = vmatmul.mubr.f32.gmra.mrb[0].mxu0 %v3530
        %v3923 = vpop.f32.mrb[0].mxu0
        %v3924 = vadd.f32 %v3684, %v3923
        %v3925 = vpop.f32.mrb[0].mxu0
        %3926 = vmatprep.mubr.f32.mxu0 %v3627
        %3927 = vmatmul.mubr.f32.gmra.mrb[0].mxu0 %v3531
        %v3928 = vpop.f32.mrb[0].mxu0
        %v3929 = vadd.f32 %v3684, %v3928
        %v3930 = vpop.f32.mrb[0].mxu0
        %3931 = vmatprep.mubr.f32.mxu0 %v3628
        %3932 = vmatmul.mubr.f32.gmra.mrb[0].mxu0 %v3532
        %v3933 = vpop.f32.mrb[0].mxu0
        %v3934 = vadd.f32 %v3684, %v3933
        %v3935 = vpop.f32.mrb[0].mxu0
        %3936 = vmatprep.mubr.f32.mxu0 %v3629
        %3937 = vmatmul.mubr.f32.gmra.mrb[0].mxu0 %v3533
        %v3938 = vpop.f32.mrb[0].mxu0
        %v3939 = vadd.f32 %v3684, %v3938
        %v3940 = vpop.f32.mrb[0].mxu0
        %3941 = vmatprep.mubr.f32.mxu0 %v3630
        %3942 = vmatmul.mubr.f32.gmra.mrb[0].mxu0 %v3534
        %v3943 = vpop.f32.mrb[0].mxu0
        %v3944 = vadd.f32 %v3684, %v3943
        %v3945 = vpop.f32.mrb[0].mxu0
        %3946 = vmatprep.mubr.f32.mxu0 %v3631
        %3947 = vmatmul.mubr.f32.gmra.mrb[0].mxu0 %v3535
        %v3948 = vpop.f32.mrb[0].mxu0
        %v3949 = vadd.f32 %v3684, %v3948
        %v3950 = vpop.f32.mrb[0].mxu0
        %3951 = vmatprep.mubr.f32.mxu0 %v3632
        %3952 = vmatmul.mubr.f32.gmra.mrb[0].mxu0 %v3536
        %v3953 = vpop.f32.mrb[0].mxu0
        %v3954 = vadd.f32 %v3684, %v3953
        %v3955 = vpop.f32.mrb[0].mxu0
        %3956 = vmatprep.mubr.f32.mxu0 %v3633
        %3957 = vmatmul.mubr.f32.gmra.mrb[0].mxu0 %v3537
        %v3958 = vpop.f32.mrb[0].mxu0
        %v3959 = vadd.f32 %v3684, %v3958
        %v3960 = vpop.f32.mrb[0].mxu0
        %3961 = vmatprep.mubr.f32.mxu0 %v3634
        %3962 = vmatmul.mubr.f32.gmra.mrb[0].mxu0 %v3538
        %v3963 = vpop.f32.mrb[0].mxu0
        %v3964 = vadd.f32 %v3684, %v3963
        %v3965 = vpop.f32.mrb[0].mxu0
        %3966 = vmatprep.mubr.f32.mxu0 %v3635
        %3967 = vmatmul.mubr.f32.gmra.mrb[0].mxu0 %v3539
        %v3968 = vpop.f32.mrb[0].mxu0
        %v3969 = vadd.f32 %v3684, %v3968
        %v3970 = vpop.f32.mrb[0].mxu0
        %3971 = vmatprep.mubr.f32.mxu0 %v3636
        %3972 = vmatmul.mubr.f32.gmra.mrb[0].mxu0 %v3540
        %v3973 = vpop.f32.mrb[0].mxu0
        %v3974 = vadd.f32 %v3684, %v3973
        %v3975 = vpop.f32.mrb[0].mxu0
        %3976 = vmatprep.mubr.f32.mxu0 %v3637
        %3977 = vmatmul.mubr.f32.gmra.mrb[0].mxu0 %v3541
        %v3978 = vpop.f32.mrb[0].mxu0
        %v3979 = vadd.f32 %v3684, %v3978
        %v3980 = vpop.f32.mrb[0].mxu0
        %3981 = vmatprep.mubr.f32.mxu0 %v3638
        %3982 = vmatmul.mubr.f32.gmra.mrb[0].mxu0 %v3542
        %v3983 = vpop.f32.mrb[0].mxu0
        %v3984 = vadd.f32 %v3684, %v3983
        %v3985 = vpop.f32.mrb[0].mxu0
        %3986 = vmatprep.mubr.f32.mxu0 %v3639
        %3987 = vmatmul.mubr.f32.gmra.mrb[0].mxu0 %v3543
        %v3988 = vpop.f32.mrb[0].mxu0
        %v3989 = vadd.f32 %v3684, %v3988
        %v3990 = vpop.f32.mrb[0].mxu0
        %3991 = vmatprep.mubr.f32.mxu0 %v3640
        %3992 = vmatmul.mubr.f32.gmra.mrb[0].mxu0 %v3544
        %v3993 = vpop.f32.mrb[0].mxu0
        %v3994 = vadd.f32 %v3684, %v3993
        %v3995 = vpop.f32.mrb[0].mxu0
        %3996 = vmatprep.mubr.f32.mxu0 %v3641
        %3997 = vmatmul.mubr.f32.gmra.mrb[0].mxu0 %v3545
        %v3998 = vpop.f32.mrb[0].mxu0
        %v3999 = vadd.f32 %v3684, %v3998
        %v4000 = vpop.f32.mrb[0].mxu0
        %4001 = vmatprep.mubr.f32.mxu0 %v3642
        %4002 = vmatmul.mubr.f32.gmra.mrb[0].mxu0 %v3546
        %v4003 = vpop.f32.mrb[0].mxu0
        %v4004 = vadd.f32 %v3684, %v4003
        %v4005 = vpop.f32.mrb[0].mxu0
        %4006 = vdwg.mxu0
        %4007 = vmatprep.subr.mxu0 0.0
        %4008 = vmatpush1.msra.mxu0 %v3675
        %4009 = vmatprep.subr.mxu0 0.0
        %4010 = vmatpush1.msra.mxu0 %v3676
        %4011 = vmatprep.subr.mxu0 0.0
        %4012 = vmatpush1.msra.mxu0 %v3677
        %4013 = vmatprep.subr.mxu0 0.0
        %4014 = vmatpush1.msra.mxu0 %v3678
        %4015 = vmatprep.subr.mxu0 0.0
        %4016 = vmatpush1.msra.mxu0 0.0
        %4017 = vmatprep.subr.mxu0 0.0
        %4018 = vmatpush1.msra.mxu0 0.0
        %4019 = vmatprep.subr.mxu0 0.0
        %4020 = vmatpush1.msra.mxu0 0.0
        %4021 = vmatprep.subr.mxu0 0.0
        %4022 = vmatpush1.msra.mxu0 0.0
        %4023 = vmatprep.subr.mxu0 0.0
        %4024 = vmatpush1.msra.mxu0 0.0
        %4025 = vmatprep.subr.mxu0 0.0
        %4026 = vmatpush1.msra.mxu0 0.0
        %4027 = vmatprep.subr.mxu0 0.0
        %4028 = vmatpush1.msra.mxu0 0.0
        %4029 = vmatprep.subr.mxu0 0.0
        %4030 = vmatpush1.msra.mxu0 0.0
        %4031 = vmatprep.subr.mxu0 0.0
        %4032 = vmatpush1.msra.mxu0 0.0
        %4033 = vmatprep.subr.mxu0 0.0
        %4034 = vmatpush1.msra.mxu0 0.0
        %4035 = vmatprep.subr.mxu0 0.0
        %4036 = vmatpush1.msra.mxu0 0.0
        %4037 = vmatprep.subr.mxu0 0.0
        %4038 = vmatpush1.msra.mxu0 0.0
        %4039 = vmatprep.subr.mxu0 0.0
        %4040 = vmatpush1.msra.mxu0 0.0
        %4041 = vmatprep.subr.mxu0 0.0
        %4042 = vmatpush1.msra.mxu0 0.0
        %4043 = vmatprep.subr.mxu0 0.0
        %4044 = vmatpush1.msra.mxu0 0.0
        %4045 = vmatprep.subr.mxu0 0.0
        %4046 = vmatpush1.msra.mxu0 0.0
        %4047 = vmatprep.subr.mxu0 0.0
        %4048 = vmatpush1.msra.mxu0 0.0
        %4049 = vmatprep.subr.mxu0 0.0
        %4050 = vmatpush1.msra.mxu0 0.0
        %4051 = vmatprep.subr.mxu0 0.0
        %4052 = vmatpush1.msra.mxu0 0.0
        %4053 = vmatprep.subr.mxu0 0.0
        %4054 = vmatpush1.msra.mxu0 0.0
        %4055 = vmatprep.subr.mxu0 0.0
        %4056 = vmatpush1.msra.mxu0 0.0
        %4057 = vmatprep.subr.mxu0 0.0
        %4058 = vmatpush1.msra.mxu0 0.0
        %4059 = vmatprep.subr.mxu0 0.0
        %4060 = vmatpush1.msra.mxu0 0.0
        %4061 = vmatprep.subr.mxu0 0.0
        %4062 = vmatpush1.msra.mxu0 0.0
        %4063 = vmatprep.subr.mxu0 0.0
        %4064 = vmatpush1.msra.mxu0 0.0
        %4065 = vmatprep.subr.mxu0 0.0
        %4066 = vmatpush1.msra.mxu0 0.0
        %4067 = vmatprep.subr.mxu0 0.0
        %4068 = vmatpush1.msra.mxu0 0.0
        %4069 = vmatprep.subr.mxu0 0.0
        %4070 = vmatpush1.msra.mxu0 0.0
        %4071 = vmatprep.mubr.f32.mxu0 0.0
        %4072 = vmatmul.mubr.f32.gmra.mrb[0].mxu0 %v3687
        %v4073 = vpop.f32.mrb[0].mxu0
        %v4074 = vadd.f32 %v3849, %v4073
        %v4075 = vpop.f32.mrb[0].mxu0
        %4076 = vmatprep.mubr.f32.mxu0 0.0
        %4077 = vmatmul.mubr.f32.gmra.mrb[0].mxu0 %v3690
        %v4078 = vpop.f32.mrb[0].mxu0
        %v4079 = vadd.f32 %v3854, %v4078
        %v4080 = vpop.f32.mrb[0].mxu0
        %4081 = vmatprep.mubr.f32.mxu0 0.0
        %4082 = vmatmul.mubr.f32.gmra.mrb[0].mxu0 %v3693
        %v4083 = vpop.f32.mrb[0].mxu0
        %v4084 = vadd.f32 %v3859, %v4083
        %v4085 = vpop.f32.mrb[0].mxu0
        %4086 = vmatprep.mubr.f32.mxu0 0.0
        %4087 = vmatmul.mubr.f32.gmra.mrb[0].mxu0 %v3696
        %v4088 = vpop.f32.mrb[0].mxu0
        %v4089 = vadd.f32 %v3864, %v4088
        %v4090 = vpop.f32.mrb[0].mxu0
        %4091 = vmatprep.mubr.f32.mxu0 0.0
        %4092 = vmatmul.mubr.f32.gmra.mrb[0].mxu0 %v3699
        %v4093 = vpop.f32.mrb[0].mxu0
        %v4094 = vadd.f32 %v3869, %v4093
        %v4095 = vpop.f32.mrb[0].mxu0
        %4096 = vmatprep.mubr.f32.mxu0 0.0
        %4097 = vmatmul.mubr.f32.gmra.mrb[0].mxu0 %v3702
        %v4098 = vpop.f32.mrb[0].mxu0
        %v4099 = vadd.f32 %v3874, %v4098
        %v4100 = vpop.f32.mrb[0].mxu0
        %4101 = vmatprep.mubr.f32.mxu0 0.0
        %4102 = vmatmul.mubr.f32.gmra.mrb[0].mxu0 %v3705
        %v4103 = vpop.f32.mrb[0].mxu0
        %v4104 = vadd.f32 %v3879, %v4103
        %v4105 = vpop.f32.mrb[0].mxu0
        %4106 = vmatprep.mubr.f32.mxu0 0.0
        %4107 = vmatmul.mubr.f32.gmra.mrb[0].mxu0 %v3708
        %v4108 = vpop.f32.mrb[0].mxu0
        %v4109 = vadd.f32 %v3884, %v4108
        %v4110 = vpop.f32.mrb[0].mxu0
        %4111 = vmatprep.mubr.f32.mxu0 0.0
        %4112 = vmatmul.mubr.f32.gmra.mrb[0].mxu0 %v3711
        %v4113 = vpop.f32.mrb[0].mxu0
        %v4114 = vadd.f32 %v3889, %v4113
        %v4115 = vpop.f32.mrb[0].mxu0
        %4116 = vmatprep.mubr.f32.mxu0 0.0
        %4117 = vmatmul.mubr.f32.gmra.mrb[0].mxu0 %v3714
        %v4118 = vpop.f32.mrb[0].mxu0
        %v4119 = vadd.f32 %v3894, %v4118
        %v4120 = vpop.f32.mrb[0].mxu0
        %4121 = vmatprep.mubr.f32.mxu0 0.0
        %4122 = vmatmul.mubr.f32.gmra.mrb[0].mxu0 %v3717
        %v4123 = vpop.f32.mrb[0].mxu0
        %v4124 = vadd.f32 %v3899, %v4123
        %v4125 = vpop.f32.mrb[0].mxu0
        %4126 = vmatprep.mubr.f32.mxu0 0.0
        %4127 = vmatmul.mubr.f32.gmra.mrb[0].mxu0 %v3720
        %v4128 = vpop.f32.mrb[0].mxu0
        %v4129 = vadd.f32 %v3904, %v4128
        %v4130 = vpop.f32.mrb[0].mxu0
        %4131 = vmatprep.mubr.f32.mxu0 0.0
        %4132 = vmatmul.mubr.f32.gmra.mrb[0].mxu0 %v3723
        %v4133 = vpop.f32.mrb[0].mxu0
        %v4134 = vadd.f32 %v3909, %v4133
        %v4135 = vpop.f32.mrb[0].mxu0
        %4136 = vmatprep.mubr.f32.mxu0 0.0
        %4137 = vmatmul.mubr.f32.gmra.mrb[0].mxu0 %v3726
        %v4138 = vpop.f32.mrb[0].mxu0
        %v4139 = vadd.f32 %v3914, %v4138
        %v4140 = vpop.f32.mrb[0].mxu0
        %4141 = vmatprep.mubr.f32.mxu0 0.0
        %4142 = vmatmul.mubr.f32.gmra.mrb[0].mxu0 %v3729
        %v4143 = vpop.f32.mrb[0].mxu0
        %v4144 = vadd.f32 %v3919, %v4143
        %v4145 = vpop.f32.mrb[0].mxu0
        %4146 = vmatprep.mubr.f32.mxu0 0.0
        %4147 = vmatmul.mubr.f32.gmra.mrb[0].mxu0 %v3732
        %v4148 = vpop.f32.mrb[0].mxu0
        %v4149 = vadd.f32 %v3924, %v4148
        %v4150 = vpop.f32.mrb[0].mxu0
        %4151 = vmatprep.mubr.f32.mxu0 0.0
        %4152 = vmatmul.mubr.f32.gmra.mrb[0].mxu0 %v3735
        %v4153 = vpop.f32.mrb[0].mxu0
        %v4154 = vadd.f32 %v3929, %v4153
        %v4155 = vpop.f32.mrb[0].mxu0
        %4156 = vmatprep.mubr.f32.mxu0 0.0
        %4157 = vmatmul.mubr.f32.gmra.mrb[0].mxu0 %v3738
        %v4158 = vpop.f32.mrb[0].mxu0
        %v4159 = vadd.f32 %v3934, %v4158
        %v4160 = vpop.f32.mrb[0].mxu0
        %4161 = vmatprep.mubr.f32.mxu0 0.0
        %4162 = vmatmul.mubr.f32.gmra.mrb[0].mxu0 %v3741
        %v4163 = vpop.f32.mrb[0].mxu0
        %v4164 = vadd.f32 %v3939, %v4163
        %v4165 = vpop.f32.mrb[0].mxu0
        %4166 = vmatprep.mubr.f32.mxu0 0.0
        %4167 = vmatmul.mubr.f32.gmra.mrb[0].mxu0 %v3744
        %v4168 = vpop.f32.mrb[0].mxu0
        %v4169 = vadd.f32 %v3944, %v4168
        %v4170 = vpop.f32.mrb[0].mxu0
        %4171 = vmatprep.mubr.f32.mxu0 0.0
        %4172 = vmatmul.mubr.f32.gmra.mrb[0].mxu0 %v3747
        %v4173 = vpop.f32.mrb[0].mxu0
        %v4174 = vadd.f32 %v3949, %v4173
        %v4175 = vpop.f32.mrb[0].mxu0
        %4176 = vmatprep.mubr.f32.mxu0 0.0
        %4177 = vmatmul.mubr.f32.gmra.mrb[0].mxu0 %v3750
        %v4178 = vpop.f32.mrb[0].mxu0
        %v4179 = vadd.f32 %v3954, %v4178
        %v4180 = vpop.f32.mrb[0].mxu0
        %4181 = vmatprep.mubr.f32.mxu0 0.0
        %4182 = vmatmul.mubr.f32.gmra.mrb[0].mxu0 %v3753
        %v4183 = vpop.f32.mrb[0].mxu0
        %v4184 = vadd.f32 %v3959, %v4183
        %v4185 = vpop.f32.mrb[0].mxu0
        %4186 = vmatprep.mubr.f32.mxu0 0.0
        %4187 = vmatmul.mubr.f32.gmra.mrb[0].mxu0 %v3756
        %v4188 = vpop.f32.mrb[0].mxu0
        %v4189 = vadd.f32 %v3964, %v4188
        %v4190 = vpop.f32.mrb[0].mxu0
        %4191 = vmatprep.mubr.f32.mxu0 0.0
        %4192 = vmatmul.mubr.f32.gmra.mrb[0].mxu0 %v3759
        %v4193 = vpop.f32.mrb[0].mxu0
        %v4194 = vadd.f32 %v3969, %v4193
        %v4195 = vpop.f32.mrb[0].mxu0
        %4196 = vmatprep.mubr.f32.mxu0 0.0
        %4197 = vmatmul.mubr.f32.gmra.mrb[0].mxu0 %v3762
        %v4198 = vpop.f32.mrb[0].mxu0
        %v4199 = vadd.f32 %v3974, %v4198
        %v4200 = vpop.f32.mrb[0].mxu0
        %4201 = vmatprep.mubr.f32.mxu0 0.0
        %4202 = vmatmul.mubr.f32.gmra.mrb[0].mxu0 %v3765
        %v4203 = vpop.f32.mrb[0].mxu0
        %v4204 = vadd.f32 %v3979, %v4203
        %v4205 = vpop.f32.mrb[0].mxu0
        %4206 = vmatprep.mubr.f32.mxu0 0.0
        %4207 = vmatmul.mubr.f32.gmra.mrb[0].mxu0 %v3768
        %v4208 = vpop.f32.mrb[0].mxu0
        %v4209 = vadd.f32 %v3984, %v4208
        %v4210 = vpop.f32.mrb[0].mxu0
        %4211 = vmatprep.mubr.f32.mxu0 0.0
        %4212 = vmatmul.mubr.f32.gmra.mrb[0].mxu0 %v3771
        %v4213 = vpop.f32.mrb[0].mxu0
        %v4214 = vadd.f32 %v3989, %v4213
        %v4215 = vpop.f32.mrb[0].mxu0
        %4216 = vmatprep.mubr.f32.mxu0 0.0
        %4217 = vmatmul.mubr.f32.gmra.mrb[0].mxu0 %v3774
        %v4218 = vpop.f32.mrb[0].mxu0
        %v4219 = vadd.f32 %v3994, %v4218
        %v4220 = vpop.f32.mrb[0].mxu0
        %4221 = vmatprep.mubr.f32.mxu0 0.0
        %4222 = vmatmul.mubr.f32.gmra.mrb[0].mxu0 %v3777
        %v4223 = vpop.f32.mrb[0].mxu0
        %v4224 = vadd.f32 %v3999, %v4223
        %v4225 = vpop.f32.mrb[0].mxu0
        %4226 = vmatprep.mubr.f32.mxu0 0.0
        %4227 = vmatmul.mubr.f32.gmra.mrb[0].mxu0 %v3780
        %v4228 = vpop.f32.mrb[0].mxu0
        %v4229 = vadd.f32 %v4004, %v4228
        %v4230 = vpop.f32.mrb[0].mxu0
        %4231 = vdwg.mxu0
        %v4232 = vmax.f32 %v4074, 0.0
        %v4233 = vmax.f32 %v4079, 0.0
        %v4234 = vmax.f32 %v4084, 0.0
        %v4235 = vmax.f32 %v4089, 0.0
        %v4236 = vmax.f32 %v4094, 0.0
        %v4237 = vmax.f32 %v4099, 0.0
        %v4238 = vmax.f32 %v4104, 0.0
        %v4239 = vmax.f32 %v4109, 0.0
        %v4240 = vmax.f32 %v4114, 0.0
        %v4241 = vmax.f32 %v4119, 0.0
        %v4242 = vmax.f32 %v4124, 0.0
        %v4243 = vmax.f32 %v4129, 0.0
        %v4244 = vmax.f32 %v4134, 0.0
        %v4245 = vmax.f32 %v4139, 0.0
        %v4246 = vmax.f32 %v4144, 0.0
        %v4247 = vmax.f32 %v4149, 0.0
        %v4248 = vmax.f32 %v4154, 0.0
        %v4249 = vmax.f32 %v4159, 0.0
        %v4250 = vmax.f32 %v4164, 0.0
        %v4251 = vmax.f32 %v4169, 0.0
        %v4252 = vmax.f32 %v4174, 0.0
        %v4253 = vmax.f32 %v4179, 0.0
        %v4254 = vmax.f32 %v4184, 0.0
        %v4255 = vmax.f32 %v4189, 0.0
        %v4256 = vmax.f32 %v4194, 0.0
        %v4257 = vmax.f32 %v4199, 0.0
        %v4258 = vmax.f32 %v4204, 0.0
        %v4259 = vmax.f32 %v4209, 0.0
        %v4260 = vmax.f32 %v4214, 0.0
        %v4261 = vmax.f32 %v4219, 0.0
        %v4262 = vmax.f32 %v4224, 0.0
        %v4263 = vmax.f32 %v4229, 0.0
        %4264 = vst.msk [vmem:[#allocation4] sm:$0xff] %vm1887, %v4232
        %4265 = vst.msk [vmem:[#allocation4 + $0x8] sm:$0xff] %vm1887, %v4233
        %4266 = vst.msk [vmem:[#allocation4 + $0x10] sm:$0xff] %vm1887, %v4234
        %4267 = vst.msk [vmem:[#allocation4 + $0x18] sm:$0xff] %vm1887, %v4235
        %4268 = vst.msk [vmem:[#allocation4 + $0x20] sm:$0xff] %vm1887, %v4236
        %4269 = vst.msk [vmem:[#allocation4 + $0x28] sm:$0xff] %vm1887, %v4237
        %4270 = vst.msk [vmem:[#allocation4 + $0x30] sm:$0xff] %vm1887, %v4238
        %4271 = vst.msk [vmem:[#allocation4 + $0x38] sm:$0xff] %vm1887, %v4239
        %4272 = vst.msk [vmem:[#allocation4 + $0x40] sm:$0xff] %vm1887, %v4240
        %4273 = vst.msk [vmem:[#allocation4 + $0x48] sm:$0xff] %vm1887, %v4241
        %4274 = vst.msk [vmem:[#allocation4 + $0x50] sm:$0xff] %vm1887, %v4242
        %4275 = vst.msk [vmem:[#allocation4 + $0x58] sm:$0xff] %vm1887, %v4243
        %4276 = vst.msk [vmem:[#allocation4 + $0x60] sm:$0xff] %vm1887, %v4244
        %4277 = vst.msk [vmem:[#allocation4 + $0x68] sm:$0xff] %vm1887, %v4245
        %4278 = vst.msk [vmem:[#allocation4 + $0x70] sm:$0xff] %vm1887, %v4246
        %4279 = vst.msk [vmem:[#allocation4 + $0x78] sm:$0xff] %vm1887, %v4247
        %4280 = vst.msk [vmem:[#allocation4 + $0x80] sm:$0xff] %vm1887, %v4248
        %4281 = vst.msk [vmem:[#allocation4 + $0x88] sm:$0xff] %vm1887, %v4249
        %4282 = vst.msk [vmem:[#allocation4 + $0x90] sm:$0xff] %vm1887, %v4250
        %4283 = vst.msk [vmem:[#allocation4 + $0x98] sm:$0xff] %vm1887, %v4251
        %4284 = vst.msk [vmem:[#allocation4 + $0xa0] sm:$0xff] %vm1887, %v4252
        %4285 = vst.msk [vmem:[#allocation4 + $0xa8] sm:$0xff] %vm1887, %v4253
        %4286 = vst.msk [vmem:[#allocation4 + $0xb0] sm:$0xff] %vm1887, %v4254
        %4287 = vst.msk [vmem:[#allocation4 + $0xb8] sm:$0xff] %vm1887, %v4255
        %4288 = vst.msk [vmem:[#allocation4 + $0xc0] sm:$0xff] %vm1887, %v4256
        %4289 = vst.msk [vmem:[#allocation4 + $0xc8] sm:$0xff] %vm1887, %v4257
        %4290 = vst.msk [vmem:[#allocation4 + $0xd0] sm:$0xff] %vm1887, %v4258
        %4291 = vst.msk [vmem:[#allocation4 + $0xd8] sm:$0xff] %vm1887, %v4259
        %4292 = vst.msk [vmem:[#allocation4 + $0xe0] sm:$0xff] %vm1887, %v4260
        %4293 = vst.msk [vmem:[#allocation4 + $0xe8] sm:$0xff] %vm1887, %v4261
        %4294 = vst.msk [vmem:[#allocation4 + $0xf0] sm:$0xff] %vm1887, %v4262
        %4295 = vst.msk [vmem:[#allocation4 + $0xf8] sm:$0xff] %vm1887, %v4263
        %v4296 = vld [vmem:[#allocation4] ss:$2 sm:$0xff]
        %s4297 = scalar_lea.vmem [#allocation4], 16
        %v4298 = vld [vmem:[%s4297] ss:$2 sm:$0xff]
        %s4299 = scalar_lea.vmem [#allocation4], 32
        %v4300 = vld [vmem:[%s4299] ss:$2 sm:$0xff]
        %s4301 = scalar_lea.vmem [#allocation4], 48
        %v4302 = vld [vmem:[%s4301] ss:$2 sm:$0xff]
        %s4303 = scalar_lea.vmem [#allocation4], 64
        %v4304 = vld [vmem:[%s4303] ss:$2 sm:$0xff]
        %s4305 = scalar_lea.vmem [#allocation4], 80
        %v4306 = vld [vmem:[%s4305] ss:$2 sm:$0xff]
        %s4307 = scalar_lea.vmem [#allocation4], 96
        %v4308 = vld [vmem:[%s4307] ss:$2 sm:$0xff]
        %s4309 = scalar_lea.vmem [#allocation4], 112
        %v4310 = vld [vmem:[%s4309] ss:$2 sm:$0xff]
        %s4311 = scalar_lea.vmem [#allocation4], 128
        %v4312 = vld [vmem:[%s4311] ss:$2 sm:$0xff]
        %s4313 = scalar_lea.vmem [#allocation4], 144
        %v4314 = vld [vmem:[%s4313] ss:$2 sm:$0xff]
        %s4315 = scalar_lea.vmem [#allocation4], 160
        %v4316 = vld [vmem:[%s4315] ss:$2 sm:$0xff]
        %s4317 = scalar_lea.vmem [#allocation4], 176
        %v4318 = vld [vmem:[%s4317] ss:$2 sm:$0xff]
        %s4319 = scalar_lea.vmem [#allocation4], 192
        %v4320 = vld [vmem:[%s4319] ss:$2 sm:$0xff]
        %s4321 = scalar_lea.vmem [#allocation4], 208
        %v4322 = vld [vmem:[%s4321] ss:$2 sm:$0xff]
        %s4323 = scalar_lea.vmem [#allocation4], 224
        %v4324 = vld [vmem:[%s4323] ss:$2 sm:$0xff]
        %s4325 = scalar_lea.vmem [#allocation4], 240
        %v4326 = vld [vmem:[%s4325] ss:$2 sm:$0xff]
        %s4327 = scalar_lea.vmem [#allocation4], 1
        %v4328 = vld [vmem:[%s4327] ss:$2 sm:$0xff]
        %s4329 = scalar_lea.vmem [#allocation4], 17
        %v4330 = vld [vmem:[%s4329] ss:$2 sm:$0xff]
        %s4331 = scalar_lea.vmem [#allocation4], 33
        %v4332 = vld [vmem:[%s4331] ss:$2 sm:$0xff]
        %s4333 = scalar_lea.vmem [#allocation4], 49
        %v4334 = vld [vmem:[%s4333] ss:$2 sm:$0xff]
        %s4335 = scalar_lea.vmem [#allocation4], 65
        %v4336 = vld [vmem:[%s4335] ss:$2 sm:$0xff]
        %s4337 = scalar_lea.vmem [#allocation4], 81
        %v4338 = vld [vmem:[%s4337] ss:$2 sm:$0xff]
        %s4339 = scalar_lea.vmem [#allocation4], 97
        %v4340 = vld [vmem:[%s4339] ss:$2 sm:$0xff]
        %s4341 = scalar_lea.vmem [#allocation4], 113
        %v4342 = vld [vmem:[%s4341] ss:$2 sm:$0xff]
        %s4343 = scalar_lea.vmem [#allocation4], 129
        %v4344 = vld [vmem:[%s4343] ss:$2 sm:$0xff]
        %s4345 = scalar_lea.vmem [#allocation4], 145
        %v4346 = vld [vmem:[%s4345] ss:$2 sm:$0xff]
        %s4347 = scalar_lea.vmem [#allocation4], 161
        %v4348 = vld [vmem:[%s4347] ss:$2 sm:$0xff]
        %s4349 = scalar_lea.vmem [#allocation4], 177
        %v4350 = vld [vmem:[%s4349] ss:$2 sm:$0xff]
        %s4351 = scalar_lea.vmem [#allocation4], 193
        %v4352 = vld [vmem:[%s4351] ss:$2 sm:$0xff]
        %s4353 = scalar_lea.vmem [#allocation4], 209
        %v4354 = vld [vmem:[%s4353] ss:$2 sm:$0xff]
        %s4355 = scalar_lea.vmem [#allocation4], 225
        %v4356 = vld [vmem:[%s4355] ss:$2 sm:$0xff]
        %s4357 = scalar_lea.vmem [#allocation4], 241
        %v4358 = vld [vmem:[%s4357] ss:$2 sm:$0xff]
        %v4359 = vmax.f32 %v4296, %v4328
        %v4360 = vmax.f32 %v4298, %v4330
        %v4361 = vmax.f32 %v4300, %v4332
        %v4362 = vmax.f32 %v4302, %v4334
        %v4363 = vmax.f32 %v4304, %v4336
        %v4364 = vmax.f32 %v4306, %v4338
        %v4365 = vmax.f32 %v4308, %v4340
        %v4366 = vmax.f32 %v4310, %v4342
        %v4367 = vmax.f32 %v4312, %v4344
        %v4368 = vmax.f32 %v4314, %v4346
        %v4369 = vmax.f32 %v4316, %v4348
        %v4370 = vmax.f32 %v4318, %v4350
        %v4371 = vmax.f32 %v4320, %v4352
        %v4372 = vmax.f32 %v4322, %v4354
        %v4373 = vmax.f32 %v4324, %v4356
        %v4374 = vmax.f32 %v4326, %v4358
        %4375 = vst.msk [vmem:[#allocation5] sm:$0xff] %vm1887, %v4359
        %4376 = vst.msk [vmem:[#allocation5 + $0x8] sm:$0xff] %vm1887, %v4360
        %4377 = vst.msk [vmem:[#allocation5 + $0x10] sm:$0xff] %vm1887, %v4361
        %4378 = vst.msk [vmem:[#allocation5 + $0x18] sm:$0xff] %vm1887, %v4362
        %4379 = vst.msk [vmem:[#allocation5 + $0x20] sm:$0xff] %vm1887, %v4363
        %4380 = vst.msk [vmem:[#allocation5 + $0x28] sm:$0xff] %vm1887, %v4364
        %4381 = vst.msk [vmem:[#allocation5 + $0x30] sm:$0xff] %vm1887, %v4365
        %4382 = vst.msk [vmem:[#allocation5 + $0x38] sm:$0xff] %vm1887, %v4366
        %4383 = vst.msk [vmem:[#allocation5 + $0x40] sm:$0xff] %vm1887, %v4367
        %4384 = vst.msk [vmem:[#allocation5 + $0x48] sm:$0xff] %vm1887, %v4368
        %4385 = vst.msk [vmem:[#allocation5 + $0x50] sm:$0xff] %vm1887, %v4369
        %4386 = vst.msk [vmem:[#allocation5 + $0x58] sm:$0xff] %vm1887, %v4370
        %4387 = vst.msk [vmem:[#allocation5 + $0x60] sm:$0xff] %vm1887, %v4371
        %4388 = vst.msk [vmem:[#allocation5 + $0x68] sm:$0xff] %vm1887, %v4372
        %4389 = vst.msk [vmem:[#allocation5 + $0x70] sm:$0xff] %vm1887, %v4373
        %4390 = vst.msk [vmem:[#allocation5 + $0x78] sm:$0xff] %vm1887, %v4374
        %v4391 = vld [vmem:[#allocation5] sm:$0xff]
        %v4392 = vld [vmem:[#allocation5 + $0x8] sm:$0xff]
        %v4393 = vmax.f32 %v4391, %v4392
        %4394 = vst.msk [vmem:[%s217] sm:$0xff] %vm1887, %v4393
        %v4395 = vld [vmem:[#allocation5 + $0x10] sm:$0xff]
        %v4396 = vld [vmem:[#allocation5 + $0x18] sm:$0xff]
        %v4397 = vmax.f32 %v4395, %v4396
        %4398 = vst.msk [vmem:[%s217 + $0x8] sm:$0xff] %vm1887, %v4397
        %v4399 = vld [vmem:[#allocation5 + $0x20] sm:$0xff]
        %v4400 = vld [vmem:[#allocation5 + $0x28] sm:$0xff]
        %v4401 = vmax.f32 %v4399, %v4400
        %4402 = vst.msk [vmem:[%s217 + $0x10] sm:$0xff] %vm1887, %v4401
        %v4403 = vld [vmem:[#allocation5 + $0x30] sm:$0xff]
        %v4404 = vld [vmem:[#allocation5 + $0x38] sm:$0xff]
        %v4405 = vmax.f32 %v4403, %v4404
        %4406 = vst.msk [vmem:[%s217 + $0x18] sm:$0xff] %vm1887, %v4405
        %v4407 = vld [vmem:[#allocation5 + $0x40] sm:$0xff]
        %v4408 = vld [vmem:[#allocation5 + $0x48] sm:$0xff]
        %v4409 = vmax.f32 %v4407, %v4408
        %4410 = vst.msk [vmem:[%s217 + $0x20] sm:$0xff] %vm1887, %v4409
        %v4411 = vld [vmem:[#allocation5 + $0x50] sm:$0xff]
        %v4412 = vld [vmem:[#allocation5 + $0x58] sm:$0xff]
        %v4413 = vmax.f32 %v4411, %v4412
        %4414 = vst.msk [vmem:[%s217 + $0x28] sm:$0xff] %vm1887, %v4413
        %v4415 = vld [vmem:[#allocation5 + $0x60] sm:$0xff]
        %v4416 = vld [vmem:[#allocation5 + $0x68] sm:$0xff]
        %v4417 = vmax.f32 %v4415, %v4416
        %4418 = vst.msk [vmem:[%s217 + $0x30] sm:$0xff] %vm1887, %v4417
        %v4419 = vld [vmem:[#allocation5 + $0x70] sm:$0xff]
        %v4420 = vld [vmem:[#allocation5 + $0x78] sm:$0xff]
        %v4421 = vmax.f32 %v4419, %v4420
        %4422 = vst.msk [vmem:[%s217 + $0x38] sm:$0xff] %vm1887, %v4421
        %s4423 = sand.u32 %s137, 1
        %s4424 = scalar_lea.sflag [#allocation7], %s4423
        %s4425 = sand.u32 %s137, 1
        %s4426 = smul.addr %s4425, 64
        %s4427 = scalar_lea.vmem [#allocation6], %s4426
        // Predicated region
        $region41: #{down_conv_forward.1} parent=39 // pred_check
          %p4428 = pneg %p147
        $region42: #{down_conv_forward.1} parent=39 // pred_check_branch
          %4430 = sbr.rel (%p4428) target = $region44
        $region43: #{down_conv_forward.1} parent=39 // pred_region
          %s4432 = ssub.s32 1024, 1024
          %4433 = vsyncadd %s4424, %s4432
          %s4434 = smul.addr %s19, 8
          %s4435 = smul.addr %s4434, 128
          %s4436 = scalar_lea.hbm %s5, %s4435
          %s4437 = sshll.u32 %s4427, 4
          %s4438 = int_to_ptr.vmem [resolvable:$true] %s4437
          %4443 = dma.vmem_to_hbm [thread:$0]  %s4438, 1024, %s4436, %s4424, 128, 128, 8
        $region44: #{down_conv_forward.1} parent=39 // pred_fallthru
          _
      $region40: #{down_conv_forward.1} parent=5 // pred_fallthru
        _
      %p4444 = scmp.le.s32.totalorder 2, %s14
      // Predicated region
      $region45: #{down_conv_forward.1} parent=5 // pred_check
        %p4445 = pneg %p4444
      $region46: #{down_conv_forward.1} parent=5 // pred_check_branch
        %4447 = sbr.rel (%p4445) target = $region48
      $region47: #{down_conv_forward.1} parent=5 // pred_region
        %s4448 = ssub.s32 %s14, 2
        // Predicated region
        $region49: #{down_conv_forward.1} parent=47 // pred_check
          %p4449 = pneg %p153
        $region50: #{down_conv_forward.1} parent=47 // pred_check_branch
          %4451 = sbr.rel (%p4449) target = $region52
        $region51: #{down_conv_forward.1} parent=47 // pred_region
          %s4452 = sand.u32 %s138, 1
          %s4453 = scalar_lea.sflag [#allocation7], %s4452
          %s4454 = sand.u32 %s138, 1
          %s4455 = smul.addr %s4454, 64
          %s4456 = scalar_lea.vmem [#allocation6], %s4455
          %4457 = dma.done %s4453, 1024
        $region52: #{down_conv_forward.1} parent=47 // pred_fallthru
          _
      $region48: #{down_conv_forward.1} parent=5 // pred_fallthru
        _
    $region6: #{down_conv_forward.1} parent=1 // loop_footer
      %s18 = sadd.s32 1, %s14
    $region7: #{down_conv_forward.1} parent=1 // loop_footer_branch
      %13 = sbr.rel target = $region3
    $region8: #{down_conv_forward.1} parent=1 // loop_exit
      _
    %4458 = vsyncpa [#allocation7], 1
    %s4459 = scalar_lea.sflag [#allocation7], 1
    %4460 = vsyncpa %s4459, 1

</llo_original>
